<compile_context>
chip_gen: v7x
topology: tpu7x:2x2x1
jax: 0.10.0
libtpu: 0.0.40
codegen_flags: <defaults>
</compile_context>

<pallas_src>
import functools
import math

import jax
import jax.numpy as jnp
from jax.experimental import pallas as pl
from jax.experimental.pallas import tpu as pltpu


EXACT_SOFTMAX = False   # set True for exact softmax division (strict parity tests)


# ------------------------------------------------------------------ tile defaults

@functools.lru_cache(maxsize=None)
def _default_tiles():
    """512-tiles on 128 MiB-VMEM chips (v5e/v6e), 256-tiles on v7x (64 MiB)."""
    vmem = 64 << 20
    try:
        vmem = getattr(pltpu.get_tpu_info(), "vmem_capacity_bytes", vmem)
    except Exception:
        pass
    if vmem >= (96 << 20):
        return 512, 512, 512
    return 256, 256, 512


# ------------------------------------------------------------------ LN row stats

def _ln_stats_kernel(x_ref, mean_ref, rstd_ref, *, eps):
    x = x_ref[...].astype(jnp.float32)
    mean = jnp.mean(x, axis=-1, keepdims=True)
    var = jnp.mean(jnp.square(x - mean), axis=-1, keepdims=True)
    mean_ref[...] = mean
    rstd_ref[...] = jax.lax.rsqrt(var + eps)


def ln_stats(x2d, eps=1e-5, tm=256):
    """Per-row (mean, rstd) of a [M, D] slab — feeds LN-fused matmuls."""
    M, D = x2d.shape
    tm = min(tm, M)
    return pl.pallas_call(
        functools.partial(_ln_stats_kernel, eps=eps),
        out_shape=(jax.ShapeDtypeStruct((M, 1), jnp.float32),
                   jax.ShapeDtypeStruct((M, 1), jnp.float32)),
        grid=(pl.cdiv(M, tm),),
        in_specs=[pl.BlockSpec((tm, D), lambda i: (i, 0))],
        out_specs=(pl.BlockSpec((tm, 1), lambda i: (i, 0)),
                   pl.BlockSpec((tm, 1), lambda i: (i, 0))),
        compiler_params=pltpu.CompilerParams(dimension_semantics=("parallel",)),
    )(x2d)


# ------------------------------------------------------------------ tiled linear

def _linear_kernel(*refs, activation, has_residual, has_ln, use_scratch):
    it = iter(refs)
    x_ref = next(it)
    if has_ln:
        mean_ref, rstd_ref, g_ref, bln_ref = next(it), next(it), next(it), next(it)
    w_ref = next(it)
    b_ref = next(it)
    res_ref = next(it) if has_residual else None
    o_ref = next(it)
    acc_ref = next(it) if use_scratch else o_ref     # f32 output: accumulate in o_ref

    k = pl.program_id(2)
    nk = pl.num_programs(2)

    x = x_ref[...]
    if has_ln:                                       # fused LayerNorm (f32 math)
        x = x.astype(jnp.float32)
        x = (x - mean_ref[...]) * rstd_ref[...] * g_ref[...] + bln_ref[...]
    partial = jnp.dot(x.astype(jnp.bfloat16), w_ref[...],
                      preferred_element_type=jnp.float32)

    @pl.when(k == 0)
    def _():
        acc_ref[...] = partial

    @pl.when(k > 0)
    def _():
        acc_ref[...] += partial

    @pl.when(k == nk - 1)
    def _():
        y = acc_ref[...] + b_ref[...]
        if activation == "relu":
            y = jnp.maximum(y, 0.0)
        if res_ref is not None:
            y = y + res_ref[...].astype(jnp.float32)
        o_ref[...] = y.astype(o_ref.dtype)


def linear(x2d, w, b, *, activation=None, residual=None, ln=None,
           out_dtype=jnp.float32, tiles=None):
    """Fused (LN) + matmul + bias (+ ReLU) (+ residual).

    x2d: [M, K] f32/bf16, w: [K, N] bf16, b: [N] f32 -> [M, N] out_dtype.
    ln = (mean [M,1], rstd [M,1], gamma [K], beta [K]) pre-normalizes x in-kernel.
    """
    M, K = x2d.shape
    N = w.shape[1]
    tm, tn, tk = tiles if tiles is not None else _default_tiles()
    tm, tn, tk = min(tm, M), min(tn, N), min(tk, K)

    gamma = beta = mean = rstd = None
    if ln is not None:
        mean, rstd, gamma, beta = ln
        gamma = gamma.reshape(1, K).astype(jnp.float32)
        beta = beta.reshape(1, K).astype(jnp.float32)

    # Zero-pad the K fringe so partial K tiles never accumulate garbage.
    Kp = pl.cdiv(K, tk) * tk
    if Kp != K:
        x2d = jnp.pad(x2d, ((0, 0), (0, Kp - K)))
        w = jnp.pad(w, ((0, Kp - K), (0, 0)))
        if ln is not None:
            gamma = jnp.pad(gamma, ((0, 0), (0, Kp - K)))
            beta = jnp.pad(beta, ((0, 0), (0, Kp - K)))
    nk = Kp // tk
    grid = (pl.cdiv(M, tm), pl.cdiv(N, tn), nk)

    in_specs = [pl.BlockSpec((tm, tk), lambda i, j, k: (i, k))]
    args = [x2d]
    if ln is not None:
        in_specs += [pl.BlockSpec((tm, 1), lambda i, j, k: (i, 0)),
                     pl.BlockSpec((tm, 1), lambda i, j, k: (i, 0)),
                     pl.BlockSpec((1, tk), lambda i, j, k: (0, k)),
                     pl.BlockSpec((1, tk), lambda i, j, k: (0, k))]
        args += [mean, rstd, gamma, beta]

    # Skinny-M, many-K: deepen the weight-stream pipeline to hide DMA latency.
    w_kwargs = {}
    if M <= tm and nk >= 3:
        w_kwargs["pipeline_mode"] = pl.Buffered(3)
    in_specs.append(pl.BlockSpec((tk, tn), lambda i, j, k: (k, j), **w_kwargs))
    args.append(w)

    in_specs.append(pl.BlockSpec((1, tn), lambda i, j, k: (0, j)))
    args.append(b.reshape(1, N).astype(jnp.float32))

    if residual is not None:
        in_specs.append(pl.BlockSpec((tm, tn), lambda i, j, k: (i, j)))
        args.append(residual)

    use_scratch = (out_dtype != jnp.float32)         # bf16 out -> keep f32 scratch acc
    scratch = [pltpu.VMEM((tm, tn), jnp.float32)] if use_scratch else []

    vmem_limit = (100 * 1024 * 1024) if max(tm, tn) > 256 else None

    kernel = functools.partial(_linear_kernel, activation=activation,
                               has_residual=residual is not None,
                               has_ln=ln is not None, use_scratch=use_scratch)
    return pl.pallas_call(
        kernel,
        out_shape=jax.ShapeDtypeStruct((M, N), out_dtype),
        grid=grid,
        in_specs=in_specs,
        out_specs=pl.BlockSpec((tm, tn), lambda i, j, k: (i, j)),
        scratch_shapes=scratch,
        compiler_params=pltpu.CompilerParams(
            dimension_semantics=("parallel", "parallel", "arbitrary"),
            vmem_limit_bytes=vmem_limit),
    )(*args)


# ------------------------------------------------------------------ layernorm (final)

def _layernorm_kernel(x_ref, g_ref, b_ref, o_ref, *, eps):
    x = x_ref[...].astype(jnp.float32)
    mean = jnp.mean(x, axis=-1, keepdims=True)
    var = jnp.mean(jnp.square(x - mean), axis=-1, keepdims=True)
    xhat = (x - mean) * jax.lax.rsqrt(var + eps)
    o_ref[...] = (xhat * g_ref[...] + b_ref[...]).astype(o_ref.dtype)


def layernorm(x2d, gamma, beta, eps=1e-5, tm=512):
    M, D = x2d.shape
    tm = min(tm, M)
    return pl.pallas_call(
        functools.partial(_layernorm_kernel, eps=eps),
        out_shape=jax.ShapeDtypeStruct((M, D), jnp.float32),
        grid=(pl.cdiv(M, tm),),
        in_specs=[pl.BlockSpec((tm, D), lambda i: (i, 0)),
                  pl.BlockSpec((1, D), lambda i: (0, 0)),
                  pl.BlockSpec((1, D), lambda i: (0, 0))],
        out_specs=pl.BlockSpec((tm, D), lambda i: (i, 0)),
        compiler_params=pltpu.CompilerParams(dimension_semantics=("parallel",)),
    )(x2d, gamma.reshape(1, D), beta.reshape(1, D))


# ------------------------------------------------------------------ attention (+Wo fused)

def _attn_wo_kernel(q_ref, k_ref, v_ref, wo_ref, bo_ref, res_ref, o_ref,
                    *, scale, causal, exact_softmax):
    h = pl.program_id(2)

    q = q_ref[0, 0]                                   # (tq, Dh) bf16
    k = k_ref[0, 0]                                   # (Sk, Dh) bf16
    v = v_ref[0, 0]                                   # (Sk, Dh) bf16

    # Contract feature dims directly (no explicit transpose), f32 accumulation.
    s = jax.lax.dot_general(q, k, (((1,), (1,)), ((), ())),
                            preferred_element_type=jnp.float32) * scale
    if causal:
        tq, sk = s.shape
        row = jax.lax.broadcasted_iota(jnp.int32, (tq, sk), 0) + pl.program_id(1) * tq
        col = jax.lax.broadcasted_iota(jnp.int32, (tq, sk), 1)
        s = jnp.where(col <= row, s, -1e30)

    m = jnp.max(s, axis=-1, keepdims=True)            # softmax kept in f32
    p = jnp.exp(s - m)
    l = jnp.sum(p, axis=-1, keepdims=True)
    if exact_softmax:
        p = p / l
    else:
        p = p * pl.reciprocal(l, approx=True)

    ctx = jnp.dot(p.astype(jnp.bfloat16), v, preferred_element_type=jnp.float32)
    # Fused output projection: accumulate ctx_h @ Wo[h*Dh:(h+1)*Dh, :] over heads.
    part = jnp.dot(ctx.astype(jnp.bfloat16), wo_ref[...],
                   preferred_element_type=jnp.float32)          # (tq, D)

    @pl.when(h == 0)
    def _():
        o_ref[0] = part

    @pl.when(h > 0)
    def _():
        o_ref[0] += part

    @pl.when(h == pl.num_programs(2) - 1)
    def _():
        o_ref[0] = o_ref[0] + bo_ref[...] + res_ref[0]          # bias + residual fused


def attention_with_wo(q, k, v, wo, bo, residual, *, causal, tq=256):
    """q: [B,H,Sq,Dh] bf16, k/v: [B,H,Sk,Dh] bf16, wo: [D,D] bf16, bo: [D] f32,
    residual: [B,Sq,D] f32 -> [B,Sq,D] f32 (= residual + attn(q,k,v) @ wo + bo)."""
    B, H, Sq, Dh = q.shape
    Sk = k.shape[2]
    D = H * Dh
    tq = min(tq, Sq)
    grid = (B, pl.cdiv(Sq, tq), H)
    kernel = functools.partial(_attn_wo_kernel, scale=1.0 / math.sqrt(Dh),
                               causal=causal, exact_softmax=EXACT_SOFTMAX)
    return pl.pallas_call(
        kernel,
        out_shape=jax.ShapeDtypeStruct((B, Sq, D), jnp.float32),
        grid=grid,
        in_specs=[
            pl.BlockSpec((1, 1, tq, Dh), lambda b, i, h: (b, h, i, 0)),
            pl.BlockSpec((1, 1, Sk, Dh), lambda b, i, h: (b, h, 0, 0)),
            pl.BlockSpec((1, 1, Sk, Dh), lambda b, i, h: (b, h, 0, 0)),
            pl.BlockSpec((Dh, D), lambda b, i, h: (h, 0)),       # Wo rows of head h
            pl.BlockSpec((1, D), lambda b, i, h: (0, 0)),
            pl.BlockSpec((1, tq, D), lambda b, i, h: (b, i, 0)),
        ],
        out_specs=pl.BlockSpec((1, tq, D), lambda b, i, h: (b, i, 0)),
        compiler_params=pltpu.CompilerParams(
            dimension_semantics=("parallel", "parallel", "arbitrary")),
    )(q, k, v, wo, bo.reshape(1, D).astype(jnp.float32), residual)


# ------------------------------------------------------------ model wrapper

def sinusoid_pe(max_len, D):
    pos = jnp.arange(max_len, dtype=jnp.float32)[:, None]
    i = jnp.arange(0, D, 2, dtype=jnp.float32)
    div = jnp.exp(-jnp.log(10000.0) * i / D)
    pe = jnp.zeros((max_len, D), dtype=jnp.float32)
    pe = pe.at[:, 0::2].set(jnp.sin(pos * div))
    pe = pe.at[:, 1::2].set(jnp.cos(pos * div))
    return pe


def init_params(key, d_model, n_layers, max_length=2000):
    def dense(key, din, dout):   # weights stored bf16 (MXU-native), biases f32
        return (0.02 * jax.random.normal(key, (din, dout), jnp.float32)).astype(jnp.bfloat16)

    layers = []
    for l in range(n_layers):
        k = jax.random.fold_in(key, l)
        ks = jax.random.split(k, 8)
        attn1 = dict(   # self-attention: fused QKV weight [D, 3D]
            wqkv=jnp.concatenate([dense(ks[0], d_model, d_model),
                                  dense(ks[1], d_model, d_model),
                                  dense(ks[2], d_model, d_model)], axis=1),
            bqkv=jnp.zeros((3 * d_model,), jnp.float32),
            wo=dense(ks[3], d_model, d_model), bo=jnp.zeros((d_model,), jnp.float32))
        attn2 = dict(   # cross-attention: separate Q, fused KV weight [D, 2D]
            wq=dense(ks[4], d_model, d_model), bq=jnp.zeros((d_model,), jnp.float32),
            wkv=jnp.concatenate([dense(ks[5], d_model, d_model),
                                 dense(ks[6], d_model, d_model)], axis=1),
            bkv=jnp.zeros((2 * d_model,), jnp.float32),
            wo=dense(ks[7], d_model, d_model), bo=jnp.zeros((d_model,), jnp.float32))
        kff = jax.random.split(jax.random.fold_in(k, 1000), 2)
        ff = dict(w1=dense(kff[0], d_model, 4 * d_model),
                  b1=jnp.zeros((4 * d_model,), jnp.float32),
                  w2=dense(kff[1], 4 * d_model, d_model),
                  b2=jnp.zeros((d_model,), jnp.float32))
        norms = dict(ln1_g=jnp.ones((d_model,)), ln1_b=jnp.zeros((d_model,)),
                     ln2_g=jnp.ones((d_model,)), ln2_b=jnp.zeros((d_model,)),
                     ln3_g=jnp.ones((d_model,)), ln3_b=jnp.zeros((d_model,)))
        layers.append(dict(attn1=attn1, attn2=attn2, ff=ff, **norms))
    return dict(layers=layers,
                pe=sinusoid_pe(max_length, d_model),
                final_g=jnp.ones((d_model,)), final_b=jnp.zeros((d_model,)))


def decoder_forward(params, X, en_output, n_heads):
    B, S, D = X.shape
    Se = en_output.shape[1]
    H = n_heads
    Dh = D // H

    # CosinPosition: sinusoidal table added to X (dropout = identity in eval).
    X = X + params["pe"][:S][None]

    X2 = X.reshape(B * S, D).astype(jnp.float32)
    enc2d = en_output.reshape(B * Se, D).astype(jnp.float32)

    for lp in params["layers"]:
        a1, a2, ff = lp["attn1"], lp["attn2"], lp["ff"]

        # --- causal self-attention: LN1 fused into QKV matmul; Wo + residual fused ---
        mean1, rstd1 = ln_stats(X2)
        qkv = linear(X2, a1["wqkv"], a1["bqkv"],
                     ln=(mean1, rstd1, lp["ln1_g"], lp["ln1_b"]),
                     out_dtype=jnp.bfloat16)                          # [M, 3D] bf16
        qkv = qkv.reshape(B, S, 3, H, Dh)
        q = jnp.transpose(qkv[:, :, 0], (0, 2, 1, 3))                 # [B, H, S, Dh]
        k = jnp.transpose(qkv[:, :, 1], (0, 2, 1, 3))
        v = jnp.transpose(qkv[:, :, 2], (0, 2, 1, 3))
        X2 = attention_with_wo(q, k, v, a1["wo"], a1["bo"],
                               residual=X2.reshape(B, S, D),
                               causal=True).reshape(B * S, D)

        # NOTE: original forward computes `x = Norm2(X)` but never uses it -> skipped.

        # --- cross-attention: query = UN-normed X (as in source), kv = encoder output ---
        qx = linear(X2, a2["wq"], a2["bq"], out_dtype=jnp.bfloat16)        # [M, D]
        kvx = linear(enc2d, a2["wkv"], a2["bkv"], out_dtype=jnp.bfloat16)  # [Me, 2D]
        q = jnp.transpose(qx.reshape(B, S, H, Dh), (0, 2, 1, 3))
        kvx = kvx.reshape(B, Se, 2, H, Dh)
        k = jnp.transpose(kvx[:, :, 0], (0, 2, 1, 3))
        v = jnp.transpose(kvx[:, :, 1], (0, 2, 1, 3))
        X2 = attention_with_wo(q, k, v, a2["wo"], a2["bo"],
                               residual=X2.reshape(B, S, D),
                               causal=False).reshape(B * S, D)

        # --- MLP: LN3 fused into w1 matmul, residual fused into w2 epilogue ---
        mean3, rstd3 = ln_stats(X2)
        h = linear(X2, ff["w1"], ff["b1"],
                   ln=(mean3, rstd3, lp["ln3_g"], lp["ln3_b"]),
                   activation="relu", out_dtype=jnp.bfloat16)          # [M, 4D] bf16
        X2 = linear(h, ff["w2"], ff["b2"], residual=X2)                # f32 residual stream

    X2 = layernorm(X2, params["final_g"], params["final_b"])
    return X2.reshape(B, S, D)


decoder_forward_jit = jax.jit(decoder_forward, static_argnames=("n_heads",))


# ------------------------------------------------------------------- main

if __name__ == "__main__":
    B, S_dec, S_enc = 2, 8, 8
    d_model, n_heads, n_layers = 64, 8, 2    # head_dim = 8 (must be a multiple of 8)

    key = jax.random.PRNGKey(0)
    kx, ke, kp = jax.random.split(key, 3)
    X = jax.random.normal(kx, (B, S_dec, d_model), jnp.float32)
    en_output = jax.random.normal(ke, (B, S_enc, d_model), jnp.float32)
    params = init_params(kp, d_model, n_layers, max_length=64)

    out = decoder_forward_jit(params, X, en_output, n_heads)
    out = jax.block_until_ready(out)
    assert out.shape == (B, S_dec, d_model)
    assert bool(jnp.all(jnp.isfinite(out)))
    print("KERNEL_OK")
</pallas_src>

<mosaic_0001>
module attributes {stable_mosaic.version = 11 : i64} {
  func.func @_linear_kernel(%arg0: i32, %arg1: i32, %arg2: i32, %arg3: memref<16x64xf32, #tpu.memory_space<vmem>>, %arg4: memref<16x1xf32, #tpu.memory_space<vmem>>, %arg5: memref<16x1xf32, #tpu.memory_space<vmem>>, %arg6: memref<1x64xf32, #tpu.memory_space<vmem>>, %arg7: memref<1x64xf32, #tpu.memory_space<vmem>>, %arg8: memref<64x192xbf16, #tpu.memory_space<vmem>>, %arg9: memref<1x192xf32, #tpu.memory_space<vmem>>, %arg10: memref<16x192xbf16, #tpu.memory_space<vmem>>, %arg11: memref<16x192xf32, #tpu.memory_space<vmem>>) attributes {dimension_semantics = [#tpu.dimension_semantics<parallel>, #tpu.dimension_semantics<parallel>, #tpu.dimension_semantics<arbitrary>], iteration_bounds = array<i64: 1, 1, 1>, scalar_prefetch = 0 : i64, scratch_operands = 1 : i64, tpu.core_type = #tpu.core_type<tc>, window_params = [{transform_indices = @transform_0, window_bounds = array<i64: 16, 64>}, {transform_indices = @transform_1, window_bounds = array<i64: 16, 1>}, {transform_indices = @transform_2, window_bounds = array<i64: 16, 1>}, {transform_indices = @transform_3, window_bounds = array<i64: 1, 64>}, {transform_indices = @transform_4, window_bounds = array<i64: 1, 64>}, {transform_indices = @transform_5, window_bounds = array<i64: 64, 192>}, {transform_indices = @transform_6, window_bounds = array<i64: 1, 192>}, {transform_indices = @transform_7, window_bounds = array<i64: 16, 192>}]} {
    %c0 = arith.constant 0 : index
    %c0_0 = arith.constant 0 : index
    %0 = vector.load %arg3[%c0, %c0_0] : memref<16x64xf32, #tpu.memory_space<vmem>>, vector<16x64xf32>
    %c0_1 = arith.constant 0 : index
    %c0_2 = arith.constant 0 : index
    %1 = vector.load %arg4[%c0_1, %c0_2] : memref<16x1xf32, #tpu.memory_space<vmem>>, vector<16x1xf32>
    %2 = vector.broadcast %1 : vector<16x1xf32> to vector<16x64xf32>
    %3 = arith.subf %0, %2 : vector<16x64xf32>
    %c0_3 = arith.constant 0 : index
    %c0_4 = arith.constant 0 : index
    %4 = vector.load %arg5[%c0_3, %c0_4] : memref<16x1xf32, #tpu.memory_space<vmem>>, vector<16x1xf32>
    %5 = vector.broadcast %4 : vector<16x1xf32> to vector<16x64xf32>
    %6 = arith.mulf %3, %5 : vector<16x64xf32>
    %c0_5 = arith.constant 0 : index
    %c0_6 = arith.constant 0 : index
    %7 = vector.load %arg6[%c0_5, %c0_6] : memref<1x64xf32, #tpu.memory_space<vmem>>, vector<1x64xf32>
    %8 = vector.broadcast %7 : vector<1x64xf32> to vector<16x64xf32>
    %9 = arith.mulf %6, %8 : vector<16x64xf32>
    %c0_7 = arith.constant 0 : index
    %c0_8 = arith.constant 0 : index
    %10 = vector.load %arg7[%c0_7, %c0_8] : memref<1x64xf32, #tpu.memory_space<vmem>>, vector<1x64xf32>
    %11 = vector.broadcast %10 : vector<1x64xf32> to vector<16x64xf32>
    %12 = arith.addf %9, %11 : vector<16x64xf32>
    %13 = arith.truncf %12 : vector<16x64xf32> to vector<16x64xbf16>
    %c0_9 = arith.constant 0 : index
    %c0_10 = arith.constant 0 : index
    %14 = vector.load %arg8[%c0_9, %c0_10] : memref<64x192xbf16, #tpu.memory_space<vmem>>, vector<64x192xbf16>
    %cst = arith.constant dense<0.000000e+00> : vector<16x192xf32>
    %15 = tpu.matmul %13, %14, %cst {dimension_numbers = #tpu.dot_dimension_numbers<[1], [0], [0], [1], [0, 0, 1, 1], [], []>} : vector<16x64xbf16>, vector<64x192xbf16>, vector<16x192xf32> -> vector<16x192xf32>
    %c0_i32 = arith.constant 0 : i32
    %16 = arith.cmpi eq, %arg2, %c0_i32 : i32
    %17 = arith.extui %16 : i1 to i32
    %c0_i32_11 = arith.constant 0 : i32
    %18 = arith.cmpi ne, %17, %c0_i32_11 : i32
    scf.if %18 {
      %c0_16 = arith.constant 0 : index
      %c0_17 = arith.constant 0 : index
      %25 = vector.load %arg11[%c0_16, %c0_17] : memref<16x192xf32, #tpu.memory_space<vmem>>, vector<16x192xf32>
      tpu.vector_store %arg11[%c0_16, %c0_17], %15 {strides = array<i32>} : memref<16x192xf32, #tpu.memory_space<vmem>>, vector<16x192xf32>,
    } else {
    }
    %c0_i32_12 = arith.constant 0 : i32
    %19 = arith.cmpi sgt, %arg2, %c0_i32_12 : i32
    %20 = arith.extui %19 : i1 to i32
    %c0_i32_13 = arith.constant 0 : i32
    %21 = arith.cmpi ne, %20, %c0_i32_13 : i32
    scf.if %21 {
      %c0_16 = arith.constant 0 : index
      %c0_17 = arith.constant 0 : index
      %25 = vector.load %arg11[%c0_16, %c0_17] : memref<16x192xf32, #tpu.memory_space<vmem>>, vector<16x192xf32>
      %26 = arith.addf %25, %15 : vector<16x192xf32>
      %c0_18 = arith.constant 0 : index
      %c0_19 = arith.constant 0 : index
      %27 = vector.load %arg11[%c0_18, %c0_19] : memref<16x192xf32, #tpu.memory_space<vmem>>, vector<16x192xf32>
      tpu.vector_store %arg11[%c0_18, %c0_19], %26 {strides = array<i32>} : memref<16x192xf32, #tpu.memory_space<vmem>>, vector<16x192xf32>,
    } else {
    }
    %c0_i32_14 = arith.constant 0 : i32
    %22 = arith.cmpi eq, %arg2, %c0_i32_14 : i32
    %23 = arith.extui %22 : i1 to i32
    %c0_i32_15 = arith.constant 0 : i32
    %24 = arith.cmpi ne, %23, %c0_i32_15 : i32
    scf.if %24 {
      %c0_16 = arith.constant 0 : index
      %c0_17 = arith.constant 0 : index
      %25 = vector.load %arg11[%c0_16, %c0_17] : memref<16x192xf32, #tpu.memory_space<vmem>>, vector<16x192xf32>
      %c0_18 = arith.constant 0 : index
      %c0_19 = arith.constant 0 : index
      %26 = vector.load %arg9[%c0_18, %c0_19] : memref<1x192xf32, #tpu.memory_space<vmem>>, vector<1x192xf32>
      %27 = vector.broadcast %26 : vector<1x192xf32> to vector<16x192xf32>
      %28 = arith.addf %25, %27 : vector<16x192xf32>
      %29 = arith.truncf %28 : vector<16x192xf32> to vector<16x192xbf16>
      %c0_20 = arith.constant 0 : index
      %c0_21 = arith.constant 0 : index
      %30 = vector.load %arg10[%c0_20, %c0_21] : memref<16x192xbf16, #tpu.memory_space<vmem>>, vector<16x192xbf16>
      tpu.vector_store %arg10[%c0_20, %c0_21], %29 {strides = array<i32>} : memref<16x192xbf16, #tpu.memory_space<vmem>>, vector<16x192xbf16>,
    } else {
    }
    return
  }
  func.func @transform_0(%arg0: i32, %arg1: i32, %arg2: i32) -> (i32, i32) {
    %c0_i32 = arith.constant 0 : i32
    return %arg0, %arg2 : i32, i32
  }
  func.func @transform_1(%arg0: i32, %arg1: i32, %arg2: i32) -> (i32, i32) {
    %c0_i32 = arith.constant 0 : i32
    %c0_i32_0 = arith.constant 0 : i32
    return %arg0, %c0_i32 : i32, i32
  }
  func.func @transform_2(%arg0: i32, %arg1: i32, %arg2: i32) -> (i32, i32) {
    %c0_i32 = arith.constant 0 : i32
    %c0_i32_0 = arith.constant 0 : i32
    return %arg0, %c0_i32 : i32, i32
  }
  func.func @transform_3(%arg0: i32, %arg1: i32, %arg2: i32) -> (i32, i32) {
    %c0_i32 = arith.constant 0 : i32
    %c0_i32_0 = arith.constant 0 : i32
    return %c0_i32, %arg2 : i32, i32
  }
  func.func @transform_4(%arg0: i32, %arg1: i32, %arg2: i32) -> (i32, i32) {
    %c0_i32 = arith.constant 0 : i32
    %c0_i32_0 = arith.constant 0 : i32
    return %c0_i32, %arg2 : i32, i32
  }
  func.func @transform_5(%arg0: i32, %arg1: i32, %arg2: i32) -> (i32, i32) {
    %c0_i32 = arith.constant 0 : i32
    return %arg2, %arg1 : i32, i32
  }
  func.func @transform_6(%arg0: i32, %arg1: i32, %arg2: i32) -> (i32, i32) {
    %c0_i32 = arith.constant 0 : i32
    %c0_i32_0 = arith.constant 0 : i32
    return %c0_i32, %arg1 : i32, i32
  }
  func.func @transform_7(%arg0: i32, %arg1: i32, %arg2: i32) -> (i32, i32) {
    %c0_i32 = arith.constant 0 : i32
    return %arg0, %arg1 : i32, i32
  }
}

module attributes {stable_mosaic.version = 11 : i64} {
  func.func @_ln_stats_kernel(%arg0: i32, %arg1: memref<16x64xf32, #tpu.memory_space<vmem>>, %arg2: memref<16x1xf32, #tpu.memory_space<vmem>>, %arg3: memref<16x1xf32, #tpu.memory_space<vmem>>) attributes {dimension_semantics = [#tpu.dimension_semantics<parallel>], iteration_bounds = array<i64: 1>, scalar_prefetch = 0 : i64, scratch_operands = 0 : i64, tpu.core_type = #tpu.core_type<tc>, window_params = [{transform_indices = @transform_0, window_bounds = array<i64: 16, 64>}, {transform_indices = @transform_1, window_bounds = array<i64: 16, 1>}, {transform_indices = @transform_2, window_bounds = array<i64: 16, 1>}]} {
    %c0 = arith.constant 0 : index
    %c0_0 = arith.constant 0 : index
    %0 = vector.load %arg1[%c0, %c0_0] : memref<16x64xf32, #tpu.memory_space<vmem>>, vector<16x64xf32>
    %cst = arith.constant dense<0.000000e+00> : vector<16xf32>
    %1 = vector.multi_reduction <add>, %0, %cst [1] : vector<16x64xf32> to vector<16xf32>
    %2 = vector.shape_cast %1 : vector<16xf32> to vector<16x1xf32>
    %cst_1 = arith.constant 6.400000e+01 : f32
    %3 = vector.broadcast %cst_1 : f32 to vector<16x1xf32>
    %4 = arith.divf %2, %3 : vector<16x1xf32>
    %5 = vector.broadcast %4 : vector<16x1xf32> to vector<16x64xf32>
    %6 = arith.subf %0, %5 : vector<16x64xf32>
    %7 = arith.mulf %6, %6 : vector<16x64xf32>
    %cst_2 = arith.constant dense<0.000000e+00> : vector<16xf32>
    %8 = vector.multi_reduction <add>, %7, %cst_2 [1] : vector<16x64xf32> to vector<16xf32>
    %9 = vector.shape_cast %8 : vector<16xf32> to vector<16x1xf32>
    %cst_3 = arith.constant 6.400000e+01 : f32
    %10 = vector.broadcast %cst_3 : f32 to vector<16x1xf32>
    %11 = arith.divf %9, %10 : vector<16x1xf32>
    %c0_4 = arith.constant 0 : index
    %c0_5 = arith.constant 0 : index
    %12 = vector.load %arg2[%c0_4, %c0_5] : memref<16x1xf32, #tpu.memory_space<vmem>>, vector<16x1xf32>
    tpu.vector_store %arg2[%c0_4, %c0_5], %4 {strides = array<i32>} : memref<16x1xf32, #tpu.memory_space<vmem>>, vector<16x1xf32>,
    %cst_6 = arith.constant 9.99999974E-6 : f32
    %13 = vector.broadcast %cst_6 : f32 to vector<16x1xf32>
    %14 = arith.addf %11, %13 : vector<16x1xf32>
    %15 = math.rsqrt %14 : vector<16x1xf32>
    %c0_7 = arith.constant 0 : index
    %c0_8 = arith.constant 0 : index
    %16 = vector.load %arg3[%c0_7, %c0_8] : memref<16x1xf32, #tpu.memory_space<vmem>>, vector<16x1xf32>
    tpu.vector_store %arg3[%c0_7, %c0_8], %15 {strides = array<i32>} : memref<16x1xf32, #tpu.memory_space<vmem>>, vector<16x1xf32>,
    return
  }
  func.func @transform_0(%arg0: i32) -> (i32, i32) {
    %c0_i32 = arith.constant 0 : i32
    %c0_i32_0 = arith.constant 0 : i32
    return %arg0, %c0_i32 : i32, i32
  }
  func.func @transform_1(%arg0: i32) -> (i32, i32) {
    %c0_i32 = arith.constant 0 : i32
    %c0_i32_0 = arith.constant 0 : i32
    return %arg0, %c0_i32 : i32, i32
  }
  func.func @transform_2(%arg0: i32) -> (i32, i32) {
    %c0_i32 = arith.constant 0 : i32
    %c0_i32_0 = arith.constant 0 : i32
    return %arg0, %c0_i32 : i32, i32
  }
}

module attributes {stable_mosaic.version = 11 : i64} {
  func.func @_linear_kernel(%arg0: i32, %arg1: i32, %arg2: i32, %arg3: memref<16x64xf32, #tpu.memory_space<vmem>>, %arg4: memref<64x64xbf16, #tpu.memory_space<vmem>>, %arg5: memref<1x64xf32, #tpu.memory_space<vmem>>, %arg6: memref<16x64xbf16, #tpu.memory_space<vmem>>, %arg7: memref<16x64xf32, #tpu.memory_space<vmem>>) attributes {dimension_semantics = [#tpu.dimension_semantics<parallel>, #tpu.dimension_semantics<parallel>, #tpu.dimension_semantics<arbitrary>], iteration_bounds = array<i64: 1, 1, 1>, scalar_prefetch = 0 : i64, scratch_operands = 1 : i64, tpu.core_type = #tpu.core_type<tc>, window_params = [{transform_indices = @transform_0, window_bounds = array<i64: 16, 64>}, {transform_indices = @transform_1, window_bounds = array<i64: 64, 64>}, {transform_indices = @transform_2, window_bounds = array<i64: 1, 64>}, {transform_indices = @transform_3, window_bounds = array<i64: 16, 64>}]} {
    %c0 = arith.constant 0 : index
    %c0_0 = arith.constant 0 : index
    %0 = vector.load %arg3[%c0, %c0_0] : memref<16x64xf32, #tpu.memory_space<vmem>>, vector<16x64xf32>
    %1 = arith.truncf %0 : vector<16x64xf32> to vector<16x64xbf16>
    %c0_1 = arith.constant 0 : index
    %c0_2 = arith.constant 0 : index
    %2 = vector.load %arg4[%c0_1, %c0_2] : memref<64x64xbf16, #tpu.memory_space<vmem>>, vector<64x64xbf16>
    %cst = arith.constant dense<0.000000e+00> : vector<16x64xf32>
    %3 = tpu.matmul %1, %2, %cst {dimension_numbers = #tpu.dot_dimension_numbers<[1], [0], [0], [1], [0, 0, 1, 1], [], []>} : vector<16x64xbf16>, vector<64x64xbf16>, vector<16x64xf32> -> vector<16x64xf32>
    %c0_i32 = arith.constant 0 : i32
    %4 = arith.cmpi eq, %arg2, %c0_i32 : i32
    %5 = arith.extui %4 : i1 to i32
    %c0_i32_3 = arith.constant 0 : i32
    %6 = arith.cmpi ne, %5, %c0_i32_3 : i32
    scf.if %6 {
      %c0_8 = arith.constant 0 : index
      %c0_9 = arith.constant 0 : index
      %13 = vector.load %arg7[%c0_8, %c0_9] : memref<16x64xf32, #tpu.memory_space<vmem>>, vector<16x64xf32>
      tpu.vector_store %arg7[%c0_8, %c0_9], %3 {strides = array<i32>} : memref<16x64xf32, #tpu.memory_space<vmem>>, vector<16x64xf32>,
    } else {
    }
    %c0_i32_4 = arith.constant 0 : i32
    %7 = arith.cmpi sgt, %arg2, %c0_i32_4 : i32
    %8 = arith.extui %7 : i1 to i32
    %c0_i32_5 = arith.constant 0 : i32
    %9 = arith.cmpi ne, %8, %c0_i32_5 : i32
    scf.if %9 {
      %c0_8 = arith.constant 0 : index
      %c0_9 = arith.constant 0 : index
      %13 = vector.load %arg7[%c0_8, %c0_9] : memref<16x64xf32, #tpu.memory_space<vmem>>, vector<16x64xf32>
      %14 = arith.addf %13, %3 : vector<16x64xf32>
      %c0_10 = arith.constant 0 : index
      %c0_11 = arith.constant 0 : index
      %15 = vector.load %arg7[%c0_10, %c0_11] : memref<16x64xf32, #tpu.memory_space<vmem>>, vector<16x64xf32>
      tpu.vector_store %arg7[%c0_10, %c0_11], %14 {strides = array<i32>} : memref<16x64xf32, #tpu.memory_space<vmem>>, vector<16x64xf32>,
    } else {
    }
    %c0_i32_6 = arith.constant 0 : i32
    %10 = arith.cmpi eq, %arg2, %c0_i32_6 : i32
    %11 = arith.extui %10 : i1 to i32
    %c0_i32_7 = arith.constant 0 : i32
    %12 = arith.cmpi ne, %11, %c0_i32_7 : i32
    scf.if %12 {
      %c0_8 = arith.constant 0 : index
      %c0_9 = arith.constant 0 : index
      %13 = vector.load %arg7[%c0_8, %c0_9] : memref<16x64xf32, #tpu.memory_space<vmem>>, vector<16x64xf32>
      %c0_10 = arith.constant 0 : index
      %c0_11 = arith.constant 0 : index
      %14 = vector.load %arg5[%c0_10, %c0_11] : memref<1x64xf32, #tpu.memory_space<vmem>>, vector<1x64xf32>
      %15 = vector.broadcast %14 : vector<1x64xf32> to vector<16x64xf32>
      %16 = arith.addf %13, %15 : vector<16x64xf32>
      %17 = arith.truncf %16 : vector<16x64xf32> to vector<16x64xbf16>
      %c0_12 = arith.constant 0 : index
      %c0_13 = arith.constant 0 : index
      %18 = vector.load %arg6[%c0_12, %c0_13] : memref<16x64xbf16, #tpu.memory_space<vmem>>, vector<16x64xbf16>
      tpu.vector_store %arg6[%c0_12, %c0_13], %17 {strides = array<i32>} : memref<16x64xbf16, #tpu.memory_space<vmem>>, vector<16x64xbf16>,
    } else {
    }
    return
  }
  func.func @transform_0(%arg0: i32, %arg1: i32, %arg2: i32) -> (i32, i32) {
    %c0_i32 = arith.constant 0 : i32
    return %arg0, %arg2 : i32, i32
  }
  func.func @transform_1(%arg0: i32, %arg1: i32, %arg2: i32) -> (i32, i32) {
    %c0_i32 = arith.constant 0 : i32
    return %arg2, %arg1 : i32, i32
  }
  func.func @transform_2(%arg0: i32, %arg1: i32, %arg2: i32) -> (i32, i32) {
    %c0_i32 = arith.constant 0 : i32
    %c0_i32_0 = arith.constant 0 : i32
    return %c0_i32, %arg1 : i32, i32
  }
  func.func @transform_3(%arg0: i32, %arg1: i32, %arg2: i32) -> (i32, i32) {
    %c0_i32 = arith.constant 0 : i32
    return %arg0, %arg1 : i32, i32
  }
}

module attributes {stable_mosaic.version = 11 : i64} {
  func.func @_attn_wo_kernel(%arg0: i32, %arg1: i32, %arg2: i32, %arg3: memref<1x1x8x8xbf16, #tpu.memory_space<vmem>>, %arg4: memref<1x1x8x8xbf16, #tpu.memory_space<vmem>>, %arg5: memref<1x1x8x8xbf16, #tpu.memory_space<vmem>>, %arg6: memref<8x64xbf16, #tpu.memory_space<vmem>>, %arg7: memref<1x64xf32, #tpu.memory_space<vmem>>, %arg8: memref<1x8x64xf32, #tpu.memory_space<vmem>>, %arg9: memref<1x8x64xf32, #tpu.memory_space<vmem>>) attributes {dimension_semantics = [#tpu.dimension_semantics<parallel>, #tpu.dimension_semantics<parallel>, #tpu.dimension_semantics<arbitrary>], iteration_bounds = array<i64: 2, 1, 8>, scalar_prefetch = 0 : i64, scratch_operands = 0 : i64, tpu.core_type = #tpu.core_type<tc>, window_params = [{transform_indices = @transform_0, window_bounds = array<i64: 1, 1, 8, 8>}, {transform_indices = @transform_1, window_bounds = array<i64: 1, 1, 8, 8>}, {transform_indices = @transform_2, window_bounds = array<i64: 1, 1, 8, 8>}, {transform_indices = @transform_3, window_bounds = array<i64: 8, 64>}, {pipeline_mode = #tpu.pipeline_mode<synchronous>, transform_indices = @transform_4, window_bounds = array<i64: 1, 64>}, {transform_indices = @transform_5, window_bounds = array<i64: 1, 8, 64>}, {transform_indices = @transform_6, window_bounds = array<i64: 1, 8, 64>}]} {
    %c0 = arith.constant 0 : index
    %c0_0 = arith.constant 0 : index
    %c0_1 = arith.constant 0 : index
    %c0_2 = arith.constant 0 : index
    %0 = vector.load %arg3[%c0, %c0_0, %c0_1, %c0_2] : memref<1x1x8x8xbf16, #tpu.memory_space<vmem>>, vector<1x1x8x8xbf16>
    %1 = vector.shape_cast %0 : vector<1x1x8x8xbf16> to vector<8x8xbf16>
    %c0_3 = arith.constant 0 : index
    %c0_4 = arith.constant 0 : index
    %c0_5 = arith.constant 0 : index
    %c0_6 = arith.constant 0 : index
    %2 = vector.load %arg4[%c0_3, %c0_4, %c0_5, %c0_6] : memref<1x1x8x8xbf16, #tpu.memory_space<vmem>>, vector<1x1x8x8xbf16>
    %3 = vector.shape_cast %2 : vector<1x1x8x8xbf16> to vector<8x8xbf16>
    %c0_7 = arith.constant 0 : index
    %c0_8 = arith.constant 0 : index
    %c0_9 = arith.constant 0 : index
    %c0_10 = arith.constant 0 : index
    %4 = vector.load %arg5[%c0_7, %c0_8, %c0_9, %c0_10] : memref<1x1x8x8xbf16, #tpu.memory_space<vmem>>, vector<1x1x8x8xbf16>
    %5 = vector.shape_cast %4 : vector<1x1x8x8xbf16> to vector<8x8xbf16>
    %cst = arith.constant dense<0.000000e+00> : vector<8x8xf32>
    %6 = tpu.matmul %1, %3, %cst {dimension_numbers = #tpu.dot_dimension_numbers<[1], [1], [0], [0], [0, 0, 1, 0], [], []>} : vector<8x8xbf16>, vector<8x8xbf16>, vector<8x8xf32> -> vector<8x8xf32>
    %cst_11 = arith.constant 0.353553385 : f32
    %7 = vector.broadcast %cst_11 : f32 to vector<8x8xf32>
    %8 = arith.mulf %6, %7 : vector<8x8xf32>
    %9 = tpu.iota {dimensions = array<i32: 0>} : vector<8x8xi32>
    %c8_i32 = arith.constant 8 : i32
    %10 = arith.muli %arg1, %c8_i32 : i32
    %11 = vector.broadcast %10 : i32 to vector<8x8xi32>
    %12 = arith.addi %9, %11 : vector<8x8xi32>
    %13 = tpu.iota {dimensions = array<i32: 1>} : vector<8x8xi32>
    %14 = arith.cmpi sle, %13, %12 : vector<8x8xi32>
    %cst_12 = arith.constant -1.000000e+30 : f32
    %15 = vector.broadcast %cst_12 : f32 to vector<8x8xf32>
    %16 = arith.select %14, %8, %15 : vector<8x8xi1>, vector<8x8xf32>
    %cst_13 = arith.constant dense<0xFF800000> : vector<8xf32>
    %17 = vector.multi_reduction <maximumf>, %16, %cst_13 [1] : vector<8x8xf32> to vector<8xf32>
    %18 = vector.shape_cast %17 : vector<8xf32> to vector<8x1xf32>
    %19 = vector.broadcast %18 : vector<8x1xf32> to vector<8x8xf32>
    %20 = arith.subf %16, %19 : vector<8x8xf32>
    %21 = math.exp %20 : vector<8x8xf32>
    %cst_14 = arith.constant dense<0.000000e+00> : vector<8xf32>
    %22 = vector.multi_reduction <add>, %21, %cst_14 [1] : vector<8x8xf32> to vector<8xf32>
    %23 = vector.shape_cast %22 : vector<8xf32> to vector<8x1xf32>
    %24 = tpu.reciprocal %23 {approx = true} : vector<8x1xf32> -> vector<8x1xf32>
    %25 = vector.broadcast %24 : vector<8x1xf32> to vector<8x8xf32>
    %26 = arith.mulf %21, %25 : vector<8x8xf32>
    %27 = arith.truncf %26 : vector<8x8xf32> to vector<8x8xbf16>
    %cst_15 = arith.constant dense<0.000000e+00> : vector<8x8xf32>
    %28 = tpu.matmul %27, %5, %cst_15 {dimension_numbers = #tpu.dot_dimension_numbers<[1], [0], [0], [1], [0, 0, 1, 1], [], []>} : vector<8x8xbf16>, vector<8x8xbf16>, vector<8x8xf32> -> vector<8x8xf32>
    %29 = arith.truncf %28 : vector<8x8xf32> to vector<8x8xbf16>
    %c0_16 = arith.constant 0 : index
    %c0_17 = arith.constant 0 : index
    %30 = vector.load %arg6[%c0_16, %c0_17] : memref<8x64xbf16, #tpu.memory_space<vmem>>, vector<8x64xbf16>
    %cst_18 = arith.constant dense<0.000000e+00> : vector<8x64xf32>
    %31 = tpu.matmul %29, %30, %cst_18 {dimension_numbers = #tpu.dot_dimension_numbers<[1], [0], [0], [1], [0, 0, 1, 1], [], []>} : vector<8x8xbf16>, vector<8x64xbf16>, vector<8x64xf32> -> vector<8x64xf32>
    %c0_i32 = arith.constant 0 : i32
    %32 = arith.cmpi eq, %arg2, %c0_i32 : i32
    %33 = arith.extui %32 : i1 to i32
    %c0_i32_19 = arith.constant 0 : i32
    %34 = arith.cmpi ne, %33, %c0_i32_19 : i32
    scf.if %34 {
      %c0_23 = arith.constant 0 : index
      %c0_24 = arith.constant 0 : index
      %c0_25 = arith.constant 0 : index
      %41 = vector.load %arg9[%c0_23, %c0_24, %c0_25] : memref<1x8x64xf32, #tpu.memory_space<vmem>>, vector<1x8x64xf32>
      %42 = vector.shape_cast %41 : vector<1x8x64xf32> to vector<8x64xf32>
      %43 = vector.shape_cast %31 : vector<8x64xf32> to vector<1x8x64xf32>
      tpu.vector_store %arg9[%c0_23, %c0_24, %c0_25], %43 {strides = array<i32>} : memref<1x8x64xf32, #tpu.memory_space<vmem>>, vector<1x8x64xf32>,
    } else {
    }
    %c0_i32_20 = arith.constant 0 : i32
    %35 = arith.cmpi sgt, %arg2, %c0_i32_20 : i32
    %36 = arith.extui %35 : i1 to i32
    %c0_i32_21 = arith.constant 0 : i32
    %37 = arith.cmpi ne, %36, %c0_i32_21 : i32
    scf.if %37 {
      %c0_23 = arith.constant 0 : index
      %c0_24 = arith.constant 0 : index
      %c0_25 = arith.constant 0 : index
      %41 = vector.load %arg9[%c0_23, %c0_24, %c0_25] : memref<1x8x64xf32, #tpu.memory_space<vmem>>, vector<1x8x64xf32>
      %42 = vector.shape_cast %41 : vector<1x8x64xf32> to vector<8x64xf32>
      %43 = arith.addf %42, %31 : vector<8x64xf32>
      %c0_26 = arith.constant 0 : index
      %c0_27 = arith.constant 0 : index
      %c0_28 = arith.constant 0 : index
      %44 = vector.load %arg9[%c0_26, %c0_27, %c0_28] : memref<1x8x64xf32, #tpu.memory_space<vmem>>, vector<1x8x64xf32>
      %45 = vector.shape_cast %44 : vector<1x8x64xf32> to vector<8x64xf32>
      %46 = vector.shape_cast %43 : vector<8x64xf32> to vector<1x8x64xf32>
      tpu.vector_store %arg9[%c0_26, %c0_27, %c0_28], %46 {strides = array<i32>} : memref<1x8x64xf32, #tpu.memory_space<vmem>>, vector<1x8x64xf32>,
    } else {
    }
    %c7_i32 = arith.constant 7 : i32
    %38 = arith.cmpi eq, %arg2, %c7_i32 : i32
    %39 = arith.extui %38 : i1 to i32
    %c0_i32_22 = arith.constant 0 : i32
    %40 = arith.cmpi ne, %39, %c0_i32_22 : i32
    scf.if %40 {
      %c0_23 = arith.constant 0 : index
      %c0_24 = arith.constant 0 : index
      %c0_25 = arith.constant 0 : index
      %41 = vector.load %arg9[%c0_23, %c0_24, %c0_25] : memref<1x8x64xf32, #tpu.memory_space<vmem>>, vector<1x8x64xf32>
      %42 = vector.shape_cast %41 : vector<1x8x64xf32> to vector<8x64xf32>
      %c0_26 = arith.constant 0 : index
      %c0_27 = arith.constant 0 : index
      %43 = vector.load %arg7[%c0_26, %c0_27] : memref<1x64xf32, #tpu.memory_space<vmem>>, vector<1x64xf32>
      %44 = vector.broadcast %43 : vector<1x64xf32> to vector<8x64xf32>
      %45 = arith.addf %42, %44 : vector<8x64xf32>
      %c0_28 = arith.constant 0 : index
      %c0_29 = arith.constant 0 : index
      %c0_30 = arith.constant 0 : index
      %46 = vector.load %arg8[%c0_28, %c0_29, %c0_30] : memref<1x8x64xf32, #tpu.memory_space<vmem>>, vector<1x8x64xf32>
      %47 = vector.shape_cast %46 : vector<1x8x64xf32> to vector<8x64xf32>
      %48 = arith.addf %45, %47 : vector<8x64xf32>
      %c0_31 = arith.constant 0 : index
      %c0_32 = arith.constant 0 : index
      %c0_33 = arith.constant 0 : index
      %49 = vector.load %arg9[%c0_31, %c0_32, %c0_33] : memref<1x8x64xf32, #tpu.memory_space<vmem>>, vector<1x8x64xf32>
      %50 = vector.shape_cast %49 : vector<1x8x64xf32> to vector<8x64xf32>
      %51 = vector.shape_cast %48 : vector<8x64xf32> to vector<1x8x64xf32>
      tpu.vector_store %arg9[%c0_31, %c0_32, %c0_33], %51 {strides = array<i32>} : memref<1x8x64xf32, #tpu.memory_space<vmem>>, vector<1x8x64xf32>,
    } else {
    }
    return
  }
  func.func @transform_0(%arg0: i32, %arg1: i32, %arg2: i32) -> (i32, i32, i32, i32) {
    %c0_i32 = arith.constant 0 : i32
    %c0_i32_0 = arith.constant 0 : i32
    return %arg0, %arg2, %arg1, %c0_i32 : i32, i32, i32, i32
  }
  func.func @transform_1(%arg0: i32, %arg1: i32, %arg2: i32) -> (i32, i32, i32, i32) {
    %c0_i32 = arith.constant 0 : i32
    %c0_i32_0 = arith.constant 0 : i32
    %c0_i32_1 = arith.constant 0 : i32
    return %arg0, %arg2, %c0_i32, %c0_i32_0 : i32, i32, i32, i32
  }
  func.func @transform_2(%arg0: i32, %arg1: i32, %arg2: i32) -> (i32, i32, i32, i32) {
    %c0_i32 = arith.constant 0 : i32
    %c0_i32_0 = arith.constant 0 : i32
    %c0_i32_1 = arith.constant 0 : i32
    return %arg0, %arg2, %c0_i32, %c0_i32_0 : i32, i32, i32, i32
  }
  func.func @transform_3(%arg0: i32, %arg1: i32, %arg2: i32) -> (i32, i32) {
    %c0_i32 = arith.constant 0 : i32
    %c0_i32_0 = arith.constant 0 : i32
    return %arg2, %c0_i32 : i32, i32
  }
  func.func @transform_4(%arg0: i32, %arg1: i32, %arg2: i32) -> (i32, i32) {
    %c0_i32 = arith.constant 0 : i32
    %c0_i32_0 = arith.constant 0 : i32
    %c0_i32_1 = arith.constant 0 : i32
    return %c0_i32, %c0_i32_0 : i32, i32
  }
  func.func @transform_5(%arg0: i32, %arg1: i32, %arg2: i32) -> (i32, i32, i32) {
    %c0_i32 = arith.constant 0 : i32
    %c0_i32_0 = arith.constant 0 : i32
    return %arg0, %arg1, %c0_i32 : i32, i32, i32
  }
  func.func @transform_6(%arg0: i32, %arg1: i32, %arg2: i32) -> (i32, i32, i32) {
    %c0_i32 = arith.constant 0 : i32
    %c0_i32_0 = arith.constant 0 : i32
    return %arg0, %arg1, %c0_i32 : i32, i32, i32
  }
}

module attributes {stable_mosaic.version = 11 : i64} {
  func.func @_linear_kernel(%arg0: i32, %arg1: i32, %arg2: i32, %arg3: memref<16x64xf32, #tpu.memory_space<vmem>>, %arg4: memref<64x128xbf16, #tpu.memory_space<vmem>>, %arg5: memref<1x128xf32, #tpu.memory_space<vmem>>, %arg6: memref<16x128xbf16, #tpu.memory_space<vmem>>, %arg7: memref<16x128xf32, #tpu.memory_space<vmem>>) attributes {dimension_semantics = [#tpu.dimension_semantics<parallel>, #tpu.dimension_semantics<parallel>, #tpu.dimension_semantics<arbitrary>], iteration_bounds = array<i64: 1, 1, 1>, scalar_prefetch = 0 : i64, scratch_operands = 1 : i64, tpu.core_type = #tpu.core_type<tc>, window_params = [{transform_indices = @transform_0, window_bounds = array<i64: 16, 64>}, {transform_indices = @transform_1, window_bounds = array<i64: 64, 128>}, {transform_indices = @transform_2, window_bounds = array<i64: 1, 128>}, {transform_indices = @transform_3, window_bounds = array<i64: 16, 128>}]} {
    %c0 = arith.constant 0 : index
    %c0_0 = arith.constant 0 : index
    %0 = vector.load %arg3[%c0, %c0_0] : memref<16x64xf32, #tpu.memory_space<vmem>>, vector<16x64xf32>
    %1 = arith.truncf %0 : vector<16x64xf32> to vector<16x64xbf16>
    %c0_1 = arith.constant 0 : index
    %c0_2 = arith.constant 0 : index
    %2 = vector.load %arg4[%c0_1, %c0_2] : memref<64x128xbf16, #tpu.memory_space<vmem>>, vector<64x128xbf16>
    %cst = arith.constant dense<0.000000e+00> : vector<16x128xf32>
    %3 = tpu.matmul %1, %2, %cst {dimension_numbers = #tpu.dot_dimension_numbers<[1], [0], [0], [1], [0, 0, 1, 1], [], []>} : vector<16x64xbf16>, vector<64x128xbf16>, vector<16x128xf32> -> vector<16x128xf32>
    %c0_i32 = arith.constant 0 : i32
    %4 = arith.cmpi eq, %arg2, %c0_i32 : i32
    %5 = arith.extui %4 : i1 to i32
    %c0_i32_3 = arith.constant 0 : i32
    %6 = arith.cmpi ne, %5, %c0_i32_3 : i32
    scf.if %6 {
      %c0_8 = arith.constant 0 : index
      %c0_9 = arith.constant 0 : index
      %13 = vector.load %arg7[%c0_8, %c0_9] : memref<16x128xf32, #tpu.memory_space<vmem>>, vector<16x128xf32>
      tpu.vector_store %arg7[%c0_8, %c0_9], %3 {strides = array<i32>} : memref<16x128xf32, #tpu.memory_space<vmem>>, vector<16x128xf32>,
    } else {
    }
    %c0_i32_4 = arith.constant 0 : i32
    %7 = arith.cmpi sgt, %arg2, %c0_i32_4 : i32
    %8 = arith.extui %7 : i1 to i32
    %c0_i32_5 = arith.constant 0 : i32
    %9 = arith.cmpi ne, %8, %c0_i32_5 : i32
    scf.if %9 {
      %c0_8 = arith.constant 0 : index
      %c0_9 = arith.constant 0 : index
      %13 = vector.load %arg7[%c0_8, %c0_9] : memref<16x128xf32, #tpu.memory_space<vmem>>, vector<16x128xf32>
      %14 = arith.addf %13, %3 : vector<16x128xf32>
      %c0_10 = arith.constant 0 : index
      %c0_11 = arith.constant 0 : index
      %15 = vector.load %arg7[%c0_10, %c0_11] : memref<16x128xf32, #tpu.memory_space<vmem>>, vector<16x128xf32>
      tpu.vector_store %arg7[%c0_10, %c0_11], %14 {strides = array<i32>} : memref<16x128xf32, #tpu.memory_space<vmem>>, vector<16x128xf32>,
    } else {
    }
    %c0_i32_6 = arith.constant 0 : i32
    %10 = arith.cmpi eq, %arg2, %c0_i32_6 : i32
    %11 = arith.extui %10 : i1 to i32
    %c0_i32_7 = arith.constant 0 : i32
    %12 = arith.cmpi ne, %11, %c0_i32_7 : i32
    scf.if %12 {
      %c0_8 = arith.constant 0 : index
      %c0_9 = arith.constant 0 : index
      %13 = vector.load %arg7[%c0_8, %c0_9] : memref<16x128xf32, #tpu.memory_space<vmem>>, vector<16x128xf32>
      %c0_10 = arith.constant 0 : index
      %c0_11 = arith.constant 0 : index
      %14 = vector.load %arg5[%c0_10, %c0_11] : memref<1x128xf32, #tpu.memory_space<vmem>>, vector<1x128xf32>
      %15 = vector.broadcast %14 : vector<1x128xf32> to vector<16x128xf32>
      %16 = arith.addf %13, %15 : vector<16x128xf32>
      %17 = arith.truncf %16 : vector<16x128xf32> to vector<16x128xbf16>
      %c0_12 = arith.constant 0 : index
      %c0_13 = arith.constant 0 : index
      %18 = vector.load %arg6[%c0_12, %c0_13] : memref<16x128xbf16, #tpu.memory_space<vmem>>, vector<16x128xbf16>
      tpu.vector_store %arg6[%c0_12, %c0_13], %17 {strides = array<i32>} : memref<16x128xbf16, #tpu.memory_space<vmem>>, vector<16x128xbf16>,
    } else {
    }
    return
  }
  func.func @transform_0(%arg0: i32, %arg1: i32, %arg2: i32) -> (i32, i32) {
    %c0_i32 = arith.constant 0 : i32
    return %arg0, %arg2 : i32, i32
  }
  func.func @transform_1(%arg0: i32, %arg1: i32, %arg2: i32) -> (i32, i32) {
    %c0_i32 = arith.constant 0 : i32
    return %arg2, %arg1 : i32, i32
  }
  func.func @transform_2(%arg0: i32, %arg1: i32, %arg2: i32) -> (i32, i32) {
    %c0_i32 = arith.constant 0 : i32
    %c0_i32_0 = arith.constant 0 : i32
    return %c0_i32, %arg1 : i32, i32
  }
  func.func @transform_3(%arg0: i32, %arg1: i32, %arg2: i32) -> (i32, i32) {
    %c0_i32 = arith.constant 0 : i32
    return %arg0, %arg1 : i32, i32
  }
}

module attributes {stable_mosaic.version = 11 : i64} {
  func.func @_attn_wo_kernel(%arg0: i32, %arg1: i32, %arg2: i32, %arg3: memref<1x1x8x8xbf16, #tpu.memory_space<vmem>>, %arg4: memref<1x1x8x8xbf16, #tpu.memory_space<vmem>>, %arg5: memref<1x1x8x8xbf16, #tpu.memory_space<vmem>>, %arg6: memref<8x64xbf16, #tpu.memory_space<vmem>>, %arg7: memref<1x64xf32, #tpu.memory_space<vmem>>, %arg8: memref<1x8x64xf32, #tpu.memory_space<vmem>>, %arg9: memref<1x8x64xf32, #tpu.memory_space<vmem>>) attributes {dimension_semantics = [#tpu.dimension_semantics<parallel>, #tpu.dimension_semantics<parallel>, #tpu.dimension_semantics<arbitrary>], iteration_bounds = array<i64: 2, 1, 8>, scalar_prefetch = 0 : i64, scratch_operands = 0 : i64, tpu.core_type = #tpu.core_type<tc>, window_params = [{transform_indices = @transform_0, window_bounds = array<i64: 1, 1, 8, 8>}, {transform_indices = @transform_1, window_bounds = array<i64: 1, 1, 8, 8>}, {transform_indices = @transform_2, window_bounds = array<i64: 1, 1, 8, 8>}, {transform_indices = @transform_3, window_bounds = array<i64: 8, 64>}, {pipeline_mode = #tpu.pipeline_mode<synchronous>, transform_indices = @transform_4, window_bounds = array<i64: 1, 64>}, {transform_indices = @transform_5, window_bounds = array<i64: 1, 8, 64>}, {transform_indices = @transform_6, window_bounds = array<i64: 1, 8, 64>}]} {
    %c0 = arith.constant 0 : index
    %c0_0 = arith.constant 0 : index
    %c0_1 = arith.constant 0 : index
    %c0_2 = arith.constant 0 : index
    %0 = vector.load %arg3[%c0, %c0_0, %c0_1, %c0_2] : memref<1x1x8x8xbf16, #tpu.memory_space<vmem>>, vector<1x1x8x8xbf16>
    %1 = vector.shape_cast %0 : vector<1x1x8x8xbf16> to vector<8x8xbf16>
    %c0_3 = arith.constant 0 : index
    %c0_4 = arith.constant 0 : index
    %c0_5 = arith.constant 0 : index
    %c0_6 = arith.constant 0 : index
    %2 = vector.load %arg4[%c0_3, %c0_4, %c0_5, %c0_6] : memref<1x1x8x8xbf16, #tpu.memory_space<vmem>>, vector<1x1x8x8xbf16>
    %3 = vector.shape_cast %2 : vector<1x1x8x8xbf16> to vector<8x8xbf16>
    %c0_7 = arith.constant 0 : index
    %c0_8 = arith.constant 0 : index
    %c0_9 = arith.constant 0 : index
    %c0_10 = arith.constant 0 : index
    %4 = vector.load %arg5[%c0_7, %c0_8, %c0_9, %c0_10] : memref<1x1x8x8xbf16, #tpu.memory_space<vmem>>, vector<1x1x8x8xbf16>
    %5 = vector.shape_cast %4 : vector<1x1x8x8xbf16> to vector<8x8xbf16>
    %cst = arith.constant dense<0.000000e+00> : vector<8x8xf32>
    %6 = tpu.matmul %1, %3, %cst {dimension_numbers = #tpu.dot_dimension_numbers<[1], [1], [0], [0], [0, 0, 1, 0], [], []>} : vector<8x8xbf16>, vector<8x8xbf16>, vector<8x8xf32> -> vector<8x8xf32>
    %cst_11 = arith.constant 0.353553385 : f32
    %7 = vector.broadcast %cst_11 : f32 to vector<8x8xf32>
    %8 = arith.mulf %6, %7 : vector<8x8xf32>
    %cst_12 = arith.constant dense<0xFF800000> : vector<8xf32>
    %9 = vector.multi_reduction <maximumf>, %8, %cst_12 [1] : vector<8x8xf32> to vector<8xf32>
    %10 = vector.shape_cast %9 : vector<8xf32> to vector<8x1xf32>
    %11 = vector.broadcast %10 : vector<8x1xf32> to vector<8x8xf32>
    %12 = arith.subf %8, %11 : vector<8x8xf32>
    %13 = math.exp %12 : vector<8x8xf32>
    %cst_13 = arith.constant dense<0.000000e+00> : vector<8xf32>
    %14 = vector.multi_reduction <add>, %13, %cst_13 [1] : vector<8x8xf32> to vector<8xf32>
    %15 = vector.shape_cast %14 : vector<8xf32> to vector<8x1xf32>
    %16 = tpu.reciprocal %15 {approx = true} : vector<8x1xf32> -> vector<8x1xf32>
    %17 = vector.broadcast %16 : vector<8x1xf32> to vector<8x8xf32>
    %18 = arith.mulf %13, %17 : vector<8x8xf32>
    %19 = arith.truncf %18 : vector<8x8xf32> to vector<8x8xbf16>
    %cst_14 = arith.constant dense<0.000000e+00> : vector<8x8xf32>
    %20 = tpu.matmul %19, %5, %cst_14 {dimension_numbers = #tpu.dot_dimension_numbers<[1], [0], [0], [1], [0, 0, 1, 1], [], []>} : vector<8x8xbf16>, vector<8x8xbf16>, vector<8x8xf32> -> vector<8x8xf32>
    %21 = arith.truncf %20 : vector<8x8xf32> to vector<8x8xbf16>
    %c0_15 = arith.constant 0 : index
    %c0_16 = arith.constant 0 : index
    %22 = vector.load %arg6[%c0_15, %c0_16] : memref<8x64xbf16, #tpu.memory_space<vmem>>, vector<8x64xbf16>
    %cst_17 = arith.constant dense<0.000000e+00> : vector<8x64xf32>
    %23 = tpu.matmul %21, %22, %cst_17 {dimension_numbers = #tpu.dot_dimension_numbers<[1], [0], [0], [1], [0, 0, 1, 1], [], []>} : vector<8x8xbf16>, vector<8x64xbf16>, vector<8x64xf32> -> vector<8x64xf32>
    %c0_i32 = arith.constant 0 : i32
    %24 = arith.cmpi eq, %arg2, %c0_i32 : i32
    %25 = arith.extui %24 : i1 to i32
    %c0_i32_18 = arith.constant 0 : i32
    %26 = arith.cmpi ne, %25, %c0_i32_18 : i32
    scf.if %26 {
      %c0_22 = arith.constant 0 : index
      %c0_23 = arith.constant 0 : index
      %c0_24 = arith.constant 0 : index
      %33 = vector.load %arg9[%c0_22, %c0_23, %c0_24] : memref<1x8x64xf32, #tpu.memory_space<vmem>>, vector<1x8x64xf32>
      %34 = vector.shape_cast %33 : vector<1x8x64xf32> to vector<8x64xf32>
      %35 = vector.shape_cast %23 : vector<8x64xf32> to vector<1x8x64xf32>
      tpu.vector_store %arg9[%c0_22, %c0_23, %c0_24], %35 {strides = array<i32>} : memref<1x8x64xf32, #tpu.memory_space<vmem>>, vector<1x8x64xf32>,
    } else {
    }
    %c0_i32_19 = arith.constant 0 : i32
    %27 = arith.cmpi sgt, %arg2, %c0_i32_19 : i32
    %28 = arith.extui %27 : i1 to i32
    %c0_i32_20 = arith.constant 0 : i32
    %29 = arith.cmpi ne, %28, %c0_i32_20 : i32
    scf.if %29 {
      %c0_22 = arith.constant 0 : index
      %c0_23 = arith.constant 0 : index
      %c0_24 = arith.constant 0 : index
      %33 = vector.load %arg9[%c0_22, %c0_23, %c0_24] : memref<1x8x64xf32, #tpu.memory_space<vmem>>, vector<1x8x64xf32>
      %34 = vector.shape_cast %33 : vector<1x8x64xf32> to vector<8x64xf32>
      %35 = arith.addf %34, %23 : vector<8x64xf32>
      %c0_25 = arith.constant 0 : index
      %c0_26 = arith.constant 0 : index
      %c0_27 = arith.constant 0 : index
      %36 = vector.load %arg9[%c0_25, %c0_26, %c0_27] : memref<1x8x64xf32, #tpu.memory_space<vmem>>, vector<1x8x64xf32>
      %37 = vector.shape_cast %36 : vector<1x8x64xf32> to vector<8x64xf32>
      %38 = vector.shape_cast %35 : vector<8x64xf32> to vector<1x8x64xf32>
      tpu.vector_store %arg9[%c0_25, %c0_26, %c0_27], %38 {strides = array<i32>} : memref<1x8x64xf32, #tpu.memory_space<vmem>>, vector<1x8x64xf32>,
    } else {
    }
    %c7_i32 = arith.constant 7 : i32
    %30 = arith.cmpi eq, %arg2, %c7_i32 : i32
    %31 = arith.extui %30 : i1 to i32
    %c0_i32_21 = arith.constant 0 : i32
    %32 = arith.cmpi ne, %31, %c0_i32_21 : i32
    scf.if %32 {
      %c0_22 = arith.constant 0 : index
      %c0_23 = arith.constant 0 : index
      %c0_24 = arith.constant 0 : index
      %33 = vector.load %arg9[%c0_22, %c0_23, %c0_24] : memref<1x8x64xf32, #tpu.memory_space<vmem>>, vector<1x8x64xf32>
      %34 = vector.shape_cast %33 : vector<1x8x64xf32> to vector<8x64xf32>
      %c0_25 = arith.constant 0 : index
      %c0_26 = arith.constant 0 : index
      %35 = vector.load %arg7[%c0_25, %c0_26] : memref<1x64xf32, #tpu.memory_space<vmem>>, vector<1x64xf32>
      %36 = vector.broadcast %35 : vector<1x64xf32> to vector<8x64xf32>
      %37 = arith.addf %34, %36 : vector<8x64xf32>
      %c0_27 = arith.constant 0 : index
      %c0_28 = arith.constant 0 : index
      %c0_29 = arith.constant 0 : index
      %38 = vector.load %arg8[%c0_27, %c0_28, %c0_29] : memref<1x8x64xf32, #tpu.memory_space<vmem>>, vector<1x8x64xf32>
      %39 = vector.shape_cast %38 : vector<1x8x64xf32> to vector<8x64xf32>
      %40 = arith.addf %37, %39 : vector<8x64xf32>
      %c0_30 = arith.constant 0 : index
      %c0_31 = arith.constant 0 : index
      %c0_32 = arith.constant 0 : index
      %41 = vector.load %arg9[%c0_30, %c0_31, %c0_32] : memref<1x8x64xf32, #tpu.memory_space<vmem>>, vector<1x8x64xf32>
      %42 = vector.shape_cast %41 : vector<1x8x64xf32> to vector<8x64xf32>
      %43 = vector.shape_cast %40 : vector<8x64xf32> to vector<1x8x64xf32>
      tpu.vector_store %arg9[%c0_30, %c0_31, %c0_32], %43 {strides = array<i32>} : memref<1x8x64xf32, #tpu.memory_space<vmem>>, vector<1x8x64xf32>,
    } else {
    }
    return
  }
  func.func @transform_0(%arg0: i32, %arg1: i32, %arg2: i32) -> (i32, i32, i32, i32) {
    %c0_i32 = arith.constant 0 : i32
    %c0_i32_0 = arith.constant 0 : i32
    return %arg0, %arg2, %arg1, %c0_i32 : i32, i32, i32, i32
  }
  func.func @transform_1(%arg0: i32, %arg1: i32, %arg2: i32) -> (i32, i32, i32, i32) {
    %c0_i32 = arith.constant 0 : i32
    %c0_i32_0 = arith.constant 0 : i32
    %c0_i32_1 = arith.constant 0 : i32
    return %arg0, %arg2, %c0_i32, %c0_i32_0 : i32, i32, i32, i32
  }
  func.func @transform_2(%arg0: i32, %arg1: i32, %arg2: i32) -> (i32, i32, i32, i32) {
    %c0_i32 = arith.constant 0 : i32
    %c0_i32_0 = arith.constant 0 : i32
    %c0_i32_1 = arith.constant 0 : i32
    return %arg0, %arg2, %c0_i32, %c0_i32_0 : i32, i32, i32, i32
  }
  func.func @transform_3(%arg0: i32, %arg1: i32, %arg2: i32) -> (i32, i32) {
    %c0_i32 = arith.constant 0 : i32
    %c0_i32_0 = arith.constant 0 : i32
    return %arg2, %c0_i32 : i32, i32
  }
  func.func @transform_4(%arg0: i32, %arg1: i32, %arg2: i32) -> (i32, i32) {
    %c0_i32 = arith.constant 0 : i32
    %c0_i32_0 = arith.constant 0 : i32
    %c0_i32_1 = arith.constant 0 : i32
    return %c0_i32, %c0_i32_0 : i32, i32
  }
  func.func @transform_5(%arg0: i32, %arg1: i32, %arg2: i32) -> (i32, i32, i32) {
    %c0_i32 = arith.constant 0 : i32
    %c0_i32_0 = arith.constant 0 : i32
    return %arg0, %arg1, %c0_i32 : i32, i32, i32
  }
  func.func @transform_6(%arg0: i32, %arg1: i32, %arg2: i32) -> (i32, i32, i32) {
    %c0_i32 = arith.constant 0 : i32
    %c0_i32_0 = arith.constant 0 : i32
    return %arg0, %arg1, %c0_i32 : i32, i32, i32
  }
}

module attributes {stable_mosaic.version = 11 : i64} {
  func.func @_linear_kernel(%arg0: i32, %arg1: i32, %arg2: i32, %arg3: memref<16x64xf32, #tpu.memory_space<vmem>>, %arg4: memref<16x1xf32, #tpu.memory_space<vmem>>, %arg5: memref<16x1xf32, #tpu.memory_space<vmem>>, %arg6: memref<1x64xf32, #tpu.memory_space<vmem>>, %arg7: memref<1x64xf32, #tpu.memory_space<vmem>>, %arg8: memref<64x256xbf16, #tpu.memory_space<vmem>>, %arg9: memref<1x256xf32, #tpu.memory_space<vmem>>, %arg10: memref<16x256xbf16, #tpu.memory_space<vmem>>, %arg11: memref<16x256xf32, #tpu.memory_space<vmem>>) attributes {dimension_semantics = [#tpu.dimension_semantics<parallel>, #tpu.dimension_semantics<parallel>, #tpu.dimension_semantics<arbitrary>], iteration_bounds = array<i64: 1, 1, 1>, scalar_prefetch = 0 : i64, scratch_operands = 1 : i64, tpu.core_type = #tpu.core_type<tc>, window_params = [{transform_indices = @transform_0, window_bounds = array<i64: 16, 64>}, {transform_indices = @transform_1, window_bounds = array<i64: 16, 1>}, {transform_indices = @transform_2, window_bounds = array<i64: 16, 1>}, {transform_indices = @transform_3, window_bounds = array<i64: 1, 64>}, {transform_indices = @transform_4, window_bounds = array<i64: 1, 64>}, {transform_indices = @transform_5, window_bounds = array<i64: 64, 256>}, {transform_indices = @transform_6, window_bounds = array<i64: 1, 256>}, {transform_indices = @transform_7, window_bounds = array<i64: 16, 256>}]} {
    %c0 = arith.constant 0 : index
    %c0_0 = arith.constant 0 : index
    %0 = vector.load %arg3[%c0, %c0_0] : memref<16x64xf32, #tpu.memory_space<vmem>>, vector<16x64xf32>
    %c0_1 = arith.constant 0 : index
    %c0_2 = arith.constant 0 : index
    %1 = vector.load %arg4[%c0_1, %c0_2] : memref<16x1xf32, #tpu.memory_space<vmem>>, vector<16x1xf32>
    %2 = vector.broadcast %1 : vector<16x1xf32> to vector<16x64xf32>
    %3 = arith.subf %0, %2 : vector<16x64xf32>
    %c0_3 = arith.constant 0 : index
    %c0_4 = arith.constant 0 : index
    %4 = vector.load %arg5[%c0_3, %c0_4] : memref<16x1xf32, #tpu.memory_space<vmem>>, vector<16x1xf32>
    %5 = vector.broadcast %4 : vector<16x1xf32> to vector<16x64xf32>
    %6 = arith.mulf %3, %5 : vector<16x64xf32>
    %c0_5 = arith.constant 0 : index
    %c0_6 = arith.constant 0 : index
    %7 = vector.load %arg6[%c0_5, %c0_6] : memref<1x64xf32, #tpu.memory_space<vmem>>, vector<1x64xf32>
    %8 = vector.broadcast %7 : vector<1x64xf32> to vector<16x64xf32>
    %9 = arith.mulf %6, %8 : vector<16x64xf32>
    %c0_7 = arith.constant 0 : index
    %c0_8 = arith.constant 0 : index
    %10 = vector.load %arg7[%c0_7, %c0_8] : memref<1x64xf32, #tpu.memory_space<vmem>>, vector<1x64xf32>
    %11 = vector.broadcast %10 : vector<1x64xf32> to vector<16x64xf32>
    %12 = arith.addf %9, %11 : vector<16x64xf32>
    %13 = arith.truncf %12 : vector<16x64xf32> to vector<16x64xbf16>
    %c0_9 = arith.constant 0 : index
    %c0_10 = arith.constant 0 : index
    %14 = vector.load %arg8[%c0_9, %c0_10] : memref<64x256xbf16, #tpu.memory_space<vmem>>, vector<64x256xbf16>
    %cst = arith.constant dense<0.000000e+00> : vector<16x256xf32>
    %15 = tpu.matmul %13, %14, %cst {dimension_numbers = #tpu.dot_dimension_numbers<[1], [0], [0], [1], [0, 0, 1, 1], [], []>} : vector<16x64xbf16>, vector<64x256xbf16>, vector<16x256xf32> -> vector<16x256xf32>
    %c0_i32 = arith.constant 0 : i32
    %16 = arith.cmpi eq, %arg2, %c0_i32 : i32
    %17 = arith.extui %16 : i1 to i32
    %c0_i32_11 = arith.constant 0 : i32
    %18 = arith.cmpi ne, %17, %c0_i32_11 : i32
    scf.if %18 {
      %c0_16 = arith.constant 0 : index
      %c0_17 = arith.constant 0 : index
      %25 = vector.load %arg11[%c0_16, %c0_17] : memref<16x256xf32, #tpu.memory_space<vmem>>, vector<16x256xf32>
      tpu.vector_store %arg11[%c0_16, %c0_17], %15 {strides = array<i32>} : memref<16x256xf32, #tpu.memory_space<vmem>>, vector<16x256xf32>,
    } else {
    }
    %c0_i32_12 = arith.constant 0 : i32
    %19 = arith.cmpi sgt, %arg2, %c0_i32_12 : i32
    %20 = arith.extui %19 : i1 to i32
    %c0_i32_13 = arith.constant 0 : i32
    %21 = arith.cmpi ne, %20, %c0_i32_13 : i32
    scf.if %21 {
      %c0_16 = arith.constant 0 : index
      %c0_17 = arith.constant 0 : index
      %25 = vector.load %arg11[%c0_16, %c0_17] : memref<16x256xf32, #tpu.memory_space<vmem>>, vector<16x256xf32>
      %26 = arith.addf %25, %15 : vector<16x256xf32>
      %c0_18 = arith.constant 0 : index
      %c0_19 = arith.constant 0 : index
      %27 = vector.load %arg11[%c0_18, %c0_19] : memref<16x256xf32, #tpu.memory_space<vmem>>, vector<16x256xf32>
      tpu.vector_store %arg11[%c0_18, %c0_19], %26 {strides = array<i32>} : memref<16x256xf32, #tpu.memory_space<vmem>>, vector<16x256xf32>,
    } else {
    }
    %c0_i32_14 = arith.constant 0 : i32
    %22 = arith.cmpi eq, %arg2, %c0_i32_14 : i32
    %23 = arith.extui %22 : i1 to i32
    %c0_i32_15 = arith.constant 0 : i32
    %24 = arith.cmpi ne, %23, %c0_i32_15 : i32
    scf.if %24 {
      %c0_16 = arith.constant 0 : index
      %c0_17 = arith.constant 0 : index
      %25 = vector.load %arg11[%c0_16, %c0_17] : memref<16x256xf32, #tpu.memory_space<vmem>>, vector<16x256xf32>
      %c0_18 = arith.constant 0 : index
      %c0_19 = arith.constant 0 : index
      %26 = vector.load %arg9[%c0_18, %c0_19] : memref<1x256xf32, #tpu.memory_space<vmem>>, vector<1x256xf32>
      %27 = vector.broadcast %26 : vector<1x256xf32> to vector<16x256xf32>
      %28 = arith.addf %25, %27 : vector<16x256xf32>
      %cst_20 = arith.constant 0.000000e+00 : f32
      %29 = vector.broadcast %cst_20 : f32 to vector<16x256xf32>
      %30 = arith.maximumf %28, %29 : vector<16x256xf32>
      %31 = arith.truncf %30 : vector<16x256xf32> to vector<16x256xbf16>
      %c0_21 = arith.constant 0 : index
      %c0_22 = arith.constant 0 : index
      %32 = vector.load %arg10[%c0_21, %c0_22] : memref<16x256xbf16, #tpu.memory_space<vmem>>, vector<16x256xbf16>
      tpu.vector_store %arg10[%c0_21, %c0_22], %31 {strides = array<i32>} : memref<16x256xbf16, #tpu.memory_space<vmem>>, vector<16x256xbf16>,
    } else {
    }
    return
  }
  func.func @transform_0(%arg0: i32, %arg1: i32, %arg2: i32) -> (i32, i32) {
    %c0_i32 = arith.constant 0 : i32
    return %arg0, %arg2 : i32, i32
  }
  func.func @transform_1(%arg0: i32, %arg1: i32, %arg2: i32) -> (i32, i32) {
    %c0_i32 = arith.constant 0 : i32
    %c0_i32_0 = arith.constant 0 : i32
    return %arg0, %c0_i32 : i32, i32
  }
  func.func @transform_2(%arg0: i32, %arg1: i32, %arg2: i32) -> (i32, i32) {
    %c0_i32 = arith.constant 0 : i32
    %c0_i32_0 = arith.constant 0 : i32
    return %arg0, %c0_i32 : i32, i32
  }
  func.func @transform_3(%arg0: i32, %arg1: i32, %arg2: i32) -> (i32, i32) {
    %c0_i32 = arith.constant 0 : i32
    %c0_i32_0 = arith.constant 0 : i32
    return %c0_i32, %arg2 : i32, i32
  }
  func.func @transform_4(%arg0: i32, %arg1: i32, %arg2: i32) -> (i32, i32) {
    %c0_i32 = arith.constant 0 : i32
    %c0_i32_0 = arith.constant 0 : i32
    return %c0_i32, %arg2 : i32, i32
  }
  func.func @transform_5(%arg0: i32, %arg1: i32, %arg2: i32) -> (i32, i32) {
    %c0_i32 = arith.constant 0 : i32
    return %arg2, %arg1 : i32, i32
  }
  func.func @transform_6(%arg0: i32, %arg1: i32, %arg2: i32) -> (i32, i32) {
    %c0_i32 = arith.constant 0 : i32
    %c0_i32_0 = arith.constant 0 : i32
    return %c0_i32, %arg1 : i32, i32
  }
  func.func @transform_7(%arg0: i32, %arg1: i32, %arg2: i32) -> (i32, i32) {
    %c0_i32 = arith.constant 0 : i32
    return %arg0, %arg1 : i32, i32
  }
}

module attributes {stable_mosaic.version = 11 : i64} {
  func.func @_linear_kernel(%arg0: i32, %arg1: i32, %arg2: i32, %arg3: memref<16x256xbf16, #tpu.memory_space<vmem>>, %arg4: memref<256x64xbf16, #tpu.memory_space<vmem>>, %arg5: memref<1x64xf32, #tpu.memory_space<vmem>>, %arg6: memref<16x64xf32, #tpu.memory_space<vmem>>, %arg7: memref<16x64xf32, #tpu.memory_space<vmem>>) attributes {dimension_semantics = [#tpu.dimension_semantics<parallel>, #tpu.dimension_semantics<parallel>, #tpu.dimension_semantics<arbitrary>], iteration_bounds = array<i64: 1, 1, 1>, scalar_prefetch = 0 : i64, scratch_operands = 0 : i64, tpu.core_type = #tpu.core_type<tc>, window_params = [{transform_indices = @transform_0, window_bounds = array<i64: 16, 256>}, {transform_indices = @transform_1, window_bounds = array<i64: 256, 64>}, {transform_indices = @transform_2, window_bounds = array<i64: 1, 64>}, {transform_indices = @transform_3, window_bounds = array<i64: 16, 64>}, {transform_indices = @transform_4, window_bounds = array<i64: 16, 64>}]} {
    %c0 = arith.constant 0 : index
    %c0_0 = arith.constant 0 : index
    %0 = vector.load %arg3[%c0, %c0_0] : memref<16x256xbf16, #tpu.memory_space<vmem>>, vector<16x256xbf16>
    %c0_1 = arith.constant 0 : index
    %c0_2 = arith.constant 0 : index
    %1 = vector.load %arg4[%c0_1, %c0_2] : memref<256x64xbf16, #tpu.memory_space<vmem>>, vector<256x64xbf16>
    %cst = arith.constant dense<0.000000e+00> : vector<16x64xf32>
    %2 = tpu.matmul %0, %1, %cst {dimension_numbers = #tpu.dot_dimension_numbers<[1], [0], [0], [1], [0, 0, 1, 1], [], []>} : vector<16x256xbf16>, vector<256x64xbf16>, vector<16x64xf32> -> vector<16x64xf32>
    %c0_i32 = arith.constant 0 : i32
    %3 = arith.cmpi eq, %arg2, %c0_i32 : i32
    %4 = arith.extui %3 : i1 to i32
    %c0_i32_3 = arith.constant 0 : i32
    %5 = arith.cmpi ne, %4, %c0_i32_3 : i32
    scf.if %5 {
      %c0_8 = arith.constant 0 : index
      %c0_9 = arith.constant 0 : index
      %12 = vector.load %arg7[%c0_8, %c0_9] : memref<16x64xf32, #tpu.memory_space<vmem>>, vector<16x64xf32>
      tpu.vector_store %arg7[%c0_8, %c0_9], %2 {strides = array<i32>} : memref<16x64xf32, #tpu.memory_space<vmem>>, vector<16x64xf32>,
    } else {
    }
    %c0_i32_4 = arith.constant 0 : i32
    %6 = arith.cmpi sgt, %arg2, %c0_i32_4 : i32
    %7 = arith.extui %6 : i1 to i32
    %c0_i32_5 = arith.constant 0 : i32
    %8 = arith.cmpi ne, %7, %c0_i32_5 : i32
    scf.if %8 {
      %c0_8 = arith.constant 0 : index
      %c0_9 = arith.constant 0 : index
      %12 = vector.load %arg7[%c0_8, %c0_9] : memref<16x64xf32, #tpu.memory_space<vmem>>, vector<16x64xf32>
      %13 = arith.addf %12, %2 : vector<16x64xf32>
      %c0_10 = arith.constant 0 : index
      %c0_11 = arith.constant 0 : index
      %14 = vector.load %arg7[%c0_10, %c0_11] : memref<16x64xf32, #tpu.memory_space<vmem>>, vector<16x64xf32>
      tpu.vector_store %arg7[%c0_10, %c0_11], %13 {strides = array<i32>} : memref<16x64xf32, #tpu.memory_space<vmem>>, vector<16x64xf32>,
    } else {
    }
    %c0_i32_6 = arith.constant 0 : i32
    %9 = arith.cmpi eq, %arg2, %c0_i32_6 : i32
    %10 = arith.extui %9 : i1 to i32
    %c0_i32_7 = arith.constant 0 : i32
    %11 = arith.cmpi ne, %10, %c0_i32_7 : i32
    scf.if %11 {
      %c0_8 = arith.constant 0 : index
      %c0_9 = arith.constant 0 : index
      %12 = vector.load %arg7[%c0_8, %c0_9] : memref<16x64xf32, #tpu.memory_space<vmem>>, vector<16x64xf32>
      %c0_10 = arith.constant 0 : index
      %c0_11 = arith.constant 0 : index
      %13 = vector.load %arg5[%c0_10, %c0_11] : memref<1x64xf32, #tpu.memory_space<vmem>>, vector<1x64xf32>
      %14 = vector.broadcast %13 : vector<1x64xf32> to vector<16x64xf32>
      %15 = arith.addf %12, %14 : vector<16x64xf32>
      %c0_12 = arith.constant 0 : index
      %c0_13 = arith.constant 0 : index
      %16 = vector.load %arg6[%c0_12, %c0_13] : memref<16x64xf32, #tpu.memory_space<vmem>>, vector<16x64xf32>
      %17 = arith.addf %15, %16 : vector<16x64xf32>
      %c0_14 = arith.constant 0 : index
      %c0_15 = arith.constant 0 : index
      %18 = vector.load %arg7[%c0_14, %c0_15] : memref<16x64xf32, #tpu.memory_space<vmem>>, vector<16x64xf32>
      tpu.vector_store %arg7[%c0_14, %c0_15], %17 {strides = array<i32>} : memref<16x64xf32, #tpu.memory_space<vmem>>, vector<16x64xf32>,
    } else {
    }
    return
  }
  func.func @transform_0(%arg0: i32, %arg1: i32, %arg2: i32) -> (i32, i32) {
    %c0_i32 = arith.constant 0 : i32
    return %arg0, %arg2 : i32, i32
  }
  func.func @transform_1(%arg0: i32, %arg1: i32, %arg2: i32) -> (i32, i32) {
    %c0_i32 = arith.constant 0 : i32
    return %arg2, %arg1 : i32, i32
  }
  func.func @transform_2(%arg0: i32, %arg1: i32, %arg2: i32) -> (i32, i32) {
    %c0_i32 = arith.constant 0 : i32
    %c0_i32_0 = arith.constant 0 : i32
    return %c0_i32, %arg1 : i32, i32
  }
  func.func @transform_3(%arg0: i32, %arg1: i32, %arg2: i32) -> (i32, i32) {
    %c0_i32 = arith.constant 0 : i32
    return %arg0, %arg1 : i32, i32
  }
  func.func @transform_4(%arg0: i32, %arg1: i32, %arg2: i32) -> (i32, i32) {
    %c0_i32 = arith.constant 0 : i32
    return %arg0, %arg1 : i32, i32
  }
}

module attributes {stable_mosaic.version = 11 : i64} {
  func.func @_layernorm_kernel(%arg0: i32, %arg1: memref<16x64xf32, #tpu.memory_space<vmem>>, %arg2: memref<1x64xf32, #tpu.memory_space<vmem>>, %arg3: memref<1x64xf32, #tpu.memory_space<vmem>>, %arg4: memref<16x64xf32, #tpu.memory_space<vmem>>) attributes {dimension_semantics = [#tpu.dimension_semantics<parallel>], iteration_bounds = array<i64: 1>, scalar_prefetch = 0 : i64, scratch_operands = 0 : i64, tpu.core_type = #tpu.core_type<tc>, window_params = [{transform_indices = @transform_0, window_bounds = array<i64: 16, 64>}, {pipeline_mode = #tpu.pipeline_mode<synchronous>, transform_indices = @transform_1, window_bounds = array<i64: 1, 64>}, {pipeline_mode = #tpu.pipeline_mode<synchronous>, transform_indices = @transform_2, window_bounds = array<i64: 1, 64>}, {transform_indices = @transform_3, window_bounds = array<i64: 16, 64>}]} {
    %c0 = arith.constant 0 : index
    %c0_0 = arith.constant 0 : index
    %0 = vector.load %arg1[%c0, %c0_0] : memref<16x64xf32, #tpu.memory_space<vmem>>, vector<16x64xf32>
    %cst = arith.constant dense<0.000000e+00> : vector<16xf32>
    %1 = vector.multi_reduction <add>, %0, %cst [1] : vector<16x64xf32> to vector<16xf32>
    %2 = vector.shape_cast %1 : vector<16xf32> to vector<16x1xf32>
    %cst_1 = arith.constant 6.400000e+01 : f32
    %3 = vector.broadcast %cst_1 : f32 to vector<16x1xf32>
    %4 = arith.divf %2, %3 : vector<16x1xf32>
    %5 = vector.broadcast %4 : vector<16x1xf32> to vector<16x64xf32>
    %6 = arith.subf %0, %5 : vector<16x64xf32>
    %7 = arith.mulf %6, %6 : vector<16x64xf32>
    %cst_2 = arith.constant dense<0.000000e+00> : vector<16xf32>
    %8 = vector.multi_reduction <add>, %7, %cst_2 [1] : vector<16x64xf32> to vector<16xf32>
    %9 = vector.shape_cast %8 : vector<16xf32> to vector<16x1xf32>
    %cst_3 = arith.constant 6.400000e+01 : f32
    %10 = vector.broadcast %cst_3 : f32 to vector<16x1xf32>
    %11 = arith.divf %9, %10 : vector<16x1xf32>
    %12 = vector.broadcast %4 : vector<16x1xf32> to vector<16x64xf32>
    %13 = arith.subf %0, %12 : vector<16x64xf32>
    %cst_4 = arith.constant 9.99999974E-6 : f32
    %14 = vector.broadcast %cst_4 : f32 to vector<16x1xf32>
    %15 = arith.addf %11, %14 : vector<16x1xf32>
    %16 = math.rsqrt %15 : vector<16x1xf32>
    %17 = vector.broadcast %16 : vector<16x1xf32> to vector<16x64xf32>
    %18 = arith.mulf %13, %17 : vector<16x64xf32>
    %c0_5 = arith.constant 0 : index
    %c0_6 = arith.constant 0 : index
    %19 = vector.load %arg2[%c0_5, %c0_6] : memref<1x64xf32, #tpu.memory_space<vmem>>, vector<1x64xf32>
    %20 = vector.broadcast %19 : vector<1x64xf32> to vector<16x64xf32>
    %21 = arith.mulf %18, %20 : vector<16x64xf32>
    %c0_7 = arith.constant 0 : index
    %c0_8 = arith.constant 0 : index
    %22 = vector.load %arg3[%c0_7, %c0_8] : memref<1x64xf32, #tpu.memory_space<vmem>>, vector<1x64xf32>
    %23 = vector.broadcast %22 : vector<1x64xf32> to vector<16x64xf32>
    %24 = arith.addf %21, %23 : vector<16x64xf32>
    %c0_9 = arith.constant 0 : index
    %c0_10 = arith.constant 0 : index
    %25 = vector.load %arg4[%c0_9, %c0_10] : memref<16x64xf32, #tpu.memory_space<vmem>>, vector<16x64xf32>
    tpu.vector_store %arg4[%c0_9, %c0_10], %24 {strides = array<i32>} : memref<16x64xf32, #tpu.memory_space<vmem>>, vector<16x64xf32>,
    return
  }
  func.func @transform_0(%arg0: i32) -> (i32, i32) {
    %c0_i32 = arith.constant 0 : i32
    %c0_i32_0 = arith.constant 0 : i32
    return %arg0, %c0_i32 : i32, i32
  }
  func.func @transform_1(%arg0: i32) -> (i32, i32) {
    %c0_i32 = arith.constant 0 : i32
    %c0_i32_0 = arith.constant 0 : i32
    %c0_i32_1 = arith.constant 0 : i32
    return %c0_i32, %c0_i32_0 : i32, i32
  }
  func.func @transform_2(%arg0: i32) -> (i32, i32) {
    %c0_i32 = arith.constant 0 : i32
    %c0_i32_0 = arith.constant 0 : i32
    %c0_i32_1 = arith.constant 0 : i32
    return %c0_i32, %c0_i32_0 : i32, i32
  }
  func.func @transform_3(%arg0: i32) -> (i32, i32) {
    %c0_i32 = arith.constant 0 : i32
    %c0_i32_0 = arith.constant 0 : i32
    return %arg0, %c0_i32 : i32, i32
  }
}

</mosaic_0001>

<llo_original>
// kernel: decoder_forward.19
$region0: #{decoder_forward.19}
  #allocation0 [shape = 'u32[]', space=smem, size = 0x4, offset = 0x4, fixed_abs, tag = 'smem constant byte address 0x4 - core index']
  #allocation1 [shape = 'u32[144,128]{1,0:T(1,128)}', space=vmem, size = 0x12000, scoped, tag = 'internal scratch']
  %s0 = inlined_call_operand.vmem [shape: f32[16,64], index: 0, kind: input, shape index: {}]
  %s1 = inlined_call_operand.vmem [shape: f32[16,1], index: 1, kind: output, shape index: {0}]
  %s2 = inlined_call_operand.vmem [shape: f32[16,1], index: 2, kind: output, shape index: {1}]
  %3 = xla_tuple %s1, %s2
  %s4 = sld [smem:[#allocation0]]
  $region22: #{decoder_forward.19} parent=0
    _
  %s6 = ssub.s32 1, %s4
  %s7 = scalar_select 0, %s6, %s4
  // Predicated region
  $region2: #{decoder_forward.19} parent=0 // pred_check
    _
  $region3: #{decoder_forward.19} parent=0 // pred_check_branch
    %9 = sbr.rel (0) target = $region5
  $region4: #{decoder_forward.19} parent=0 // pred_region
    _
  $region5: #{decoder_forward.19} parent=0 // pred_fallthru
    _
  %v10 = vld [vmem:[%s0] sm:$0xff]
  %v11 = vld [vmem:[%s0 + $0x8] sm:$0xff]
  %vm12 = vcmask 523264
  %v13 = vsel %vm12, %v10, 0.0
  %14 = vadd.xlane.f32.xlu0 %v13
  %v15 = vpop.xlane.xlu0 %14
  %v16 = vsel %vm12, %v11, 0.0
  %17 = vadd.xlane.f32.xlu0 %v16
  %v18 = vpop.xlane.xlu0 %17
  %v19 = vrcp.pop 64.0
  %v20 = vmul.f32 %v15, %v19
  %v21 = vmul.f32 %v18, %v19
  %v22 = vsub.f32 %v10, %v20
  %v23 = vsub.f32 %v11, %v21
  %v24 = vmul.f32 %v22, %v22
  %v25 = vmul.f32 %v23, %v23
  %v26 = vsel %vm12, %v24, 0.0
  %27 = vadd.xlane.f32.xlu0 %v26
  %v28 = vpop.xlane.xlu0 %27
  %v29 = vsel %vm12, %v25, 0.0
  %30 = vadd.xlane.f32.xlu0 %v29
  %v31 = vpop.xlane.xlu0 %30
  %v32 = vmul.f32 %v28, %v19
  %v33 = vmul.f32 %v31, %v19
  %vm34 = vcmask 7168
  %35 = vst.msk [vmem:[%s1] sm:$0xff] %vm34, %v20
  %36 = vst.msk [vmem:[%s1 + $0x8] sm:$0xff] %vm34, %v21
  %v37 = vadd.f32 %v32, 1e-05
  %v38 = vadd.f32 %v33, 1e-05
  %v39 = vrsqrt.pop %v37
  %v40 = vrsqrt.pop %v38
  %41 = vst.msk [vmem:[%s2] sm:$0xff] %vm34, %v39
  %42 = vst.msk [vmem:[%s2 + $0x8] sm:$0xff] %vm34, %v40
  // Predicated region
  $region6: #{decoder_forward.19} parent=0 // pred_check
    _
  $region7: #{decoder_forward.19} parent=0 // pred_check_branch
    %44 = sbr.rel (0) target = $region9
  $region8: #{decoder_forward.19} parent=0 // pred_region
    _
  $region9: #{decoder_forward.19} parent=0 // pred_fallthru
    _
  // Predicated region
  $region10: #{decoder_forward.19} parent=0 // pred_check
    _
  $region11: #{decoder_forward.19} parent=0 // pred_check_branch
    %46 = sbr.rel (0) target = $region13
  $region12: #{decoder_forward.19} parent=0 // pred_region
    _
  $region13: #{decoder_forward.19} parent=0 // pred_fallthru
    _
  // Predicated region
  $region14: #{decoder_forward.19} parent=0 // pred_check
    _
  $region15: #{decoder_forward.19} parent=0 // pred_check_branch
    %48 = sbr.rel (0) target = $region17
  $region16: #{decoder_forward.19} parent=0 // pred_region
    _
  $region17: #{decoder_forward.19} parent=0 // pred_fallthru
    _
  // Predicated region
  $region18: #{decoder_forward.19} parent=0 // pred_check
    _
  $region19: #{decoder_forward.19} parent=0 // pred_check_branch
    %50 = sbr.rel (0) target = $region21
  $region20: #{decoder_forward.19} parent=0 // pred_region
    _
  $region21: #{decoder_forward.19} parent=0 // pred_fallthru
    _

// kernel: decoder_forward.20
$region0: #{decoder_forward.20}
  #allocation0 [shape = 'u32[]', space=smem, size = 0x4, offset = 0x4, fixed_abs, tag = 'smem constant byte address 0x4 - core index']
  #allocation1 [shape = 'u32[144,128]{1,0:T(1,128)}', space=vmem, size = 0x12000, scoped, tag = 'internal scratch']
  #allocation2 [shape = 'f32[16,192]{1,0:T(8,128)}', space=vmem, size = 0x4000, scoped, tag = 'scratch operand']
  %s0 = inlined_call_operand.vmem [shape: f32[16,64], index: 0, kind: input, shape index: {}]
  %s1 = inlined_call_operand.vmem [shape: f32[16,1], index: 1, kind: input, shape index: {}]
  %s2 = inlined_call_operand.vmem [shape: f32[16,1], index: 2, kind: input, shape index: {}]
  %s3 = inlined_call_operand.vmem [shape: f32[1,64], index: 3, kind: input, shape index: {}]
  %s4 = inlined_call_operand.vmem [shape: f32[1,64], index: 4, kind: input, shape index: {}]
  %s5 = inlined_call_operand.vmem [shape: bf16[64,192], index: 5, kind: input, shape index: {}]
  %s6 = inlined_call_operand.vmem [shape: f32[1,192], index: 6, kind: input, shape index: {}]
  %s7 = inlined_call_operand.vmem [shape: bf16[16,192], index: 7, kind: output, shape index: {}]
  %s8 = sld [smem:[#allocation0]]
  $region50: #{decoder_forward.20} parent=0
    _
  %s10 = ssub.s32 1, %s8
  %s11 = scalar_select 0, %s10, %s8
  // Predicated region
  $region2: #{decoder_forward.20} parent=0 // pred_check
    _
  $region3: #{decoder_forward.20} parent=0 // pred_check_branch
    %13 = sbr.rel (0) target = $region5
  $region4: #{decoder_forward.20} parent=0 // pred_region
    _
  $region5: #{decoder_forward.20} parent=0 // pred_fallthru
    _
  // Predicated region
  $region6: #{decoder_forward.20} parent=0 // pred_check
    _
  $region7: #{decoder_forward.20} parent=0 // pred_check_branch
    %15 = sbr.rel (0) target = $region9
  $region8: #{decoder_forward.20} parent=0 // pred_region
    _
  $region9: #{decoder_forward.20} parent=0 // pred_fallthru
    _
  // Predicated region
  $region10: #{decoder_forward.20} parent=0 // pred_check
    _
  $region11: #{decoder_forward.20} parent=0 // pred_check_branch
    %17 = sbr.rel (0) target = $region13
  $region12: #{decoder_forward.20} parent=0 // pred_region
    _
  $region13: #{decoder_forward.20} parent=0 // pred_fallthru
    _
  // Predicated region
  $region14: #{decoder_forward.20} parent=0 // pred_check
    _
  $region15: #{decoder_forward.20} parent=0 // pred_check_branch
    %19 = sbr.rel (0) target = $region17
  $region16: #{decoder_forward.20} parent=0 // pred_region
    _
  $region17: #{decoder_forward.20} parent=0 // pred_fallthru
    _
  // Predicated region
  $region18: #{decoder_forward.20} parent=0 // pred_check
    _
  $region19: #{decoder_forward.20} parent=0 // pred_check_branch
    %21 = sbr.rel (0) target = $region21
  $region20: #{decoder_forward.20} parent=0 // pred_region
    _
  $region21: #{decoder_forward.20} parent=0 // pred_fallthru
    _
  // Predicated region
  $region22: #{decoder_forward.20} parent=0 // pred_check
    _
  $region23: #{decoder_forward.20} parent=0 // pred_check_branch
    %23 = sbr.rel (0) target = $region25
  $region24: #{decoder_forward.20} parent=0 // pred_region
    _
  $region25: #{decoder_forward.20} parent=0 // pred_fallthru
    _
  // Predicated region
  $region26: #{decoder_forward.20} parent=0 // pred_check
    _
  $region27: #{decoder_forward.20} parent=0 // pred_check_branch
    %25 = sbr.rel (0) target = $region29
  $region28: #{decoder_forward.20} parent=0 // pred_region
    _
  $region29: #{decoder_forward.20} parent=0 // pred_fallthru
    _
  %v27 = vld [vmem:[%s0] sm:$0xff]
  %v28 = vld [vmem:[%s0 + $0x8] sm:$0xff]
  %v29 = vld [vmem:[%s1] sm:$0xff]
  %v30 = vld [vmem:[%s1 + $0x8] sm:$0xff]
  %32 = vset.pattern.permute.xlu0 0
  %33 = vperm.xlu0 %32, %v29
  %v34 = vpop.permute.xlu0 %33
  %37 = vset.pattern.permute.xlu0 0
  %38 = vperm.xlu0 %37, %v30
  %v39 = vpop.permute.xlu0 %38
  %v41 = vsub.f32 %v27, %v34
  %v42 = vsub.f32 %v28, %v39
  %v43 = vld [vmem:[%s2] sm:$0xff]
  %v44 = vld [vmem:[%s2 + $0x8] sm:$0xff]
  %46 = vset.pattern.permute.xlu0 0
  %47 = vperm.xlu0 %46, %v43
  %v48 = vpop.permute.xlu0 %47
  %51 = vset.pattern.permute.xlu0 0
  %52 = vperm.xlu0 %51, %v44
  %v53 = vpop.permute.xlu0 %52
  %v55 = vmul.f32 %v41, %v48
  %v56 = vmul.f32 %v42, %v53
  %v57 = vld [vmem:[%s3] sm:$0x1]
  %v59 = vlaneseq
  %v60 = vshrl.u32 %v59, 7
  %v61 = vsub.s32 0, %v60
  %v62 = vrot.slane %v57, %v61
  %v64 = vmul.f32 %v55, %v62
  %v65 = vmul.f32 %v56, %v62
  %v66 = vld [vmem:[%s4] sm:$0x1]
  %v68 = vlaneseq
  %v69 = vshrl.u32 %v68, 7
  %v70 = vsub.s32 0, %v69
  %v71 = vrot.slane %v66, %v70
  %v73 = vadd.f32 %v64, %v71
  %v74 = vadd.f32 %v65, %v71
  %v75 = vpack.c.bf16 %v74, %v73
  %v76 = vld [vmem:[%s5] sm:$0xff]
  %v77 = vld [vmem:[%s5 + $0x8] sm:$0xff]
  %v78 = vld [vmem:[%s5 + $0x10] sm:$0xff]
  %v79 = vld [vmem:[%s5 + $0x18] sm:$0xff]
  %v80 = vld [vmem:[%s5 + $0x20] sm:$0xff]
  %v81 = vld [vmem:[%s5 + $0x28] sm:$0xff]
  %v82 = vld [vmem:[%s5 + $0x30] sm:$0xff]
  %v83 = vld [vmem:[%s5 + $0x38] sm:$0xff]
  %v92 = vunpack.c.l.b16 %v76
  %v93 = vunpack.c.h.b16 %v76
  %v94 = vunpack.c.l.b16 %v77
  %v95 = vunpack.c.h.b16 %v77
  %v96 = vunpack.c.l.b16 %v78
  %v97 = vunpack.c.h.b16 %v78
  %v98 = vunpack.c.l.b16 %v79
  %v99 = vunpack.c.h.b16 %v79
  %v100 = vunpack.c.l.b16 %v80
  %v101 = vunpack.c.h.b16 %v80
  %v102 = vunpack.c.l.b16 %v81
  %v103 = vunpack.c.h.b16 %v81
  %v104 = vunpack.c.l.b16 %v82
  %v105 = vunpack.c.h.b16 %v82
  %v106 = vunpack.c.l.b16 %v83
  %v107 = vunpack.c.h.b16 %v83
  %v108 = vpack.c.b16 %v94, %v92
  %v109 = vpack.c.b16 %v95, %v93
  %v110 = vpack.c.b16 %v98, %v96
  %v111 = vpack.c.b16 %v99, %v97
  %v112 = vpack.c.b16 %v102, %v100
  %v113 = vpack.c.b16 %v103, %v101
  %v114 = vpack.c.b16 %v106, %v104
  %v115 = vpack.c.b16 %v107, %v105
  %vm124 = vcmask 523264
  %v126 = vsel %vm124, %v75, 0
  %128 = vmatprep.subr.bf16.mxu0 %v109
  %129 = vmatpush1.bf16.msra.mxu0 %v108
  %130 = vmatprep.subr.bf16.mxu0 %v111
  %131 = vmatpush1.bf16.msra.mxu0 %v110
  %132 = vmatprep.subr.bf16.mxu0 %v113
  %133 = vmatpush1.bf16.msra.mxu0 %v112
  %134 = vmatprep.subr.bf16.mxu0 %v115
  %135 = vmatpush1.bf16.msra.mxu0 %v114
  %136 = vmatprep.subr.bf16.mxu0 0
  %137 = vmatpush1.bf16.msra.mxu0 0
  %138 = vmatprep.subr.bf16.mxu0 0
  %139 = vmatpush1.bf16.msra.mxu0 0
  %140 = vmatprep.subr.bf16.mxu0 0
  %141 = vmatpush1.bf16.msra.mxu0 0
  %142 = vmatprep.subr.bf16.mxu0 0
  %143 = vmatpush1.bf16.msra.mxu0 0
  %144 = vmatprep.subr.bf16.mxu0 0
  %145 = vmatpush1.bf16.msra.mxu0 0
  %146 = vmatprep.subr.bf16.mxu0 0
  %147 = vmatpush1.bf16.msra.mxu0 0
  %148 = vmatprep.subr.bf16.mxu0 0
  %149 = vmatpush1.bf16.msra.mxu0 0
  %150 = vmatprep.subr.bf16.mxu0 0
  %151 = vmatpush1.bf16.msra.mxu0 0
  %152 = vmatprep.subr.bf16.mxu0 0
  %153 = vmatpush1.bf16.msra.mxu0 0
  %154 = vmatprep.subr.bf16.mxu0 0
  %155 = vmatpush1.bf16.msra.mxu0 0
  %156 = vmatprep.subr.bf16.mxu0 0
  %157 = vmatpush1.bf16.msra.mxu0 0
  %158 = vmatprep.subr.bf16.mxu0 0
  %159 = vmatpush1.bf16.msra.mxu0 0
  %160 = vmatprep.mubr.bf16.mxu0 0
  %161 = vmatmul.mubr.bf16.gmra.mrb[0].mxu0 %v126
  %v162 = vpop.f32.mrb[0].mxu0
  %v163 = vadd.f32 0.0, %v162
  %v164 = vpop.f32.mrb[0].mxu0
  %v165 = vadd.f32 0.0, %v164
  %v166 = vpop.f32.mrb[0].mxu0
  %v167 = vadd.f32 0.0, %v166
  %v168 = vpop.f32.mrb[0].mxu0
  %v169 = vadd.f32 0.0, %v168
  %170 = vdwg.mxu0
  %p171 = scmp.eq.s32.totalorder 0, 0
  // Predicated region
  $region30: #{decoder_forward.20} parent=0 // pred_check
    %p172 = pneg %p171
  $region31: #{decoder_forward.20} parent=0 // pred_check_branch
    %174 = sbr.rel (%p172) target = $region33
  $region32: #{decoder_forward.20} parent=0 // pred_region
    %175 = vst [vmem:[#allocation2] sm:$0xff] %v163
    %176 = vst.msk [vmem:[#allocation2 + $0x8] sm:$0xff] %vm124, %v165
    %177 = vst [vmem:[#allocation2 + $0x10] sm:$0xff] %v167
    %178 = vst.msk [vmem:[#allocation2 + $0x18] sm:$0xff] %vm124, %v169
  $region33: #{decoder_forward.20} parent=0 // pred_fallthru
    _
  %p179 = scmp.gt.s32.totalorder 0, 0
  // Predicated region
  $region34: #{decoder_forward.20} parent=0 // pred_check
    %p180 = pneg %p179
  $region35: #{decoder_forward.20} parent=0 // pred_check_branch
    %182 = sbr.rel (%p180) target = $region37
  $region36: #{decoder_forward.20} parent=0 // pred_region
    %v183 = vld [vmem:[#allocation2] sm:$0xff]
    %v184 = vld [vmem:[#allocation2 + $0x8] sm:$0xff]
    %v185 = vld [vmem:[#allocation2 + $0x10] sm:$0xff]
    %v186 = vld [vmem:[#allocation2 + $0x18] sm:$0xff]
    %v187 = vadd.f32 %v183, %v163
    %v188 = vadd.f32 %v184, %v165
    %v189 = vadd.f32 %v185, %v167
    %v190 = vadd.f32 %v186, %v169
    %191 = vst [vmem:[#allocation2] sm:$0xff] %v187
    %192 = vst.msk [vmem:[#allocation2 + $0x8] sm:$0xff] %vm124, %v188
    %193 = vst [vmem:[#allocation2 + $0x10] sm:$0xff] %v189
    %194 = vst.msk [vmem:[#allocation2 + $0x18] sm:$0xff] %vm124, %v190
  $region37: #{decoder_forward.20} parent=0 // pred_fallthru
    _
  // Predicated region
  $region38: #{decoder_forward.20} parent=0 // pred_check
    %p195 = pneg %p171
  $region39: #{decoder_forward.20} parent=0 // pred_check_branch
    %197 = sbr.rel (%p195) target = $region41
  $region40: #{decoder_forward.20} parent=0 // pred_region
    %v198 = vld [vmem:[#allocation2] sm:$0xff]
    %v199 = vld [vmem:[#allocation2 + $0x8] sm:$0xff]
    %v200 = vld [vmem:[#allocation2 + $0x10] sm:$0xff]
    %v201 = vld [vmem:[#allocation2 + $0x18] sm:$0xff]
    %v202 = vld [vmem:[%s6] sm:$0x3]
    %v204 = vlaneseq
    %v205 = vshrl.u32 %v204, 7
    %v206 = vsub.s32 0, %v205
    %v207 = vrot.slane %v202, %v206
    %v208 = vlaneseq
    %v209 = vshrl.u32 %v208, 7
    %v210 = vsub.s32 1, %v209
    %v211 = vrot.slane %v202, %v210
    %v214 = vadd.f32 %v198, %v207
    %v215 = vadd.f32 %v199, %v211
    %v216 = vadd.f32 %v200, %v207
    %v217 = vadd.f32 %v201, %v211
    %v218 = vpack.c.bf16 %v216, %v214
    %v219 = vpack.c.bf16 %v217, %v215
    %v222 = vunpack.c.l.b16 %v218
    %v223 = vunpack.c.l.b16 %v219
    %v224 = vunpack.c.h.b16 %v218
    %v225 = vunpack.c.h.b16 %v219
    %v226 = vpack.c.b16 %v223, %v222
    %v227 = vpack.c.b16 %v225, %v224
    %vm230 = vcmask 1043456
    %vm231 = vcmask 523268
    %vm232 = vmor %vm231, %vm230
    %233 = vst.msk [vmem:[%s7] sm:$0xff] %vm232, %v226
    %234 = vst.msk [vmem:[%s7 + $0x8] sm:$0xff] %vm232, %v227
  $region41: #{decoder_forward.20} parent=0 // pred_fallthru
    _
  // Predicated region
  $region42: #{decoder_forward.20} parent=0 // pred_check
    _
  $region43: #{decoder_forward.20} parent=0 // pred_check_branch
    %236 = sbr.rel (0) target = $region45
  $region44: #{decoder_forward.20} parent=0 // pred_region
    _
  $region45: #{decoder_forward.20} parent=0 // pred_fallthru
    _
  // Predicated region
  $region46: #{decoder_forward.20} parent=0 // pred_check
    _
  $region47: #{decoder_forward.20} parent=0 // pred_check_branch
    %238 = sbr.rel (0) target = $region49
  $region48: #{decoder_forward.20} parent=0 // pred_region
    _
  $region49: #{decoder_forward.20} parent=0 // pred_fallthru
    _

// kernel: decoder_forward.22
$region0: #{decoder_forward.22}
  #allocation0 [shape = 'u32[]', space=smem, size = 0x4, offset = 0x4, fixed_abs, tag = 'smem constant byte address 0x4 - core index']
  #allocation1 [shape = 'u32[144,128]{1,0:T(1,128)}', space=vmem, size = 0x12000, scoped, tag = 'internal scratch']
  #allocation2 [shape = 'f32[16,64]{1,0:T(8,128)}', space=vmem, size = 0x2000, scoped, tag = 'scratch operand']
  %s0 = inlined_call_operand.vmem [shape: f32[16,64], index: 0, kind: input, shape index: {}]
  %s1 = inlined_call_operand.vmem [shape: bf16[64,64], index: 1, kind: input, shape index: {}]
  %s2 = inlined_call_operand.vmem [shape: f32[1,64], index: 2, kind: input, shape index: {}]
  %s3 = inlined_call_operand.vmem [shape: bf16[16,64], index: 3, kind: output, shape index: {}]
  %s4 = sld [smem:[#allocation0]]
  $region34: #{decoder_forward.22} parent=0
    _
  %s6 = ssub.s32 1, %s4
  %s7 = scalar_select 0, %s6, %s4
  // Predicated region
  $region2: #{decoder_forward.22} parent=0 // pred_check
    _
  $region3: #{decoder_forward.22} parent=0 // pred_check_branch
    %9 = sbr.rel (0) target = $region5
  $region4: #{decoder_forward.22} parent=0 // pred_region
    _
  $region5: #{decoder_forward.22} parent=0 // pred_fallthru
    _
  // Predicated region
  $region6: #{decoder_forward.22} parent=0 // pred_check
    _
  $region7: #{decoder_forward.22} parent=0 // pred_check_branch
    %11 = sbr.rel (0) target = $region9
  $region8: #{decoder_forward.22} parent=0 // pred_region
    _
  $region9: #{decoder_forward.22} parent=0 // pred_fallthru
    _
  // Predicated region
  $region10: #{decoder_forward.22} parent=0 // pred_check
    _
  $region11: #{decoder_forward.22} parent=0 // pred_check_branch
    %13 = sbr.rel (0) target = $region13
  $region12: #{decoder_forward.22} parent=0 // pred_region
    _
  $region13: #{decoder_forward.22} parent=0 // pred_fallthru
    _
  %v15 = vld [vmem:[%s0] sm:$0xff]
  %v16 = vld [vmem:[%s0 + $0x8] sm:$0xff]
  %v17 = vpack.c.bf16 %v16, %v15
  %v18 = vld [vmem:[%s1] sm:$0xf]
  %v19 = vld [vmem:[%s1 + $0x4] sm:$0xf]
  %v20 = vld [vmem:[%s1 + $0x8] sm:$0xf]
  %v21 = vld [vmem:[%s1 + $0xc] sm:$0xf]
  %v22 = vld [vmem:[%s1 + $0x10] sm:$0xf]
  %v23 = vld [vmem:[%s1 + $0x14] sm:$0xf]
  %v24 = vld [vmem:[%s1 + $0x18] sm:$0xf]
  %v25 = vld [vmem:[%s1 + $0x1c] sm:$0xf]
  %v34 = vunpack.c.l.b16 %v18
  %v35 = vunpack.c.l.b16 %v19
  %v36 = vunpack.c.l.b16 %v20
  %v37 = vunpack.c.l.b16 %v21
  %v38 = vunpack.c.l.b16 %v22
  %v39 = vunpack.c.l.b16 %v23
  %v40 = vunpack.c.l.b16 %v24
  %v41 = vunpack.c.l.b16 %v25
  %v42 = vpack.c.b16 %v35, %v34
  %v43 = vpack.c.b16 %v37, %v36
  %v44 = vpack.c.b16 %v39, %v38
  %v45 = vpack.c.b16 %v41, %v40
  %vm50 = vcmask 523264
  %v52 = vsel %vm50, %v17, 0
  %54 = vmatprep.subr.bf16.mxu0 0
  %55 = vmatpush1.bf16.msra.mxu0 %v42
  %56 = vmatprep.subr.bf16.mxu0 0
  %57 = vmatpush1.bf16.msra.mxu0 %v43
  %58 = vmatprep.subr.bf16.mxu0 0
  %59 = vmatpush1.bf16.msra.mxu0 %v44
  %60 = vmatprep.subr.bf16.mxu0 0
  %61 = vmatpush1.bf16.msra.mxu0 %v45
  %62 = vmatprep.subr.bf16.mxu0 0
  %63 = vmatpush1.bf16.msra.mxu0 0
  %64 = vmatprep.subr.bf16.mxu0 0
  %65 = vmatpush1.bf16.msra.mxu0 0
  %66 = vmatprep.subr.bf16.mxu0 0
  %67 = vmatpush1.bf16.msra.mxu0 0
  %68 = vmatprep.subr.bf16.mxu0 0
  %69 = vmatpush1.bf16.msra.mxu0 0
  %70 = vmatprep.subr.bf16.mxu0 0
  %71 = vmatpush1.bf16.msra.mxu0 0
  %72 = vmatprep.subr.bf16.mxu0 0
  %73 = vmatpush1.bf16.msra.mxu0 0
  %74 = vmatprep.subr.bf16.mxu0 0
  %75 = vmatpush1.bf16.msra.mxu0 0
  %76 = vmatprep.subr.bf16.mxu0 0
  %77 = vmatpush1.bf16.msra.mxu0 0
  %78 = vmatprep.subr.bf16.mxu0 0
  %79 = vmatpush1.bf16.msra.mxu0 0
  %80 = vmatprep.subr.bf16.mxu0 0
  %81 = vmatpush1.bf16.msra.mxu0 0
  %82 = vmatprep.subr.bf16.mxu0 0
  %83 = vmatpush1.bf16.msra.mxu0 0
  %84 = vmatprep.subr.bf16.mxu0 0
  %85 = vmatpush1.bf16.msra.mxu0 0
  %86 = vmatprep.mubr.bf16.mxu0 0
  %87 = vmatmul.mubr.bf16.gmra.mrb[0].mxu0 %v52
  %v88 = vpop.f32.mrb[0].mxu0
  %v89 = vadd.f32 0.0, %v88
  %v90 = vpop.f32.mrb[0].mxu0
  %v91 = vpop.f32.mrb[0].mxu0
  %v92 = vadd.f32 0.0, %v91
  %v93 = vpop.f32.mrb[0].mxu0
  %94 = vdwg.mxu0
  %p95 = scmp.eq.s32.totalorder 0, 0
  // Predicated region
  $region14: #{decoder_forward.22} parent=0 // pred_check
    %p96 = pneg %p95
  $region15: #{decoder_forward.22} parent=0 // pred_check_branch
    %98 = sbr.rel (%p96) target = $region17
  $region16: #{decoder_forward.22} parent=0 // pred_region
    %99 = vst.msk [vmem:[#allocation2] sm:$0xff] %vm50, %v89
    %100 = vst.msk [vmem:[#allocation2 + $0x8] sm:$0xff] %vm50, %v92
  $region17: #{decoder_forward.22} parent=0 // pred_fallthru
    _
  %p101 = scmp.gt.s32.totalorder 0, 0
  // Predicated region
  $region18: #{decoder_forward.22} parent=0 // pred_check
    %p102 = pneg %p101
  $region19: #{decoder_forward.22} parent=0 // pred_check_branch
    %104 = sbr.rel (%p102) target = $region21
  $region20: #{decoder_forward.22} parent=0 // pred_region
    %v105 = vld [vmem:[#allocation2] sm:$0xff]
    %v106 = vld [vmem:[#allocation2 + $0x8] sm:$0xff]
    %v107 = vadd.f32 %v105, %v89
    %v108 = vadd.f32 %v106, %v92
    %109 = vst.msk [vmem:[#allocation2] sm:$0xff] %vm50, %v107
    %110 = vst.msk [vmem:[#allocation2 + $0x8] sm:$0xff] %vm50, %v108
  $region21: #{decoder_forward.22} parent=0 // pred_fallthru
    _
  // Predicated region
  $region22: #{decoder_forward.22} parent=0 // pred_check
    %p111 = pneg %p95
  $region23: #{decoder_forward.22} parent=0 // pred_check_branch
    %113 = sbr.rel (%p111) target = $region25
  $region24: #{decoder_forward.22} parent=0 // pred_region
    %v114 = vld [vmem:[#allocation2] sm:$0xff]
    %v115 = vld [vmem:[#allocation2 + $0x8] sm:$0xff]
    %v116 = vld [vmem:[%s2] sm:$0x1]
    %v118 = vlaneseq
    %v119 = vshrl.u32 %v118, 7
    %v120 = vsub.s32 0, %v119
    %v121 = vrot.slane %v116, %v120
    %v123 = vadd.f32 %v114, %v121
    %v124 = vadd.f32 %v115, %v121
    %v125 = vpack.c.bf16 %v124, %v123
    %v127 = vunpack.c.l.b16 %v125
    %v128 = vunpack.c.h.b16 %v125
    %v129 = vpack.c.b16 %v127, %v127
    %v130 = vpack.c.b16 %v128, %v128
    %vm133 = vcmask 519168
    %134 = vst.msk [vmem:[%s3] sm:$0xf] %vm133, %v129
    %135 = vst.msk [vmem:[%s3 + $0x4] sm:$0xf] %vm133, %v130
  $region25: #{decoder_forward.22} parent=0 // pred_fallthru
    _
  // Predicated region
  $region26: #{decoder_forward.22} parent=0 // pred_check
    _
  $region27: #{decoder_forward.22} parent=0 // pred_check_branch
    %137 = sbr.rel (0) target = $region29
  $region28: #{decoder_forward.22} parent=0 // pred_region
    _
  $region29: #{decoder_forward.22} parent=0 // pred_fallthru
    _
  // Predicated region
  $region30: #{decoder_forward.22} parent=0 // pred_check
    _
  $region31: #{decoder_forward.22} parent=0 // pred_check_branch
    %139 = sbr.rel (0) target = $region33
  $region32: #{decoder_forward.22} parent=0 // pred_region
    _
  $region33: #{decoder_forward.22} parent=0 // pred_fallthru
    _

// kernel: decoder_forward.21
$region0: #{decoder_forward.21}
  #allocation0 [shape = 'u32[]', space=smem, size = 0x4, offset = 0x4, fixed_abs, tag = 'smem constant byte address 0x4 - core index']
  #allocation1 [shape = 'u32[144,128]{1,0:T(1,128)}', space=vmem, size = 0x12000, scoped, tag = 'internal scratch']
  %s0 = inlined_call_operand.vmem [shape: bf16[2,8,8,8], index: 0, kind: input, shape index: {}]
  %s1 = inlined_call_operand.vmem [shape: bf16[2,8,8,8], index: 1, kind: input, shape index: {}]
  %s2 = inlined_call_operand.vmem [shape: bf16[2,8,8,8], index: 2, kind: input, shape index: {}]
  %s3 = inlined_call_operand.vmem [shape: bf16[64,64], index: 3, kind: input, shape index: {}]
  %s4 = inlined_call_operand.vmem [shape: f32[1,64], index: 4, kind: input, shape index: {}]
  %s5 = inlined_call_operand.vmem [shape: f32[2,8,64], index: 5, kind: input, shape index: {}]
  %s6 = inlined_call_operand.vmem [shape: f32[2,8,64], index: 6, kind: output, shape index: {}]
  %s7 = sld [smem:[#allocation0]]
  $region69: #{decoder_forward.21} parent=0
    _
  %s9 = ssub.s32 1, %s7
  %s10 = scalar_select 0, %s9, %s7
  loop: start=0, step=1, limit=18
  $region2: #{decoder_forward.21} parent=0 // loop_pre_header
    _
  $region3: #{decoder_forward.21} parent=0 // loop_header
    %s12 = sphi 0, %s16
    %p13 = scmp.ge.s32.totalorder %s12, 18
    %s19 = sphi 0, %s38
    %s20 = sphi 0, %s34
    %s21 = sphi 0, %s30
    %s22 = sphi 0, %s19
    %s23 = sphi 0, %s20
    %s24 = sphi 0, %s21
    %s25 = sphi 0, %s22
    %s26 = sphi 0, %s23
    %s27 = sphi 0, %s24
    %s45 = sphi 0, %s47
    %s48 = sphi 0, %s45
    %s49 = sphi 0, %s48
    %s65 = sphi 0, %s49
    %s73 = sphi 0, %s75
    %s76 = sphi 0, %s73
    %s77 = sphi 0, %s76
    %s93 = sphi 0, %s77
    %s101 = sphi 0, %s103
    %s104 = sphi 0, %s101
    %s105 = sphi 0, %s104
    %s121 = sphi 0, %s105
    %s127 = sphi 0, %s129
    %s130 = sphi 0, %s127
    %s131 = sphi 0, %s130
    %s147 = sphi 0, %s131
    %s151 = sphi 0, %s151
    %s153 = sphi 0, %s151
    %s154 = sphi 0, %s153
    %s168 = sphi 0, %s154
    %s176 = sphi 0, %s178
    %s179 = sphi 0, %s176
    %s180 = sphi 0, %s179
    %s196 = sphi 0, %s180
    %s204 = sphi 0, %s206
    %s207 = sphi 0, %s204
    %s208 = sphi 0, %s207
    %s224 = sphi 0, %s208
  $region4: #{decoder_forward.21} parent=0 // loop_header_branch
    %15 = sbr.rel (%p13) target = $region8
  $region5: #{decoder_forward.21} parent=0 // loop_body
    %s17 = ssub.s32 %s12, 1
    %s18 = ssub.s32 %s12, 2
    %s28 = sadd.s32 1, %s21
    %p29 = scmp.ge.s32.totalorder %s28, 8
    %s30 = scalar_select %p29, 0, %s28
    %s31 = sadd.s32 1, %s20
    %s32 = scalar_select %p29, %s31, %s20
    %p33 = scmp.ge.s32.totalorder %s32, 1
    %s34 = scalar_select %p33, 0, %s32
    %s35 = sadd.s32 1, %s19
    %s36 = scalar_select %p33, %s35, %s19
    %p37 = scmp.ge.s32.totalorder %s36, 2
    %s38 = scalar_select %p37, 0, %s36
    %s39 = ssub.s32 %s19, %s38
    %s40 = ssub.s32 %s21, %s30
    %s41 = sor.u32 %s39, %s40
    %s42 = ssub.s32 %s20, %s34
    %s43 = sor.u32 %s41, %s42
    %p44 = scmp.eq.s32.totalorder %s43, 0
    %s46 = sadd.s32 %s45, 1
    %s47 = scalar_select %p44, %s45, %s46
    %p50 = pneg %p44
    %p51 = scmp.eq.s32.totalorder %s12, 15
    %p52 = por %p50, %p51
    %p53 = scmp.ne.s32.totalorder %s45, %s48
    %p54 = scmp.eq.s32.totalorder %s12, 0
    %p55 = por %p53, %p54
    %p56 = scmp.ne.s32.totalorder %s45, %s48
    %p57 = scmp.eq.s32.totalorder %s17, 15
    %p58 = por %p56, %p57
    %p59 = scmp.ne.s32.totalorder %s48, %s49
    %p60 = scmp.eq.s32.totalorder %s17, 0
    %p61 = por %p59, %p60
    %p62 = scmp.ne.s32.totalorder %s48, %s49
    %p63 = scmp.eq.s32.totalorder %s18, 15
    %p64 = por %p62, %p63
    %p66 = scmp.ne.s32.totalorder %s49, %s65
    %p67 = scmp.eq.s32.totalorder %s18, 0
    %p68 = por %p66, %p67
    %s69 = ssub.s32 %s19, %s38
    %s70 = ssub.s32 %s21, %s30
    %s71 = sor.u32 %s69, %s70
    %p72 = scmp.eq.s32.totalorder %s71, 0
    %s74 = sadd.s32 %s73, 1
    %s75 = scalar_select %p72, %s73, %s74
    %p78 = pneg %p72
    %p79 = scmp.eq.s32.totalorder %s12, 15
    %p80 = por %p78, %p79
    %p81 = scmp.ne.s32.totalorder %s73, %s76
    %p82 = scmp.eq.s32.totalorder %s12, 0
    %p83 = por %p81, %p82
    %p84 = scmp.ne.s32.totalorder %s73, %s76
    %p85 = scmp.eq.s32.totalorder %s17, 15
    %p86 = por %p84, %p85
    %p87 = scmp.ne.s32.totalorder %s76, %s77
    %p88 = scmp.eq.s32.totalorder %s17, 0
    %p89 = por %p87, %p88
    %p90 = scmp.ne.s32.totalorder %s76, %s77
    %p91 = scmp.eq.s32.totalorder %s18, 15
    %p92 = por %p90, %p91
    %p94 = scmp.ne.s32.totalorder %s77, %s93
    %p95 = scmp.eq.s32.totalorder %s18, 0
    %p96 = por %p94, %p95
    %s97 = ssub.s32 %s19, %s38
    %s98 = ssub.s32 %s21, %s30
    %s99 = sor.u32 %s97, %s98
    %p100 = scmp.eq.s32.totalorder %s99, 0
    %s102 = sadd.s32 %s101, 1
    %s103 = scalar_select %p100, %s101, %s102
    %p106 = pneg %p100
    %p107 = scmp.eq.s32.totalorder %s12, 15
    %p108 = por %p106, %p107
    %p109 = scmp.ne.s32.totalorder %s101, %s104
    %p110 = scmp.eq.s32.totalorder %s12, 0
    %p111 = por %p109, %p110
    %p112 = scmp.ne.s32.totalorder %s101, %s104
    %p113 = scmp.eq.s32.totalorder %s17, 15
    %p114 = por %p112, %p113
    %p115 = scmp.ne.s32.totalorder %s104, %s105
    %p116 = scmp.eq.s32.totalorder %s17, 0
    %p117 = por %p115, %p116
    %p118 = scmp.ne.s32.totalorder %s104, %s105
    %p119 = scmp.eq.s32.totalorder %s18, 15
    %p120 = por %p118, %p119
    %p122 = scmp.ne.s32.totalorder %s105, %s121
    %p123 = scmp.eq.s32.totalorder %s18, 0
    %p124 = por %p122, %p123
    %s125 = ssub.s32 %s21, %s30
    %p126 = scmp.eq.s32.totalorder %s125, 0
    %s128 = sadd.s32 %s127, 1
    %s129 = scalar_select %p126, %s127, %s128
    %p132 = pneg %p126
    %p133 = scmp.eq.s32.totalorder %s12, 15
    %p134 = por %p132, %p133
    %p135 = scmp.ne.s32.totalorder %s127, %s130
    %p136 = scmp.eq.s32.totalorder %s12, 0
    %p137 = por %p135, %p136
    %p138 = scmp.ne.s32.totalorder %s127, %s130
    %p139 = scmp.eq.s32.totalorder %s17, 15
    %p140 = por %p138, %p139
    %p141 = scmp.ne.s32.totalorder %s130, %s131
    %p142 = scmp.eq.s32.totalorder %s17, 0
    %p143 = por %p141, %p142
    %p144 = scmp.ne.s32.totalorder %s130, %s131
    %p145 = scmp.eq.s32.totalorder %s18, 15
    %p146 = por %p144, %p145
    %p148 = scmp.ne.s32.totalorder %s131, %s147
    %p149 = scmp.eq.s32.totalorder %s18, 0
    %p150 = por %p148, %p149
    %s152 = sadd.s32 %s151, 1
    %p155 = scmp.eq.s32.totalorder %s12, 15
    %p156 = scmp.ne.s32.totalorder %s151, %s153
    %p157 = scmp.eq.s32.totalorder %s12, 0
    %p158 = por %p156, %p157
    %p159 = scmp.ne.s32.totalorder %s151, %s153
    %p160 = scmp.eq.s32.totalorder %s17, 15
    %p161 = por %p159, %p160
    %p162 = scmp.ne.s32.totalorder %s153, %s154
    %p163 = scmp.eq.s32.totalorder %s17, 0
    %p164 = por %p162, %p163
    %p165 = scmp.ne.s32.totalorder %s153, %s154
    %p166 = scmp.eq.s32.totalorder %s18, 15
    %p167 = por %p165, %p166
    %p169 = scmp.ne.s32.totalorder %s154, %s168
    %p170 = scmp.eq.s32.totalorder %s18, 0
    %p171 = por %p169, %p170
    %s172 = ssub.s32 %s19, %s38
    %s173 = ssub.s32 %s20, %s34
    %s174 = sor.u32 %s172, %s173
    %p175 = scmp.eq.s32.totalorder %s174, 0
    %s177 = sadd.s32 %s176, 1
    %s178 = scalar_select %p175, %s176, %s177
    %p181 = pneg %p175
    %p182 = scmp.eq.s32.totalorder %s12, 15
    %p183 = por %p181, %p182
    %p184 = scmp.ne.s32.totalorder %s176, %s179
    %p185 = scmp.eq.s32.totalorder %s12, 0
    %p186 = por %p184, %p185
    %p187 = scmp.ne.s32.totalorder %s176, %s179
    %p188 = scmp.eq.s32.totalorder %s17, 15
    %p189 = por %p187, %p188
    %p190 = scmp.ne.s32.totalorder %s179, %s180
    %p191 = scmp.eq.s32.totalorder %s17, 0
    %p192 = por %p190, %p191
    %p193 = scmp.ne.s32.totalorder %s179, %s180
    %p194 = scmp.eq.s32.totalorder %s18, 15
    %p195 = por %p193, %p194
    %p197 = scmp.ne.s32.totalorder %s180, %s196
    %p198 = scmp.eq.s32.totalorder %s18, 0
    %p199 = por %p197, %p198
    %s200 = ssub.s32 %s19, %s38
    %s201 = ssub.s32 %s20, %s34
    %s202 = sor.u32 %s200, %s201
    %p203 = scmp.eq.s32.totalorder %s202, 0
    %s205 = sadd.s32 %s204, 1
    %s206 = scalar_select %p203, %s204, %s205
    %p209 = pneg %p203
    %p210 = scmp.eq.s32.totalorder %s12, 15
    %p211 = por %p209, %p210
    %p212 = scmp.ne.s32.totalorder %s204, %s207
    %p213 = scmp.eq.s32.totalorder %s12, 0
    %p214 = por %p212, %p213
    %p215 = scmp.ne.s32.totalorder %s204, %s207
    %p216 = scmp.eq.s32.totalorder %s17, 15
    %p217 = por %p215, %p216
    %p218 = scmp.ne.s32.totalorder %s207, %s208
    %p219 = scmp.eq.s32.totalorder %s17, 0
    %p220 = por %p218, %p219
    %p221 = scmp.ne.s32.totalorder %s207, %s208
    %p222 = scmp.eq.s32.totalorder %s18, 15
    %p223 = por %p221, %p222
    %p225 = scmp.ne.s32.totalorder %s208, %s224
    %p226 = scmp.eq.s32.totalorder %s18, 0
    %p227 = por %p225, %p226
    %p228 = scmp.le.s32.totalorder 1, %s12
    %p229 = scmp.lt.s32.totalorder %s12, 17
    %p230 = pnand %p228, %p229
    %p231 = pneg %p230
    // Predicated region
    $region9: #{decoder_forward.21} parent=5 // pred_check
      _
    $region10: #{decoder_forward.21} parent=5 // pred_check_branch
      %233 = sbr.rel (%p230) target = $region12
    $region11: #{decoder_forward.21} parent=5 // pred_region
      %s234 = ssub.s32 %s12, 1
      // Predicated region
      $region13: #{decoder_forward.21} parent=11 // pred_check
        %p235 = pneg %p164
      $region14: #{decoder_forward.21} parent=11 // pred_check_branch
        %237 = sbr.rel (%p235) target = $region16
      $region15: #{decoder_forward.21} parent=11 // pred_region
        _
      $region16: #{decoder_forward.21} parent=11 // pred_fallthru
        _
    $region12: #{decoder_forward.21} parent=5 // pred_fallthru
      _
    %p238 = scmp.lt.s32.totalorder %s12, 16
    // Predicated region
    $region17: #{decoder_forward.21} parent=5 // pred_check
      %p239 = pneg %p238
    $region18: #{decoder_forward.21} parent=5 // pred_check_branch
      %241 = sbr.rel (%p239) target = $region20
    $region19: #{decoder_forward.21} parent=5 // pred_region
      // Predicated region
      $region21: #{decoder_forward.21} parent=19 // pred_check
        %p242 = pneg %p55
      $region22: #{decoder_forward.21} parent=19 // pred_check_branch
        %244 = sbr.rel (%p242) target = $region24
      $region23: #{decoder_forward.21} parent=19 // pred_region
        %p245 = scmp.lt.s32.totalorder %s19, 1
        %s246 = scalar_select %p245, %s19, 1
        %p247 = scmp.lt.s32.totalorder %s21, 7
        %s248 = scalar_select %p247, %s21, 7
        %p249 = scmp.lt.s32.totalorder %s20, 0
        %s250 = scalar_select %p249, %s20, 0
        %s251 = sadd.s32 %s250, %s248
        %s252 = smul.addr %s246, 8
        %s253 = sadd.s32 %s251, %s252
        %s254 = smul.addr %s253, 4
        %s255 = scalar_lea.vmem %s0, %s254
      $region24: #{decoder_forward.21} parent=19 // pred_fallthru
        _
      // Predicated region
      $region25: #{decoder_forward.21} parent=19 // pred_check
        %p256 = pneg %p83
      $region26: #{decoder_forward.21} parent=19 // pred_check_branch
        %258 = sbr.rel (%p256) target = $region28
      $region27: #{decoder_forward.21} parent=19 // pred_region
        %p259 = scmp.lt.s32.totalorder %s19, 1
        %s260 = scalar_select %p259, %s19, 1
        %p261 = scmp.lt.s32.totalorder %s21, 7
        %s262 = scalar_select %p261, %s21, 7
        %s263 = smul.addr %s260, 8
        %s264 = sadd.s32 %s262, %s263
        %s265 = smul.addr %s264, 4
        %s266 = scalar_lea.vmem %s1, %s265
      $region28: #{decoder_forward.21} parent=19 // pred_fallthru
        _
      // Predicated region
      $region29: #{decoder_forward.21} parent=19 // pred_check
        %p267 = pneg %p111
      $region30: #{decoder_forward.21} parent=19 // pred_check_branch
        %269 = sbr.rel (%p267) target = $region32
      $region31: #{decoder_forward.21} parent=19 // pred_region
        %p270 = scmp.lt.s32.totalorder %s19, 1
        %s271 = scalar_select %p270, %s19, 1
        %p272 = scmp.lt.s32.totalorder %s21, 7
        %s273 = scalar_select %p272, %s21, 7
        %s274 = smul.addr %s271, 8
        %s275 = sadd.s32 %s273, %s274
        %s276 = smul.addr %s275, 4
        %s277 = scalar_lea.vmem %s2, %s276
      $region32: #{decoder_forward.21} parent=19 // pred_fallthru
        _
      // Predicated region
      $region33: #{decoder_forward.21} parent=19 // pred_check
        %p278 = pneg %p137
      $region34: #{decoder_forward.21} parent=19 // pred_check_branch
        %280 = sbr.rel (%p278) target = $region36
      $region35: #{decoder_forward.21} parent=19 // pred_region
        %p281 = scmp.lt.s32.totalorder %s21, 7
        %s282 = scalar_select %p281, %s21, 7
        %s283 = smul.addr %s282, 4
        %s284 = scalar_lea.vmem %s3, %s283
      $region36: #{decoder_forward.21} parent=19 // pred_fallthru
        _
      // Predicated region
      $region37: #{decoder_forward.21} parent=19 // pred_check
        %p285 = pneg %p186
      $region38: #{decoder_forward.21} parent=19 // pred_check_branch
        %287 = sbr.rel (%p285) target = $region40
      $region39: #{decoder_forward.21} parent=19 // pred_region
        %p288 = scmp.lt.s32.totalorder %s19, 1
        %s289 = scalar_select %p288, %s19, 1
        %p290 = scmp.lt.s32.totalorder %s20, 0
        %s291 = scalar_select %p290, %s20, 0
        %s292 = sadd.s32 %s291, %s289
        %s293 = smul.addr %s292, 8
        %s294 = scalar_lea.vmem %s5, %s293
      $region40: #{decoder_forward.21} parent=19 // pred_fallthru
        _
    $region20: #{decoder_forward.21} parent=5 // pred_fallthru
      _
    %p295 = scmp.le.s32.totalorder 1, %s12
    %p296 = scmp.lt.s32.totalorder %s12, 17
    %p297 = pnand %p295, %p296
    %p298 = pneg %p297
    // Predicated region
    $region41: #{decoder_forward.21} parent=5 // pred_check
      _
    $region42: #{decoder_forward.21} parent=5 // pred_check_branch
      %300 = sbr.rel (%p297) target = $region44
    $region43: #{decoder_forward.21} parent=5 // pred_region
      %s301 = ssub.s32 %s12, 1
      %p302 = scmp.lt.s32.totalorder %s22, 1
      %s303 = scalar_select %p302, %s22, 1
      %p304 = scmp.lt.s32.totalorder %s24, 7
      %s305 = scalar_select %p304, %s24, 7
      %p306 = scmp.lt.s32.totalorder %s23, 0
      %s307 = scalar_select %p306, %s23, 0
      %s308 = sadd.s32 %s307, %s305
      %s309 = smul.addr %s303, 8
      %s310 = sadd.s32 %s308, %s309
      %s311 = smul.addr %s310, 4
      %s312 = scalar_lea.vmem %s0, %s311
      %p313 = pneg %p61
      %p314 = pneg %p58
      %p315 = scmp.lt.s32.totalorder %s22, 1
      %s316 = scalar_select %p315, %s22, 1
      %p317 = scmp.lt.s32.totalorder %s24, 7
      %s318 = scalar_select %p317, %s24, 7
      %s319 = smul.addr %s316, 8
      %s320 = sadd.s32 %s318, %s319
      %s321 = smul.addr %s320, 4
      %s322 = scalar_lea.vmem %s1, %s321
      %p323 = pneg %p89
      %p324 = pneg %p86
      %p325 = scmp.lt.s32.totalorder %s22, 1
      %s326 = scalar_select %p325, %s22, 1
      %p327 = scmp.lt.s32.totalorder %s24, 7
      %s328 = scalar_select %p327, %s24, 7
      %s329 = smul.addr %s326, 8
      %s330 = sadd.s32 %s328, %s329
      %s331 = smul.addr %s330, 4
      %s332 = scalar_lea.vmem %s2, %s331
      %p333 = pneg %p117
      %p334 = pneg %p114
      %p335 = scmp.lt.s32.totalorder %s24, 7
      %s336 = scalar_select %p335, %s24, 7
      %s337 = smul.addr %s336, 4
      %s338 = scalar_lea.vmem %s3, %s337
      %p339 = pneg %p143
      %p340 = pneg %p140
      %p341 = pneg %p164
      %p342 = pneg %p161
      %p343 = scmp.lt.s32.totalorder %s22, 1
      %s344 = scalar_select %p343, %s22, 1
      %p345 = scmp.lt.s32.totalorder %s23, 0
      %s346 = scalar_select %p345, %s23, 0
      %s347 = sadd.s32 %s346, %s344
      %s348 = smul.addr %s347, 8
      %s349 = scalar_lea.vmem %s5, %s348
      %p350 = pneg %p192
      %p351 = pneg %p189
      %p352 = pneg %p220
      %p353 = pneg %p217
      %p354 = scmp.lt.s32.totalorder %s22, 1
      %s355 = scalar_select %p354, %s22, 1
      %p356 = scmp.lt.s32.totalorder %s23, 0
      %s357 = scalar_select %p356, %s23, 0
      %s358 = sadd.s32 %s357, %s355
      %s359 = smul.addr %s358, 8
      %s360 = scalar_lea.vmem %s6, %s359
      %p361 = scmp.lt.s32.totalorder %s22, 1
      %s362 = scalar_select %p361, %s22, 1
      %p363 = scmp.lt.s32.totalorder %s24, 7
      %s364 = scalar_select %p363, %s24, 7
      %p365 = scmp.lt.s32.totalorder %s23, 0
      %s366 = scalar_select %p365, %s23, 0
      %s367 = sadd.s32 %s366, %s364
      %s368 = smul.addr %s362, 8
      %s369 = sadd.s32 %s367, %s368
      %s370 = smul.addr %s369, 4
      %s371 = scalar_lea.vmem %s0, %s370
      %p372 = scmp.lt.s32.totalorder %s22, 1
      %s373 = scalar_select %p372, %s22, 1
      %p374 = scmp.lt.s32.totalorder %s24, 7
      %s375 = scalar_select %p374, %s24, 7
      %s376 = smul.addr %s373, 8
      %s377 = sadd.s32 %s375, %s376
      %s378 = smul.addr %s377, 4
      %s379 = scalar_lea.vmem %s1, %s378
      %p380 = scmp.lt.s32.totalorder %s22, 1
      %s381 = scalar_select %p380, %s22, 1
      %p382 = scmp.lt.s32.totalorder %s24, 7
      %s383 = scalar_select %p382, %s24, 7
      %s384 = smul.addr %s381, 8
      %s385 = sadd.s32 %s383, %s384
      %s386 = smul.addr %s385, 4
      %s387 = scalar_lea.vmem %s2, %s386
      %p388 = scmp.lt.s32.totalorder %s24, 7
      %s389 = scalar_select %p388, %s24, 7
      %s390 = smul.addr %s389, 4
      %s391 = scalar_lea.vmem %s3, %s390
      %p392 = scmp.lt.s32.totalorder %s22, 1
      %s393 = scalar_select %p392, %s22, 1
      %p394 = scmp.lt.s32.totalorder %s23, 0
      %s395 = scalar_select %p394, %s23, 0
      %s396 = sadd.s32 %s395, %s393
      %s397 = smul.addr %s396, 8
      %s398 = scalar_lea.vmem %s5, %s397
      %p399 = scmp.lt.s32.totalorder %s22, 1
      %s400 = scalar_select %p399, %s22, 1
      %p401 = scmp.lt.s32.totalorder %s23, 0
      %s402 = scalar_select %p401, %s23, 0
      %s403 = sadd.s32 %s402, %s400
      %s404 = smul.addr %s403, 8
      %s405 = scalar_lea.vmem %s6, %s404
      %v407 = vld [vmem:[%s371] sm:$0xf]
      %v408 = vld [vmem:[%s379] sm:$0xf]
      %v409 = vld [vmem:[%s387] sm:$0xf]
      %vm410 = vcmask 64512
      %v412 = vsel %vm410, %v407, 0
      %v415 = vsel %vm410, %v408, 0
      %417 = vmatprep.subr.bf16.mxu0 0
      %418 = vmatpush1.bf16.xpose.msra.mxu0 %v415
      %419 = vmatprep.subr.bf16.mxu0 0
      %420 = vmatpush1.bf16.xpose.msra.mxu0 0
      %421 = vmatprep.subr.bf16.mxu0 0
      %422 = vmatpush1.bf16.xpose.msra.mxu0 0
      %423 = vmatprep.subr.bf16.mxu0 0
      %424 = vmatpush1.bf16.xpose.msra.mxu0 0
      %425 = vmatprep.subr.bf16.mxu0 0
      %426 = vmatpush1.bf16.xpose.msra.mxu0 0
      %427 = vmatprep.subr.bf16.mxu0 0
      %428 = vmatpush1.bf16.xpose.msra.mxu0 0
      %429 = vmatprep.subr.bf16.mxu0 0
      %430 = vmatpush1.bf16.xpose.msra.mxu0 0
      %431 = vmatprep.subr.bf16.mxu0 0
      %432 = vmatpush1.bf16.xpose.msra.mxu0 0
      %433 = vmatprep.subr.bf16.mxu0 0
      %434 = vmatpush1.bf16.xpose.msra.mxu0 0
      %435 = vmatprep.subr.bf16.mxu0 0
      %436 = vmatpush1.bf16.xpose.msra.mxu0 0
      %437 = vmatprep.subr.bf16.mxu0 0
      %438 = vmatpush1.bf16.xpose.msra.mxu0 0
      %439 = vmatprep.subr.bf16.mxu0 0
      %440 = vmatpush1.bf16.xpose.msra.mxu0 0
      %441 = vmatprep.subr.bf16.mxu0 0
      %442 = vmatpush1.bf16.xpose.msra.mxu0 0
      %443 = vmatprep.subr.bf16.mxu0 0
      %444 = vmatpush1.bf16.xpose.msra.mxu0 0
      %445 = vmatprep.subr.bf16.mxu0 0
      %446 = vmatpush1.bf16.xpose.msra.mxu0 0
      %447 = vmatprep.subr.bf16.mxu0 0
      %448 = vmatpush1.bf16.xpose.msra.mxu0 0
      %449 = vmatprep.mubr.bf16.mxu0 0
      %450 = vmatmul.mubr.bf16.gmra.mrb[0].mxu0 %v412
      %v451 = vpop.f32.mrb[0].mxu0
      %v452 = vadd.f32 0.0, %v451
      %v453 = vpop.f32.mrb[0].mxu0
      %v454 = vpop.f32.mrb[0].mxu0
      %v455 = vpop.f32.mrb[0].mxu0
      %456 = vdwg.mxu0
      %v457 = vmul.f32 %v452, 0.35355338
      %v458 = vlaneseq
      %v459 = vshrl.u32 %v458, 7
      %s460 = smul.u32 %s23, 8
      %v461 = vstv %s460
      %v462 = vadd.s32 %v459, %v461
      %v463 = vlaneseq
      %v464 = vand.u32 %v463, 127
      %vm465 = vcmp.le.s32.totalorder %v464, %v462
      %v466 = vsel %vm465, %v457, -1e+30
      %v467 = vsel %vm410, %v466, -inf
      %468 = vmax.xlane.f32.xlu0 %v467
      %v469 = vpop.xlane.xlu0 %468
      %v470 = vsub.f32 %v466, %v469
      %v471 = vmul.f32 %v470, 1.442695
      %v472 = vpow.pop %v471
      %v473 = vsel %vm410, %v472, 0.0
      %474 = vadd.xlane.f32.xlu0 %v473
      %v475 = vpop.xlane.xlu0 %474
      %v476 = vrcp.pop %v475
      %v477 = vmul.f32 %v472, %v476
      %v478 = vpack.c.bf16 %v477, %v477
      %v480 = vsel %vm410, %v478, 0
      %vm482 = vcmask 1043456
      %v484 = vsel %vm482, %v409, 0
      %486 = vmatprep.subr.bf16.mxu0 0
      %487 = vmatpush1.bf16.msra.mxu0 %v484
      %488 = vmatprep.subr.bf16.mxu0 0
      %489 = vmatpush1.bf16.msra.mxu0 0
      %490 = vmatprep.subr.bf16.mxu0 0
      %491 = vmatpush1.bf16.msra.mxu0 0
      %492 = vmatprep.subr.bf16.mxu0 0
      %493 = vmatpush1.bf16.msra.mxu0 0
      %494 = vmatprep.subr.bf16.mxu0 0
      %495 = vmatpush1.bf16.msra.mxu0 0
      %496 = vmatprep.subr.bf16.mxu0 0
      %497 = vmatpush1.bf16.msra.mxu0 0
      %498 = vmatprep.subr.bf16.mxu0 0
      %499 = vmatpush1.bf16.msra.mxu0 0
      %500 = vmatprep.subr.bf16.mxu0 0
      %501 = vmatpush1.bf16.msra.mxu0 0
      %502 = vmatprep.subr.bf16.mxu0 0
      %503 = vmatpush1.bf16.msra.mxu0 0
      %504 = vmatprep.subr.bf16.mxu0 0
      %505 = vmatpush1.bf16.msra.mxu0 0
      %506 = vmatprep.subr.bf16.mxu0 0
      %507 = vmatpush1.bf16.msra.mxu0 0
      %508 = vmatprep.subr.bf16.mxu0 0
      %509 = vmatpush1.bf16.msra.mxu0 0
      %510 = vmatprep.subr.bf16.mxu0 0
      %511 = vmatpush1.bf16.msra.mxu0 0
      %512 = vmatprep.subr.bf16.mxu0 0
      %513 = vmatpush1.bf16.msra.mxu0 0
      %514 = vmatprep.subr.bf16.mxu0 0
      %515 = vmatpush1.bf16.msra.mxu0 0
      %516 = vmatprep.subr.bf16.mxu0 0
      %517 = vmatpush1.bf16.msra.mxu0 0
      %518 = vmatprep.mubr.bf16.mxu0 0
      %519 = vmatmul.mubr.bf16.gmra.mrb[0].mxu0 %v480
      %v520 = vpop.f32.mrb[0].mxu0
      %v521 = vadd.f32 0.0, %v520
      %v522 = vpop.f32.mrb[0].mxu0
      %v523 = vpop.f32.mrb[0].mxu0
      %v524 = vpop.f32.mrb[0].mxu0
      %525 = vdwg.mxu0
      %v526 = vpack.c.bf16 %v521, %v521
      %v527 = vld [vmem:[%s391] sm:$0xf]
      %v529 = vsel %vm410, %v526, 0
      %v532 = vsel %vm482, %v527, 0
      %534 = vmatprep.subr.bf16.mxu0 0
      %535 = vmatpush1.bf16.msra.mxu0 %v532
      %536 = vmatprep.subr.bf16.mxu0 0
      %537 = vmatpush1.bf16.msra.mxu0 0
      %538 = vmatprep.subr.bf16.mxu0 0
      %539 = vmatpush1.bf16.msra.mxu0 0
      %540 = vmatprep.subr.bf16.mxu0 0
      %541 = vmatpush1.bf16.msra.mxu0 0
      %542 = vmatprep.subr.bf16.mxu0 0
      %543 = vmatpush1.bf16.msra.mxu0 0
      %544 = vmatprep.subr.bf16.mxu0 0
      %545 = vmatpush1.bf16.msra.mxu0 0
      %546 = vmatprep.subr.bf16.mxu0 0
      %547 = vmatpush1.bf16.msra.mxu0 0
      %548 = vmatprep.subr.bf16.mxu0 0
      %549 = vmatpush1.bf16.msra.mxu0 0
      %550 = vmatprep.subr.bf16.mxu0 0
      %551 = vmatpush1.bf16.msra.mxu0 0
      %552 = vmatprep.subr.bf16.mxu0 0
      %553 = vmatpush1.bf16.msra.mxu0 0
      %554 = vmatprep.subr.bf16.mxu0 0
      %555 = vmatpush1.bf16.msra.mxu0 0
      %556 = vmatprep.subr.bf16.mxu0 0
      %557 = vmatpush1.bf16.msra.mxu0 0
      %558 = vmatprep.subr.bf16.mxu0 0
      %559 = vmatpush1.bf16.msra.mxu0 0
      %560 = vmatprep.subr.bf16.mxu0 0
      %561 = vmatpush1.bf16.msra.mxu0 0
      %562 = vmatprep.subr.bf16.mxu0 0
      %563 = vmatpush1.bf16.msra.mxu0 0
      %564 = vmatprep.subr.bf16.mxu0 0
      %565 = vmatpush1.bf16.msra.mxu0 0
      %566 = vmatprep.mubr.bf16.mxu0 0
      %567 = vmatmul.mubr.bf16.gmra.mrb[0].mxu0 %v529
      %v568 = vpop.f32.mrb[0].mxu0
      %v569 = vadd.f32 0.0, %v568
      %v570 = vpop.f32.mrb[0].mxu0
      %v571 = vpop.f32.mrb[0].mxu0
      %v572 = vpop.f32.mrb[0].mxu0
      %573 = vdwg.mxu0
      %p574 = scmp.eq.s32.totalorder %s24, 0
      // Predicated region
      $region45: #{decoder_forward.21} parent=43 // pred_check
        %p575 = pneg %p574
      $region46: #{decoder_forward.21} parent=43 // pred_check_branch
        %577 = sbr.rel (%p575) target = $region48
      $region47: #{decoder_forward.21} parent=43 // pred_region
        %vm578 = vcmask 523264
        %579 = vst.msk [vmem:[%s405] sm:$0xff] %vm578, %v569
      $region48: #{decoder_forward.21} parent=43 // pred_fallthru
        _
      %p580 = scmp.gt.s32.totalorder %s24, 0
      // Predicated region
      $region49: #{decoder_forward.21} parent=43 // pred_check
        %p581 = pneg %p580
      $region50: #{decoder_forward.21} parent=43 // pred_check_branch
        %583 = sbr.rel (%p581) target = $region52
      $region51: #{decoder_forward.21} parent=43 // pred_region
        %v584 = vld [vmem:[%s405] sm:$0xff]
        %v585 = vadd.f32 %v584, %v569
        %vm586 = vcmask 523264
        %587 = vst.msk [vmem:[%s405] sm:$0xff] %vm586, %v585
      $region52: #{decoder_forward.21} parent=43 // pred_fallthru
        _
      %p588 = scmp.eq.s32.totalorder %s24, 7
      // Predicated region
      $region53: #{decoder_forward.21} parent=43 // pred_check
        %p589 = pneg %p588
      $region54: #{decoder_forward.21} parent=43 // pred_check_branch
        %591 = sbr.rel (%p589) target = $region56
      $region55: #{decoder_forward.21} parent=43 // pred_region
        %v592 = vld [vmem:[%s405] sm:$0xff]
        %v593 = vld [vmem:[%s4] sm:$0x1]
        %v595 = vlaneseq
        %v596 = vshrl.u32 %v595, 7
        %v597 = vsub.s32 0, %v596
        %v598 = vrot.slane %v593, %v597
        %v600 = vadd.f32 %v592, %v598
        %v601 = vld [vmem:[%s398] sm:$0xff]
        %v602 = vadd.f32 %v600, %v601
        %vm603 = vcmask 523264
        %604 = vst.msk [vmem:[%s405] sm:$0xff] %vm603, %v602
      $region56: #{decoder_forward.21} parent=43 // pred_fallthru
        _
      %p605 = scmp.lt.s32.totalorder %s22, 1
      %s606 = scalar_select %p605, %s22, 1
      %p607 = scmp.lt.s32.totalorder %s23, 0
      %s608 = scalar_select %p607, %s23, 0
      %s609 = sadd.s32 %s608, %s606
      %s610 = smul.addr %s609, 8
      %s611 = scalar_lea.vmem %s6, %s610
      // Predicated region
      $region57: #{decoder_forward.21} parent=43 // pred_check
        %p612 = pneg %p217
      $region58: #{decoder_forward.21} parent=43 // pred_check_branch
        %614 = sbr.rel (%p612) target = $region60
      $region59: #{decoder_forward.21} parent=43 // pred_region
        _
      $region60: #{decoder_forward.21} parent=43 // pred_fallthru
        _
    $region44: #{decoder_forward.21} parent=5 // pred_fallthru
      _
    %p615 = scmp.le.s32.totalorder 2, %s12
    // Predicated region
    $region61: #{decoder_forward.21} parent=5 // pred_check
      %p616 = pneg %p615
    $region62: #{decoder_forward.21} parent=5 // pred_check_branch
      %618 = sbr.rel (%p616) target = $region64
    $region63: #{decoder_forward.21} parent=5 // pred_region
      %s619 = ssub.s32 %s12, 2
      // Predicated region
      $region65: #{decoder_forward.21} parent=63 // pred_check
        %p620 = pneg %p223
      $region66: #{decoder_forward.21} parent=63 // pred_check_branch
        %622 = sbr.rel (%p620) target = $region68
      $region67: #{decoder_forward.21} parent=63 // pred_region
        %p623 = scmp.lt.s32.totalorder %s25, 1
        %s624 = scalar_select %p623, %s25, 1
        %p625 = scmp.lt.s32.totalorder %s26, 0
        %s626 = scalar_select %p625, %s26, 0
        %s627 = sadd.s32 %s626, %s624
        %s628 = smul.addr %s627, 8
        %s629 = scalar_lea.vmem %s6, %s628
      $region68: #{decoder_forward.21} parent=63 // pred_fallthru
        _
    $region64: #{decoder_forward.21} parent=5 // pred_fallthru
      _
  $region6: #{decoder_forward.21} parent=0 // loop_footer
    %s16 = sadd.s32 1, %s12
  $region7: #{decoder_forward.21} parent=0 // loop_footer_branch
    %11 = sbr.rel target = $region3
  $region8: #{decoder_forward.21} parent=0 // loop_exit
    _

// kernel: decoder_forward.23
$region0: #{decoder_forward.23}
  #allocation0 [shape = 'u32[]', space=smem, size = 0x4, offset = 0x4, fixed_abs, tag = 'smem constant byte address 0x4 - core index']
  #allocation1 [shape = 'u32[144,128]{1,0:T(1,128)}', space=vmem, size = 0x12000, scoped, tag = 'internal scratch']
  #allocation2 [shape = 'f32[16,128]{1,0:T(8,128)}', space=vmem, size = 0x2000, scoped, tag = 'scratch operand']
  %s0 = inlined_call_operand.vmem [shape: f32[16,64], index: 0, kind: input, shape index: {}]
  %s1 = inlined_call_operand.vmem [shape: bf16[64,128], index: 1, kind: input, shape index: {}]
  %s2 = inlined_call_operand.vmem [shape: f32[1,128], index: 2, kind: input, shape index: {}]
  %s3 = inlined_call_operand.vmem [shape: bf16[16,128], index: 3, kind: output, shape index: {}]
  %s4 = sld [smem:[#allocation0]]
  $region34: #{decoder_forward.23} parent=0
    _
  %s6 = ssub.s32 1, %s4
  %s7 = scalar_select 0, %s6, %s4
  // Predicated region
  $region2: #{decoder_forward.23} parent=0 // pred_check
    _
  $region3: #{decoder_forward.23} parent=0 // pred_check_branch
    %9 = sbr.rel (0) target = $region5
  $region4: #{decoder_forward.23} parent=0 // pred_region
    _
  $region5: #{decoder_forward.23} parent=0 // pred_fallthru
    _
  // Predicated region
  $region6: #{decoder_forward.23} parent=0 // pred_check
    _
  $region7: #{decoder_forward.23} parent=0 // pred_check_branch
    %11 = sbr.rel (0) target = $region9
  $region8: #{decoder_forward.23} parent=0 // pred_region
    _
  $region9: #{decoder_forward.23} parent=0 // pred_fallthru
    _
  // Predicated region
  $region10: #{decoder_forward.23} parent=0 // pred_check
    _
  $region11: #{decoder_forward.23} parent=0 // pred_check_branch
    %13 = sbr.rel (0) target = $region13
  $region12: #{decoder_forward.23} parent=0 // pred_region
    _
  $region13: #{decoder_forward.23} parent=0 // pred_fallthru
    _
  %v15 = vld [vmem:[%s0] sm:$0xff]
  %v16 = vld [vmem:[%s0 + $0x8] sm:$0xff]
  %v17 = vpack.c.bf16 %v16, %v15
  %v18 = vld [vmem:[%s1] sm:$0xf]
  %v19 = vld [vmem:[%s1 + $0x4] sm:$0xf]
  %v20 = vld [vmem:[%s1 + $0x8] sm:$0xf]
  %v21 = vld [vmem:[%s1 + $0xc] sm:$0xf]
  %v22 = vld [vmem:[%s1 + $0x10] sm:$0xf]
  %v23 = vld [vmem:[%s1 + $0x14] sm:$0xf]
  %v24 = vld [vmem:[%s1 + $0x18] sm:$0xf]
  %v25 = vld [vmem:[%s1 + $0x1c] sm:$0xf]
  %v34 = vunpack.c.l.b16 %v18
  %v35 = vunpack.c.l.b16 %v19
  %v36 = vunpack.c.l.b16 %v20
  %v37 = vunpack.c.l.b16 %v21
  %v38 = vunpack.c.l.b16 %v22
  %v39 = vunpack.c.l.b16 %v23
  %v40 = vunpack.c.l.b16 %v24
  %v41 = vunpack.c.l.b16 %v25
  %v42 = vpack.c.b16 %v35, %v34
  %v43 = vpack.c.b16 %v37, %v36
  %v44 = vpack.c.b16 %v39, %v38
  %v45 = vpack.c.b16 %v41, %v40
  %vm50 = vcmask 523264
  %v52 = vsel %vm50, %v17, 0
  %54 = vmatprep.subr.bf16.mxu0 0
  %55 = vmatpush1.bf16.msra.mxu0 %v42
  %56 = vmatprep.subr.bf16.mxu0 0
  %57 = vmatpush1.bf16.msra.mxu0 %v43
  %58 = vmatprep.subr.bf16.mxu0 0
  %59 = vmatpush1.bf16.msra.mxu0 %v44
  %60 = vmatprep.subr.bf16.mxu0 0
  %61 = vmatpush1.bf16.msra.mxu0 %v45
  %62 = vmatprep.subr.bf16.mxu0 0
  %63 = vmatpush1.bf16.msra.mxu0 0
  %64 = vmatprep.subr.bf16.mxu0 0
  %65 = vmatpush1.bf16.msra.mxu0 0
  %66 = vmatprep.subr.bf16.mxu0 0
  %67 = vmatpush1.bf16.msra.mxu0 0
  %68 = vmatprep.subr.bf16.mxu0 0
  %69 = vmatpush1.bf16.msra.mxu0 0
  %70 = vmatprep.subr.bf16.mxu0 0
  %71 = vmatpush1.bf16.msra.mxu0 0
  %72 = vmatprep.subr.bf16.mxu0 0
  %73 = vmatpush1.bf16.msra.mxu0 0
  %74 = vmatprep.subr.bf16.mxu0 0
  %75 = vmatpush1.bf16.msra.mxu0 0
  %76 = vmatprep.subr.bf16.mxu0 0
  %77 = vmatpush1.bf16.msra.mxu0 0
  %78 = vmatprep.subr.bf16.mxu0 0
  %79 = vmatpush1.bf16.msra.mxu0 0
  %80 = vmatprep.subr.bf16.mxu0 0
  %81 = vmatpush1.bf16.msra.mxu0 0
  %82 = vmatprep.subr.bf16.mxu0 0
  %83 = vmatpush1.bf16.msra.mxu0 0
  %84 = vmatprep.subr.bf16.mxu0 0
  %85 = vmatpush1.bf16.msra.mxu0 0
  %86 = vmatprep.mubr.bf16.mxu0 0
  %87 = vmatmul.mubr.bf16.gmra.mrb[0].mxu0 %v52
  %v88 = vpop.f32.mrb[0].mxu0
  %v89 = vadd.f32 0.0, %v88
  %v90 = vpop.f32.mrb[0].mxu0
  %v91 = vpop.f32.mrb[0].mxu0
  %v92 = vadd.f32 0.0, %v91
  %v93 = vpop.f32.mrb[0].mxu0
  %94 = vdwg.mxu0
  %p95 = scmp.eq.s32.totalorder 0, 0
  // Predicated region
  $region14: #{decoder_forward.23} parent=0 // pred_check
    %p96 = pneg %p95
  $region15: #{decoder_forward.23} parent=0 // pred_check_branch
    %98 = sbr.rel (%p96) target = $region17
  $region16: #{decoder_forward.23} parent=0 // pred_region
    %99 = vst [vmem:[#allocation2] sm:$0xff] %v89
    %100 = vst [vmem:[#allocation2 + $0x8] sm:$0xff] %v92
  $region17: #{decoder_forward.23} parent=0 // pred_fallthru
    _
  %p101 = scmp.gt.s32.totalorder 0, 0
  // Predicated region
  $region18: #{decoder_forward.23} parent=0 // pred_check
    %p102 = pneg %p101
  $region19: #{decoder_forward.23} parent=0 // pred_check_branch
    %104 = sbr.rel (%p102) target = $region21
  $region20: #{decoder_forward.23} parent=0 // pred_region
    %v105 = vld [vmem:[#allocation2] sm:$0xff]
    %v106 = vld [vmem:[#allocation2 + $0x8] sm:$0xff]
    %v107 = vadd.f32 %v105, %v89
    %v108 = vadd.f32 %v106, %v92
    %109 = vst [vmem:[#allocation2] sm:$0xff] %v107
    %110 = vst [vmem:[#allocation2 + $0x8] sm:$0xff] %v108
  $region21: #{decoder_forward.23} parent=0 // pred_fallthru
    _
  // Predicated region
  $region22: #{decoder_forward.23} parent=0 // pred_check
    %p111 = pneg %p95
  $region23: #{decoder_forward.23} parent=0 // pred_check_branch
    %113 = sbr.rel (%p111) target = $region25
  $region24: #{decoder_forward.23} parent=0 // pred_region
    %v114 = vld [vmem:[#allocation2] sm:$0xff]
    %v115 = vld [vmem:[#allocation2 + $0x8] sm:$0xff]
    %v116 = vld [vmem:[%s2] sm:$0x1]
    %v118 = vlaneseq
    %v119 = vshrl.u32 %v118, 7
    %v120 = vsub.s32 0, %v119
    %v121 = vrot.slane %v116, %v120
    %v123 = vadd.f32 %v114, %v121
    %v124 = vadd.f32 %v115, %v121
    %v125 = vpack.c.bf16 %v124, %v123
    %v127 = vunpack.c.l.b16 %v125
    %v128 = vunpack.c.h.b16 %v125
    %v129 = vpack.c.b16 %v127, %v127
    %v130 = vpack.c.b16 %v128, %v128
    %133 = vst [vmem:[%s3] sm:$0xf] %v129
    %134 = vst [vmem:[%s3 + $0x4] sm:$0xf] %v130
  $region25: #{decoder_forward.23} parent=0 // pred_fallthru
    _
  // Predicated region
  $region26: #{decoder_forward.23} parent=0 // pred_check
    _
  $region27: #{decoder_forward.23} parent=0 // pred_check_branch
    %136 = sbr.rel (0) target = $region29
  $region28: #{decoder_forward.23} parent=0 // pred_region
    _
  $region29: #{decoder_forward.23} parent=0 // pred_fallthru
    _
  // Predicated region
  $region30: #{decoder_forward.23} parent=0 // pred_check
    _
  $region31: #{decoder_forward.23} parent=0 // pred_check_branch
    %138 = sbr.rel (0) target = $region33
  $region32: #{decoder_forward.23} parent=0 // pred_region
    _
  $region33: #{decoder_forward.23} parent=0 // pred_fallthru
    _

// kernel: decoder_forward.24
$region0: #{decoder_forward.24}
  #allocation0 [shape = 'u32[]', space=smem, size = 0x4, offset = 0x4, fixed_abs, tag = 'smem constant byte address 0x4 - core index']
  #allocation1 [shape = 'u32[144,128]{1,0:T(1,128)}', space=vmem, size = 0x12000, scoped, tag = 'internal scratch']
  %s0 = inlined_call_operand.vmem [shape: bf16[2,8,8,8], index: 0, kind: input, shape index: {}]
  %s1 = inlined_call_operand.vmem [shape: bf16[2,8,8,8], index: 1, kind: input, shape index: {}]
  %s2 = inlined_call_operand.vmem [shape: bf16[2,8,8,8], index: 2, kind: input, shape index: {}]
  %s3 = inlined_call_operand.vmem [shape: bf16[64,64], index: 3, kind: input, shape index: {}]
  %s4 = inlined_call_operand.vmem [shape: f32[1,64], index: 4, kind: input, shape index: {}]
  %s5 = inlined_call_operand.vmem [shape: f32[2,8,64], index: 5, kind: input, shape index: {}]
  %s6 = inlined_call_operand.vmem [shape: f32[2,8,64], index: 6, kind: output, shape index: {}]
  %s7 = sld [smem:[#allocation0]]
  $region69: #{decoder_forward.24} parent=0
    _
  %s9 = ssub.s32 1, %s7
  %s10 = scalar_select 0, %s9, %s7
  loop: start=0, step=1, limit=18
  $region2: #{decoder_forward.24} parent=0 // loop_pre_header
    _
  $region3: #{decoder_forward.24} parent=0 // loop_header
    %s12 = sphi 0, %s16
    %p13 = scmp.ge.s32.totalorder %s12, 18
    %s19 = sphi 0, %s38
    %s20 = sphi 0, %s34
    %s21 = sphi 0, %s30
    %s22 = sphi 0, %s19
    %s23 = sphi 0, %s20
    %s24 = sphi 0, %s21
    %s25 = sphi 0, %s22
    %s26 = sphi 0, %s23
    %s27 = sphi 0, %s24
    %s45 = sphi 0, %s47
    %s48 = sphi 0, %s45
    %s49 = sphi 0, %s48
    %s65 = sphi 0, %s49
    %s73 = sphi 0, %s75
    %s76 = sphi 0, %s73
    %s77 = sphi 0, %s76
    %s93 = sphi 0, %s77
    %s101 = sphi 0, %s103
    %s104 = sphi 0, %s101
    %s105 = sphi 0, %s104
    %s121 = sphi 0, %s105
    %s127 = sphi 0, %s129
    %s130 = sphi 0, %s127
    %s131 = sphi 0, %s130
    %s147 = sphi 0, %s131
    %s151 = sphi 0, %s151
    %s153 = sphi 0, %s151
    %s154 = sphi 0, %s153
    %s168 = sphi 0, %s154
    %s176 = sphi 0, %s178
    %s179 = sphi 0, %s176
    %s180 = sphi 0, %s179
    %s196 = sphi 0, %s180
    %s204 = sphi 0, %s206
    %s207 = sphi 0, %s204
    %s208 = sphi 0, %s207
    %s224 = sphi 0, %s208
  $region4: #{decoder_forward.24} parent=0 // loop_header_branch
    %15 = sbr.rel (%p13) target = $region8
  $region5: #{decoder_forward.24} parent=0 // loop_body
    %s17 = ssub.s32 %s12, 1
    %s18 = ssub.s32 %s12, 2
    %s28 = sadd.s32 1, %s21
    %p29 = scmp.ge.s32.totalorder %s28, 8
    %s30 = scalar_select %p29, 0, %s28
    %s31 = sadd.s32 1, %s20
    %s32 = scalar_select %p29, %s31, %s20
    %p33 = scmp.ge.s32.totalorder %s32, 1
    %s34 = scalar_select %p33, 0, %s32
    %s35 = sadd.s32 1, %s19
    %s36 = scalar_select %p33, %s35, %s19
    %p37 = scmp.ge.s32.totalorder %s36, 2
    %s38 = scalar_select %p37, 0, %s36
    %s39 = ssub.s32 %s19, %s38
    %s40 = ssub.s32 %s21, %s30
    %s41 = sor.u32 %s39, %s40
    %s42 = ssub.s32 %s20, %s34
    %s43 = sor.u32 %s41, %s42
    %p44 = scmp.eq.s32.totalorder %s43, 0
    %s46 = sadd.s32 %s45, 1
    %s47 = scalar_select %p44, %s45, %s46
    %p50 = pneg %p44
    %p51 = scmp.eq.s32.totalorder %s12, 15
    %p52 = por %p50, %p51
    %p53 = scmp.ne.s32.totalorder %s45, %s48
    %p54 = scmp.eq.s32.totalorder %s12, 0
    %p55 = por %p53, %p54
    %p56 = scmp.ne.s32.totalorder %s45, %s48
    %p57 = scmp.eq.s32.totalorder %s17, 15
    %p58 = por %p56, %p57
    %p59 = scmp.ne.s32.totalorder %s48, %s49
    %p60 = scmp.eq.s32.totalorder %s17, 0
    %p61 = por %p59, %p60
    %p62 = scmp.ne.s32.totalorder %s48, %s49
    %p63 = scmp.eq.s32.totalorder %s18, 15
    %p64 = por %p62, %p63
    %p66 = scmp.ne.s32.totalorder %s49, %s65
    %p67 = scmp.eq.s32.totalorder %s18, 0
    %p68 = por %p66, %p67
    %s69 = ssub.s32 %s19, %s38
    %s70 = ssub.s32 %s21, %s30
    %s71 = sor.u32 %s69, %s70
    %p72 = scmp.eq.s32.totalorder %s71, 0
    %s74 = sadd.s32 %s73, 1
    %s75 = scalar_select %p72, %s73, %s74
    %p78 = pneg %p72
    %p79 = scmp.eq.s32.totalorder %s12, 15
    %p80 = por %p78, %p79
    %p81 = scmp.ne.s32.totalorder %s73, %s76
    %p82 = scmp.eq.s32.totalorder %s12, 0
    %p83 = por %p81, %p82
    %p84 = scmp.ne.s32.totalorder %s73, %s76
    %p85 = scmp.eq.s32.totalorder %s17, 15
    %p86 = por %p84, %p85
    %p87 = scmp.ne.s32.totalorder %s76, %s77
    %p88 = scmp.eq.s32.totalorder %s17, 0
    %p89 = por %p87, %p88
    %p90 = scmp.ne.s32.totalorder %s76, %s77
    %p91 = scmp.eq.s32.totalorder %s18, 15
    %p92 = por %p90, %p91
    %p94 = scmp.ne.s32.totalorder %s77, %s93
    %p95 = scmp.eq.s32.totalorder %s18, 0
    %p96 = por %p94, %p95
    %s97 = ssub.s32 %s19, %s38
    %s98 = ssub.s32 %s21, %s30
    %s99 = sor.u32 %s97, %s98
    %p100 = scmp.eq.s32.totalorder %s99, 0
    %s102 = sadd.s32 %s101, 1
    %s103 = scalar_select %p100, %s101, %s102
    %p106 = pneg %p100
    %p107 = scmp.eq.s32.totalorder %s12, 15
    %p108 = por %p106, %p107
    %p109 = scmp.ne.s32.totalorder %s101, %s104
    %p110 = scmp.eq.s32.totalorder %s12, 0
    %p111 = por %p109, %p110
    %p112 = scmp.ne.s32.totalorder %s101, %s104
    %p113 = scmp.eq.s32.totalorder %s17, 15
    %p114 = por %p112, %p113
    %p115 = scmp.ne.s32.totalorder %s104, %s105
    %p116 = scmp.eq.s32.totalorder %s17, 0
    %p117 = por %p115, %p116
    %p118 = scmp.ne.s32.totalorder %s104, %s105
    %p119 = scmp.eq.s32.totalorder %s18, 15
    %p120 = por %p118, %p119
    %p122 = scmp.ne.s32.totalorder %s105, %s121
    %p123 = scmp.eq.s32.totalorder %s18, 0
    %p124 = por %p122, %p123
    %s125 = ssub.s32 %s21, %s30
    %p126 = scmp.eq.s32.totalorder %s125, 0
    %s128 = sadd.s32 %s127, 1
    %s129 = scalar_select %p126, %s127, %s128
    %p132 = pneg %p126
    %p133 = scmp.eq.s32.totalorder %s12, 15
    %p134 = por %p132, %p133
    %p135 = scmp.ne.s32.totalorder %s127, %s130
    %p136 = scmp.eq.s32.totalorder %s12, 0
    %p137 = por %p135, %p136
    %p138 = scmp.ne.s32.totalorder %s127, %s130
    %p139 = scmp.eq.s32.totalorder %s17, 15
    %p140 = por %p138, %p139
    %p141 = scmp.ne.s32.totalorder %s130, %s131
    %p142 = scmp.eq.s32.totalorder %s17, 0
    %p143 = por %p141, %p142
    %p144 = scmp.ne.s32.totalorder %s130, %s131
    %p145 = scmp.eq.s32.totalorder %s18, 15
    %p146 = por %p144, %p145
    %p148 = scmp.ne.s32.totalorder %s131, %s147
    %p149 = scmp.eq.s32.totalorder %s18, 0
    %p150 = por %p148, %p149
    %s152 = sadd.s32 %s151, 1
    %p155 = scmp.eq.s32.totalorder %s12, 15
    %p156 = scmp.ne.s32.totalorder %s151, %s153
    %p157 = scmp.eq.s32.totalorder %s12, 0
    %p158 = por %p156, %p157
    %p159 = scmp.ne.s32.totalorder %s151, %s153
    %p160 = scmp.eq.s32.totalorder %s17, 15
    %p161 = por %p159, %p160
    %p162 = scmp.ne.s32.totalorder %s153, %s154
    %p163 = scmp.eq.s32.totalorder %s17, 0
    %p164 = por %p162, %p163
    %p165 = scmp.ne.s32.totalorder %s153, %s154
    %p166 = scmp.eq.s32.totalorder %s18, 15
    %p167 = por %p165, %p166
    %p169 = scmp.ne.s32.totalorder %s154, %s168
    %p170 = scmp.eq.s32.totalorder %s18, 0
    %p171 = por %p169, %p170
    %s172 = ssub.s32 %s19, %s38
    %s173 = ssub.s32 %s20, %s34
    %s174 = sor.u32 %s172, %s173
    %p175 = scmp.eq.s32.totalorder %s174, 0
    %s177 = sadd.s32 %s176, 1
    %s178 = scalar_select %p175, %s176, %s177
    %p181 = pneg %p175
    %p182 = scmp.eq.s32.totalorder %s12, 15
    %p183 = por %p181, %p182
    %p184 = scmp.ne.s32.totalorder %s176, %s179
    %p185 = scmp.eq.s32.totalorder %s12, 0
    %p186 = por %p184, %p185
    %p187 = scmp.ne.s32.totalorder %s176, %s179
    %p188 = scmp.eq.s32.totalorder %s17, 15
    %p189 = por %p187, %p188
    %p190 = scmp.ne.s32.totalorder %s179, %s180
    %p191 = scmp.eq.s32.totalorder %s17, 0
    %p192 = por %p190, %p191
    %p193 = scmp.ne.s32.totalorder %s179, %s180
    %p194 = scmp.eq.s32.totalorder %s18, 15
    %p195 = por %p193, %p194
    %p197 = scmp.ne.s32.totalorder %s180, %s196
    %p198 = scmp.eq.s32.totalorder %s18, 0
    %p199 = por %p197, %p198
    %s200 = ssub.s32 %s19, %s38
    %s201 = ssub.s32 %s20, %s34
    %s202 = sor.u32 %s200, %s201
    %p203 = scmp.eq.s32.totalorder %s202, 0
    %s205 = sadd.s32 %s204, 1
    %s206 = scalar_select %p203, %s204, %s205
    %p209 = pneg %p203
    %p210 = scmp.eq.s32.totalorder %s12, 15
    %p211 = por %p209, %p210
    %p212 = scmp.ne.s32.totalorder %s204, %s207
    %p213 = scmp.eq.s32.totalorder %s12, 0
    %p214 = por %p212, %p213
    %p215 = scmp.ne.s32.totalorder %s204, %s207
    %p216 = scmp.eq.s32.totalorder %s17, 15
    %p217 = por %p215, %p216
    %p218 = scmp.ne.s32.totalorder %s207, %s208
    %p219 = scmp.eq.s32.totalorder %s17, 0
    %p220 = por %p218, %p219
    %p221 = scmp.ne.s32.totalorder %s207, %s208
    %p222 = scmp.eq.s32.totalorder %s18, 15
    %p223 = por %p221, %p222
    %p225 = scmp.ne.s32.totalorder %s208, %s224
    %p226 = scmp.eq.s32.totalorder %s18, 0
    %p227 = por %p225, %p226
    %p228 = scmp.le.s32.totalorder 1, %s12
    %p229 = scmp.lt.s32.totalorder %s12, 17
    %p230 = pnand %p228, %p229
    %p231 = pneg %p230
    // Predicated region
    $region9: #{decoder_forward.24} parent=5 // pred_check
      _
    $region10: #{decoder_forward.24} parent=5 // pred_check_branch
      %233 = sbr.rel (%p230) target = $region12
    $region11: #{decoder_forward.24} parent=5 // pred_region
      %s234 = ssub.s32 %s12, 1
      // Predicated region
      $region13: #{decoder_forward.24} parent=11 // pred_check
        %p235 = pneg %p164
      $region14: #{decoder_forward.24} parent=11 // pred_check_branch
        %237 = sbr.rel (%p235) target = $region16
      $region15: #{decoder_forward.24} parent=11 // pred_region
        _
      $region16: #{decoder_forward.24} parent=11 // pred_fallthru
        _
    $region12: #{decoder_forward.24} parent=5 // pred_fallthru
      _
    %p238 = scmp.lt.s32.totalorder %s12, 16
    // Predicated region
    $region17: #{decoder_forward.24} parent=5 // pred_check
      %p239 = pneg %p238
    $region18: #{decoder_forward.24} parent=5 // pred_check_branch
      %241 = sbr.rel (%p239) target = $region20
    $region19: #{decoder_forward.24} parent=5 // pred_region
      // Predicated region
      $region21: #{decoder_forward.24} parent=19 // pred_check
        %p242 = pneg %p55
      $region22: #{decoder_forward.24} parent=19 // pred_check_branch
        %244 = sbr.rel (%p242) target = $region24
      $region23: #{decoder_forward.24} parent=19 // pred_region
        %p245 = scmp.lt.s32.totalorder %s19, 1
        %s246 = scalar_select %p245, %s19, 1
        %p247 = scmp.lt.s32.totalorder %s21, 7
        %s248 = scalar_select %p247, %s21, 7
        %p249 = scmp.lt.s32.totalorder %s20, 0
        %s250 = scalar_select %p249, %s20, 0
        %s251 = sadd.s32 %s250, %s248
        %s252 = smul.addr %s246, 8
        %s253 = sadd.s32 %s251, %s252
        %s254 = smul.addr %s253, 4
        %s255 = scalar_lea.vmem %s0, %s254
      $region24: #{decoder_forward.24} parent=19 // pred_fallthru
        _
      // Predicated region
      $region25: #{decoder_forward.24} parent=19 // pred_check
        %p256 = pneg %p83
      $region26: #{decoder_forward.24} parent=19 // pred_check_branch
        %258 = sbr.rel (%p256) target = $region28
      $region27: #{decoder_forward.24} parent=19 // pred_region
        %p259 = scmp.lt.s32.totalorder %s19, 1
        %s260 = scalar_select %p259, %s19, 1
        %p261 = scmp.lt.s32.totalorder %s21, 7
        %s262 = scalar_select %p261, %s21, 7
        %s263 = smul.addr %s260, 8
        %s264 = sadd.s32 %s262, %s263
        %s265 = smul.addr %s264, 4
        %s266 = scalar_lea.vmem %s1, %s265
      $region28: #{decoder_forward.24} parent=19 // pred_fallthru
        _
      // Predicated region
      $region29: #{decoder_forward.24} parent=19 // pred_check
        %p267 = pneg %p111
      $region30: #{decoder_forward.24} parent=19 // pred_check_branch
        %269 = sbr.rel (%p267) target = $region32
      $region31: #{decoder_forward.24} parent=19 // pred_region
        %p270 = scmp.lt.s32.totalorder %s19, 1
        %s271 = scalar_select %p270, %s19, 1
        %p272 = scmp.lt.s32.totalorder %s21, 7
        %s273 = scalar_select %p272, %s21, 7
        %s274 = smul.addr %s271, 8
        %s275 = sadd.s32 %s273, %s274
        %s276 = smul.addr %s275, 4
        %s277 = scalar_lea.vmem %s2, %s276
      $region32: #{decoder_forward.24} parent=19 // pred_fallthru
        _
      // Predicated region
      $region33: #{decoder_forward.24} parent=19 // pred_check
        %p278 = pneg %p137
      $region34: #{decoder_forward.24} parent=19 // pred_check_branch
        %280 = sbr.rel (%p278) target = $region36
      $region35: #{decoder_forward.24} parent=19 // pred_region
        %p281 = scmp.lt.s32.totalorder %s21, 7
        %s282 = scalar_select %p281, %s21, 7
        %s283 = smul.addr %s282, 4
        %s284 = scalar_lea.vmem %s3, %s283
      $region36: #{decoder_forward.24} parent=19 // pred_fallthru
        _
      // Predicated region
      $region37: #{decoder_forward.24} parent=19 // pred_check
        %p285 = pneg %p186
      $region38: #{decoder_forward.24} parent=19 // pred_check_branch
        %287 = sbr.rel (%p285) target = $region40
      $region39: #{decoder_forward.24} parent=19 // pred_region
        %p288 = scmp.lt.s32.totalorder %s19, 1
        %s289 = scalar_select %p288, %s19, 1
        %p290 = scmp.lt.s32.totalorder %s20, 0
        %s291 = scalar_select %p290, %s20, 0
        %s292 = sadd.s32 %s291, %s289
        %s293 = smul.addr %s292, 8
        %s294 = scalar_lea.vmem %s5, %s293
      $region40: #{decoder_forward.24} parent=19 // pred_fallthru
        _
    $region20: #{decoder_forward.24} parent=5 // pred_fallthru
      _
    %p295 = scmp.le.s32.totalorder 1, %s12
    %p296 = scmp.lt.s32.totalorder %s12, 17
    %p297 = pnand %p295, %p296
    %p298 = pneg %p297
    // Predicated region
    $region41: #{decoder_forward.24} parent=5 // pred_check
      _
    $region42: #{decoder_forward.24} parent=5 // pred_check_branch
      %300 = sbr.rel (%p297) target = $region44
    $region43: #{decoder_forward.24} parent=5 // pred_region
      %s301 = ssub.s32 %s12, 1
      %p302 = scmp.lt.s32.totalorder %s22, 1
      %s303 = scalar_select %p302, %s22, 1
      %p304 = scmp.lt.s32.totalorder %s24, 7
      %s305 = scalar_select %p304, %s24, 7
      %p306 = scmp.lt.s32.totalorder %s23, 0
      %s307 = scalar_select %p306, %s23, 0
      %s308 = sadd.s32 %s307, %s305
      %s309 = smul.addr %s303, 8
      %s310 = sadd.s32 %s308, %s309
      %s311 = smul.addr %s310, 4
      %s312 = scalar_lea.vmem %s0, %s311
      %p313 = pneg %p61
      %p314 = pneg %p58
      %p315 = scmp.lt.s32.totalorder %s22, 1
      %s316 = scalar_select %p315, %s22, 1
      %p317 = scmp.lt.s32.totalorder %s24, 7
      %s318 = scalar_select %p317, %s24, 7
      %s319 = smul.addr %s316, 8
      %s320 = sadd.s32 %s318, %s319
      %s321 = smul.addr %s320, 4
      %s322 = scalar_lea.vmem %s1, %s321
      %p323 = pneg %p89
      %p324 = pneg %p86
      %p325 = scmp.lt.s32.totalorder %s22, 1
      %s326 = scalar_select %p325, %s22, 1
      %p327 = scmp.lt.s32.totalorder %s24, 7
      %s328 = scalar_select %p327, %s24, 7
      %s329 = smul.addr %s326, 8
      %s330 = sadd.s32 %s328, %s329
      %s331 = smul.addr %s330, 4
      %s332 = scalar_lea.vmem %s2, %s331
      %p333 = pneg %p117
      %p334 = pneg %p114
      %p335 = scmp.lt.s32.totalorder %s24, 7
      %s336 = scalar_select %p335, %s24, 7
      %s337 = smul.addr %s336, 4
      %s338 = scalar_lea.vmem %s3, %s337
      %p339 = pneg %p143
      %p340 = pneg %p140
      %p341 = pneg %p164
      %p342 = pneg %p161
      %p343 = scmp.lt.s32.totalorder %s22, 1
      %s344 = scalar_select %p343, %s22, 1
      %p345 = scmp.lt.s32.totalorder %s23, 0
      %s346 = scalar_select %p345, %s23, 0
      %s347 = sadd.s32 %s346, %s344
      %s348 = smul.addr %s347, 8
      %s349 = scalar_lea.vmem %s5, %s348
      %p350 = pneg %p192
      %p351 = pneg %p189
      %p352 = pneg %p220
      %p353 = pneg %p217
      %p354 = scmp.lt.s32.totalorder %s22, 1
      %s355 = scalar_select %p354, %s22, 1
      %p356 = scmp.lt.s32.totalorder %s23, 0
      %s357 = scalar_select %p356, %s23, 0
      %s358 = sadd.s32 %s357, %s355
      %s359 = smul.addr %s358, 8
      %s360 = scalar_lea.vmem %s6, %s359
      %p361 = scmp.lt.s32.totalorder %s22, 1
      %s362 = scalar_select %p361, %s22, 1
      %p363 = scmp.lt.s32.totalorder %s24, 7
      %s364 = scalar_select %p363, %s24, 7
      %p365 = scmp.lt.s32.totalorder %s23, 0
      %s366 = scalar_select %p365, %s23, 0
      %s367 = sadd.s32 %s366, %s364
      %s368 = smul.addr %s362, 8
      %s369 = sadd.s32 %s367, %s368
      %s370 = smul.addr %s369, 4
      %s371 = scalar_lea.vmem %s0, %s370
      %p372 = scmp.lt.s32.totalorder %s22, 1
      %s373 = scalar_select %p372, %s22, 1
      %p374 = scmp.lt.s32.totalorder %s24, 7
      %s375 = scalar_select %p374, %s24, 7
      %s376 = smul.addr %s373, 8
      %s377 = sadd.s32 %s375, %s376
      %s378 = smul.addr %s377, 4
      %s379 = scalar_lea.vmem %s1, %s378
      %p380 = scmp.lt.s32.totalorder %s22, 1
      %s381 = scalar_select %p380, %s22, 1
      %p382 = scmp.lt.s32.totalorder %s24, 7
      %s383 = scalar_select %p382, %s24, 7
      %s384 = smul.addr %s381, 8
      %s385 = sadd.s32 %s383, %s384
      %s386 = smul.addr %s385, 4
      %s387 = scalar_lea.vmem %s2, %s386
      %p388 = scmp.lt.s32.totalorder %s24, 7
      %s389 = scalar_select %p388, %s24, 7
      %s390 = smul.addr %s389, 4
      %s391 = scalar_lea.vmem %s3, %s390
      %p392 = scmp.lt.s32.totalorder %s22, 1
      %s393 = scalar_select %p392, %s22, 1
      %p394 = scmp.lt.s32.totalorder %s23, 0
      %s395 = scalar_select %p394, %s23, 0
      %s396 = sadd.s32 %s395, %s393
      %s397 = smul.addr %s396, 8
      %s398 = scalar_lea.vmem %s5, %s397
      %p399 = scmp.lt.s32.totalorder %s22, 1
      %s400 = scalar_select %p399, %s22, 1
      %p401 = scmp.lt.s32.totalorder %s23, 0
      %s402 = scalar_select %p401, %s23, 0
      %s403 = sadd.s32 %s402, %s400
      %s404 = smul.addr %s403, 8
      %s405 = scalar_lea.vmem %s6, %s404
      %v407 = vld [vmem:[%s371] sm:$0xf]
      %v408 = vld [vmem:[%s379] sm:$0xf]
      %v409 = vld [vmem:[%s387] sm:$0xf]
      %vm410 = vcmask 64512
      %v412 = vsel %vm410, %v407, 0
      %v415 = vsel %vm410, %v408, 0
      %417 = vmatprep.subr.bf16.mxu0 0
      %418 = vmatpush1.bf16.xpose.msra.mxu0 %v415
      %419 = vmatprep.subr.bf16.mxu0 0
      %420 = vmatpush1.bf16.xpose.msra.mxu0 0
      %421 = vmatprep.subr.bf16.mxu0 0
      %422 = vmatpush1.bf16.xpose.msra.mxu0 0
      %423 = vmatprep.subr.bf16.mxu0 0
      %424 = vmatpush1.bf16.xpose.msra.mxu0 0
      %425 = vmatprep.subr.bf16.mxu0 0
      %426 = vmatpush1.bf16.xpose.msra.mxu0 0
      %427 = vmatprep.subr.bf16.mxu0 0
      %428 = vmatpush1.bf16.xpose.msra.mxu0 0
      %429 = vmatprep.subr.bf16.mxu0 0
      %430 = vmatpush1.bf16.xpose.msra.mxu0 0
      %431 = vmatprep.subr.bf16.mxu0 0
      %432 = vmatpush1.bf16.xpose.msra.mxu0 0
      %433 = vmatprep.subr.bf16.mxu0 0
      %434 = vmatpush1.bf16.xpose.msra.mxu0 0
      %435 = vmatprep.subr.bf16.mxu0 0
      %436 = vmatpush1.bf16.xpose.msra.mxu0 0
      %437 = vmatprep.subr.bf16.mxu0 0
      %438 = vmatpush1.bf16.xpose.msra.mxu0 0
      %439 = vmatprep.subr.bf16.mxu0 0
      %440 = vmatpush1.bf16.xpose.msra.mxu0 0
      %441 = vmatprep.subr.bf16.mxu0 0
      %442 = vmatpush1.bf16.xpose.msra.mxu0 0
      %443 = vmatprep.subr.bf16.mxu0 0
      %444 = vmatpush1.bf16.xpose.msra.mxu0 0
      %445 = vmatprep.subr.bf16.mxu0 0
      %446 = vmatpush1.bf16.xpose.msra.mxu0 0
      %447 = vmatprep.subr.bf16.mxu0 0
      %448 = vmatpush1.bf16.xpose.msra.mxu0 0
      %449 = vmatprep.mubr.bf16.mxu0 0
      %450 = vmatmul.mubr.bf16.gmra.mrb[0].mxu0 %v412
      %v451 = vpop.f32.mrb[0].mxu0
      %v452 = vadd.f32 0.0, %v451
      %v453 = vpop.f32.mrb[0].mxu0
      %v454 = vpop.f32.mrb[0].mxu0
      %v455 = vpop.f32.mrb[0].mxu0
      %456 = vdwg.mxu0
      %v457 = vmul.f32 %v452, 0.35355338
      %v458 = vsel %vm410, %v457, -inf
      %459 = vmax.xlane.f32.xlu0 %v458
      %v460 = vpop.xlane.xlu0 %459
      %v461 = vsub.f32 %v457, %v460
      %v462 = vmul.f32 %v461, 1.442695
      %v463 = vpow.pop %v462
      %v464 = vsel %vm410, %v463, 0.0
      %465 = vadd.xlane.f32.xlu0 %v464
      %v466 = vpop.xlane.xlu0 %465
      %v467 = vrcp.pop %v466
      %v468 = vmul.f32 %v463, %v467
      %v469 = vpack.c.bf16 %v468, %v468
      %v471 = vsel %vm410, %v469, 0
      %vm473 = vcmask 1043456
      %v475 = vsel %vm473, %v409, 0
      %477 = vmatprep.subr.bf16.mxu0 0
      %478 = vmatpush1.bf16.msra.mxu0 %v475
      %479 = vmatprep.subr.bf16.mxu0 0
      %480 = vmatpush1.bf16.msra.mxu0 0
      %481 = vmatprep.subr.bf16.mxu0 0
      %482 = vmatpush1.bf16.msra.mxu0 0
      %483 = vmatprep.subr.bf16.mxu0 0
      %484 = vmatpush1.bf16.msra.mxu0 0
      %485 = vmatprep.subr.bf16.mxu0 0
      %486 = vmatpush1.bf16.msra.mxu0 0
      %487 = vmatprep.subr.bf16.mxu0 0
      %488 = vmatpush1.bf16.msra.mxu0 0
      %489 = vmatprep.subr.bf16.mxu0 0
      %490 = vmatpush1.bf16.msra.mxu0 0
      %491 = vmatprep.subr.bf16.mxu0 0
      %492 = vmatpush1.bf16.msra.mxu0 0
      %493 = vmatprep.subr.bf16.mxu0 0
      %494 = vmatpush1.bf16.msra.mxu0 0
      %495 = vmatprep.subr.bf16.mxu0 0
      %496 = vmatpush1.bf16.msra.mxu0 0
      %497 = vmatprep.subr.bf16.mxu0 0
      %498 = vmatpush1.bf16.msra.mxu0 0
      %499 = vmatprep.subr.bf16.mxu0 0
      %500 = vmatpush1.bf16.msra.mxu0 0
      %501 = vmatprep.subr.bf16.mxu0 0
      %502 = vmatpush1.bf16.msra.mxu0 0
      %503 = vmatprep.subr.bf16.mxu0 0
      %504 = vmatpush1.bf16.msra.mxu0 0
      %505 = vmatprep.subr.bf16.mxu0 0
      %506 = vmatpush1.bf16.msra.mxu0 0
      %507 = vmatprep.subr.bf16.mxu0 0
      %508 = vmatpush1.bf16.msra.mxu0 0
      %509 = vmatprep.mubr.bf16.mxu0 0
      %510 = vmatmul.mubr.bf16.gmra.mrb[0].mxu0 %v471
      %v511 = vpop.f32.mrb[0].mxu0
      %v512 = vadd.f32 0.0, %v511
      %v513 = vpop.f32.mrb[0].mxu0
      %v514 = vpop.f32.mrb[0].mxu0
      %v515 = vpop.f32.mrb[0].mxu0
      %516 = vdwg.mxu0
      %v517 = vpack.c.bf16 %v512, %v512
      %v518 = vld [vmem:[%s391] sm:$0xf]
      %v520 = vsel %vm410, %v517, 0
      %v523 = vsel %vm473, %v518, 0
      %525 = vmatprep.subr.bf16.mxu0 0
      %526 = vmatpush1.bf16.msra.mxu0 %v523
      %527 = vmatprep.subr.bf16.mxu0 0
      %528 = vmatpush1.bf16.msra.mxu0 0
      %529 = vmatprep.subr.bf16.mxu0 0
      %530 = vmatpush1.bf16.msra.mxu0 0
      %531 = vmatprep.subr.bf16.mxu0 0
      %532 = vmatpush1.bf16.msra.mxu0 0
      %533 = vmatprep.subr.bf16.mxu0 0
      %534 = vmatpush1.bf16.msra.mxu0 0
      %535 = vmatprep.subr.bf16.mxu0 0
      %536 = vmatpush1.bf16.msra.mxu0 0
      %537 = vmatprep.subr.bf16.mxu0 0
      %538 = vmatpush1.bf16.msra.mxu0 0
      %539 = vmatprep.subr.bf16.mxu0 0
      %540 = vmatpush1.bf16.msra.mxu0 0
      %541 = vmatprep.subr.bf16.mxu0 0
      %542 = vmatpush1.bf16.msra.mxu0 0
      %543 = vmatprep.subr.bf16.mxu0 0
      %544 = vmatpush1.bf16.msra.mxu0 0
      %545 = vmatprep.subr.bf16.mxu0 0
      %546 = vmatpush1.bf16.msra.mxu0 0
      %547 = vmatprep.subr.bf16.mxu0 0
      %548 = vmatpush1.bf16.msra.mxu0 0
      %549 = vmatprep.subr.bf16.mxu0 0
      %550 = vmatpush1.bf16.msra.mxu0 0
      %551 = vmatprep.subr.bf16.mxu0 0
      %552 = vmatpush1.bf16.msra.mxu0 0
      %553 = vmatprep.subr.bf16.mxu0 0
      %554 = vmatpush1.bf16.msra.mxu0 0
      %555 = vmatprep.subr.bf16.mxu0 0
      %556 = vmatpush1.bf16.msra.mxu0 0
      %557 = vmatprep.mubr.bf16.mxu0 0
      %558 = vmatmul.mubr.bf16.gmra.mrb[0].mxu0 %v520
      %v559 = vpop.f32.mrb[0].mxu0
      %v560 = vadd.f32 0.0, %v559
      %v561 = vpop.f32.mrb[0].mxu0
      %v562 = vpop.f32.mrb[0].mxu0
      %v563 = vpop.f32.mrb[0].mxu0
      %564 = vdwg.mxu0
      %p565 = scmp.eq.s32.totalorder %s24, 0
      // Predicated region
      $region45: #{decoder_forward.24} parent=43 // pred_check
        %p566 = pneg %p565
      $region46: #{decoder_forward.24} parent=43 // pred_check_branch
        %568 = sbr.rel (%p566) target = $region48
      $region47: #{decoder_forward.24} parent=43 // pred_region
        %vm569 = vcmask 523264
        %570 = vst.msk [vmem:[%s405] sm:$0xff] %vm569, %v560
      $region48: #{decoder_forward.24} parent=43 // pred_fallthru
        _
      %p571 = scmp.gt.s32.totalorder %s24, 0
      // Predicated region
      $region49: #{decoder_forward.24} parent=43 // pred_check
        %p572 = pneg %p571
      $region50: #{decoder_forward.24} parent=43 // pred_check_branch
        %574 = sbr.rel (%p572) target = $region52
      $region51: #{decoder_forward.24} parent=43 // pred_region
        %v575 = vld [vmem:[%s405] sm:$0xff]
        %v576 = vadd.f32 %v575, %v560
        %vm577 = vcmask 523264
        %578 = vst.msk [vmem:[%s405] sm:$0xff] %vm577, %v576
      $region52: #{decoder_forward.24} parent=43 // pred_fallthru
        _
      %p579 = scmp.eq.s32.totalorder %s24, 7
      // Predicated region
      $region53: #{decoder_forward.24} parent=43 // pred_check
        %p580 = pneg %p579
      $region54: #{decoder_forward.24} parent=43 // pred_check_branch
        %582 = sbr.rel (%p580) target = $region56
      $region55: #{decoder_forward.24} parent=43 // pred_region
        %v583 = vld [vmem:[%s405] sm:$0xff]
        %v584 = vld [vmem:[%s4] sm:$0x1]
        %v586 = vlaneseq
        %v587 = vshrl.u32 %v586, 7
        %v588 = vsub.s32 0, %v587
        %v589 = vrot.slane %v584, %v588
        %v591 = vadd.f32 %v583, %v589
        %v592 = vld [vmem:[%s398] sm:$0xff]
        %v593 = vadd.f32 %v591, %v592
        %vm594 = vcmask 523264
        %595 = vst.msk [vmem:[%s405] sm:$0xff] %vm594, %v593
      $region56: #{decoder_forward.24} parent=43 // pred_fallthru
        _
      %p596 = scmp.lt.s32.totalorder %s22, 1
      %s597 = scalar_select %p596, %s22, 1
      %p598 = scmp.lt.s32.totalorder %s23, 0
      %s599 = scalar_select %p598, %s23, 0
      %s600 = sadd.s32 %s599, %s597
      %s601 = smul.addr %s600, 8
      %s602 = scalar_lea.vmem %s6, %s601
      // Predicated region
      $region57: #{decoder_forward.24} parent=43 // pred_check
        %p603 = pneg %p217
      $region58: #{decoder_forward.24} parent=43 // pred_check_branch
        %605 = sbr.rel (%p603) target = $region60
      $region59: #{decoder_forward.24} parent=43 // pred_region
        _
      $region60: #{decoder_forward.24} parent=43 // pred_fallthru
        _
    $region44: #{decoder_forward.24} parent=5 // pred_fallthru
      _
    %p606 = scmp.le.s32.totalorder 2, %s12
    // Predicated region
    $region61: #{decoder_forward.24} parent=5 // pred_check
      %p607 = pneg %p606
    $region62: #{decoder_forward.24} parent=5 // pred_check_branch
      %609 = sbr.rel (%p607) target = $region64
    $region63: #{decoder_forward.24} parent=5 // pred_region
      %s610 = ssub.s32 %s12, 2
      // Predicated region
      $region65: #{decoder_forward.24} parent=63 // pred_check
        %p611 = pneg %p223
      $region66: #{decoder_forward.24} parent=63 // pred_check_branch
        %613 = sbr.rel (%p611) target = $region68
      $region67: #{decoder_forward.24} parent=63 // pred_region
        %p614 = scmp.lt.s32.totalorder %s25, 1
        %s615 = scalar_select %p614, %s25, 1
        %p616 = scmp.lt.s32.totalorder %s26, 0
        %s617 = scalar_select %p616, %s26, 0
        %s618 = sadd.s32 %s617, %s615
        %s619 = smul.addr %s618, 8
        %s620 = scalar_lea.vmem %s6, %s619
      $region68: #{decoder_forward.24} parent=63 // pred_fallthru
        _
    $region64: #{decoder_forward.24} parent=5 // pred_fallthru
      _
  $region6: #{decoder_forward.24} parent=0 // loop_footer
    %s16 = sadd.s32 1, %s12
  $region7: #{decoder_forward.24} parent=0 // loop_footer_branch
    %11 = sbr.rel target = $region3
  $region8: #{decoder_forward.24} parent=0 // loop_exit
    _

// kernel: decoder_forward.26
$region0: #{decoder_forward.26}
  #allocation0 [shape = 'u32[]', space=smem, size = 0x4, offset = 0x4, fixed_abs, tag = 'smem constant byte address 0x4 - core index']
  #allocation1 [shape = 'u32[144,128]{1,0:T(1,128)}', space=vmem, size = 0x12000, scoped, tag = 'internal scratch']
  #allocation2 [shape = 'f32[16,256]{1,0:T(8,128)}', space=vmem, size = 0x4000, scoped, tag = 'scratch operand']
  %s0 = inlined_call_operand.vmem [shape: f32[16,64], index: 0, kind: input, shape index: {}]
  %s1 = inlined_call_operand.vmem [shape: f32[16,1], index: 1, kind: input, shape index: {}]
  %s2 = inlined_call_operand.vmem [shape: f32[16,1], index: 2, kind: input, shape index: {}]
  %s3 = inlined_call_operand.vmem [shape: f32[1,64], index: 3, kind: input, shape index: {}]
  %s4 = inlined_call_operand.vmem [shape: f32[1,64], index: 4, kind: input, shape index: {}]
  %s5 = inlined_call_operand.vmem [shape: bf16[64,256], index: 5, kind: input, shape index: {}]
  %s6 = inlined_call_operand.vmem [shape: f32[1,256], index: 6, kind: input, shape index: {}]
  %s7 = inlined_call_operand.vmem [shape: bf16[16,256], index: 7, kind: output, shape index: {}]
  %s8 = sld [smem:[#allocation0]]
  $region50: #{decoder_forward.26} parent=0
    _
  %s10 = ssub.s32 1, %s8
  %s11 = scalar_select 0, %s10, %s8
  // Predicated region
  $region2: #{decoder_forward.26} parent=0 // pred_check
    _
  $region3: #{decoder_forward.26} parent=0 // pred_check_branch
    %13 = sbr.rel (0) target = $region5
  $region4: #{decoder_forward.26} parent=0 // pred_region
    _
  $region5: #{decoder_forward.26} parent=0 // pred_fallthru
    _
  // Predicated region
  $region6: #{decoder_forward.26} parent=0 // pred_check
    _
  $region7: #{decoder_forward.26} parent=0 // pred_check_branch
    %15 = sbr.rel (0) target = $region9
  $region8: #{decoder_forward.26} parent=0 // pred_region
    _
  $region9: #{decoder_forward.26} parent=0 // pred_fallthru
    _
  // Predicated region
  $region10: #{decoder_forward.26} parent=0 // pred_check
    _
  $region11: #{decoder_forward.26} parent=0 // pred_check_branch
    %17 = sbr.rel (0) target = $region13
  $region12: #{decoder_forward.26} parent=0 // pred_region
    _
  $region13: #{decoder_forward.26} parent=0 // pred_fallthru
    _
  // Predicated region
  $region14: #{decoder_forward.26} parent=0 // pred_check
    _
  $region15: #{decoder_forward.26} parent=0 // pred_check_branch
    %19 = sbr.rel (0) target = $region17
  $region16: #{decoder_forward.26} parent=0 // pred_region
    _
  $region17: #{decoder_forward.26} parent=0 // pred_fallthru
    _
  // Predicated region
  $region18: #{decoder_forward.26} parent=0 // pred_check
    _
  $region19: #{decoder_forward.26} parent=0 // pred_check_branch
    %21 = sbr.rel (0) target = $region21
  $region20: #{decoder_forward.26} parent=0 // pred_region
    _
  $region21: #{decoder_forward.26} parent=0 // pred_fallthru
    _
  // Predicated region
  $region22: #{decoder_forward.26} parent=0 // pred_check
    _
  $region23: #{decoder_forward.26} parent=0 // pred_check_branch
    %23 = sbr.rel (0) target = $region25
  $region24: #{decoder_forward.26} parent=0 // pred_region
    _
  $region25: #{decoder_forward.26} parent=0 // pred_fallthru
    _
  // Predicated region
  $region26: #{decoder_forward.26} parent=0 // pred_check
    _
  $region27: #{decoder_forward.26} parent=0 // pred_check_branch
    %25 = sbr.rel (0) target = $region29
  $region28: #{decoder_forward.26} parent=0 // pred_region
    _
  $region29: #{decoder_forward.26} parent=0 // pred_fallthru
    _
  %v27 = vld [vmem:[%s0] sm:$0xff]
  %v28 = vld [vmem:[%s0 + $0x8] sm:$0xff]
  %v29 = vld [vmem:[%s1] sm:$0xff]
  %v30 = vld [vmem:[%s1 + $0x8] sm:$0xff]
  %32 = vset.pattern.permute.xlu0 0
  %33 = vperm.xlu0 %32, %v29
  %v34 = vpop.permute.xlu0 %33
  %37 = vset.pattern.permute.xlu0 0
  %38 = vperm.xlu0 %37, %v30
  %v39 = vpop.permute.xlu0 %38
  %v41 = vsub.f32 %v27, %v34
  %v42 = vsub.f32 %v28, %v39
  %v43 = vld [vmem:[%s2] sm:$0xff]
  %v44 = vld [vmem:[%s2 + $0x8] sm:$0xff]
  %46 = vset.pattern.permute.xlu0 0
  %47 = vperm.xlu0 %46, %v43
  %v48 = vpop.permute.xlu0 %47
  %51 = vset.pattern.permute.xlu0 0
  %52 = vperm.xlu0 %51, %v44
  %v53 = vpop.permute.xlu0 %52
  %v55 = vmul.f32 %v41, %v48
  %v56 = vmul.f32 %v42, %v53
  %v57 = vld [vmem:[%s3] sm:$0x1]
  %v59 = vlaneseq
  %v60 = vshrl.u32 %v59, 7
  %v61 = vsub.s32 0, %v60
  %v62 = vrot.slane %v57, %v61
  %v64 = vmul.f32 %v55, %v62
  %v65 = vmul.f32 %v56, %v62
  %v66 = vld [vmem:[%s4] sm:$0x1]
  %v68 = vlaneseq
  %v69 = vshrl.u32 %v68, 7
  %v70 = vsub.s32 0, %v69
  %v71 = vrot.slane %v66, %v70
  %v73 = vadd.f32 %v64, %v71
  %v74 = vadd.f32 %v65, %v71
  %v75 = vpack.c.bf16 %v74, %v73
  %v76 = vld [vmem:[%s5] sm:$0xff]
  %v77 = vld [vmem:[%s5 + $0x8] sm:$0xff]
  %v78 = vld [vmem:[%s5 + $0x10] sm:$0xff]
  %v79 = vld [vmem:[%s5 + $0x18] sm:$0xff]
  %v80 = vld [vmem:[%s5 + $0x20] sm:$0xff]
  %v81 = vld [vmem:[%s5 + $0x28] sm:$0xff]
  %v82 = vld [vmem:[%s5 + $0x30] sm:$0xff]
  %v83 = vld [vmem:[%s5 + $0x38] sm:$0xff]
  %v92 = vunpack.c.l.b16 %v76
  %v93 = vunpack.c.h.b16 %v76
  %v94 = vunpack.c.l.b16 %v77
  %v95 = vunpack.c.h.b16 %v77
  %v96 = vunpack.c.l.b16 %v78
  %v97 = vunpack.c.h.b16 %v78
  %v98 = vunpack.c.l.b16 %v79
  %v99 = vunpack.c.h.b16 %v79
  %v100 = vunpack.c.l.b16 %v80
  %v101 = vunpack.c.h.b16 %v80
  %v102 = vunpack.c.l.b16 %v81
  %v103 = vunpack.c.h.b16 %v81
  %v104 = vunpack.c.l.b16 %v82
  %v105 = vunpack.c.h.b16 %v82
  %v106 = vunpack.c.l.b16 %v83
  %v107 = vunpack.c.h.b16 %v83
  %v108 = vpack.c.b16 %v94, %v92
  %v109 = vpack.c.b16 %v95, %v93
  %v110 = vpack.c.b16 %v98, %v96
  %v111 = vpack.c.b16 %v99, %v97
  %v112 = vpack.c.b16 %v102, %v100
  %v113 = vpack.c.b16 %v103, %v101
  %v114 = vpack.c.b16 %v106, %v104
  %v115 = vpack.c.b16 %v107, %v105
  %vm124 = vcmask 523264
  %v126 = vsel %vm124, %v75, 0
  %128 = vmatprep.subr.bf16.mxu0 %v109
  %129 = vmatpush1.bf16.msra.mxu0 %v108
  %130 = vmatprep.subr.bf16.mxu0 %v111
  %131 = vmatpush1.bf16.msra.mxu0 %v110
  %132 = vmatprep.subr.bf16.mxu0 %v113
  %133 = vmatpush1.bf16.msra.mxu0 %v112
  %134 = vmatprep.subr.bf16.mxu0 %v115
  %135 = vmatpush1.bf16.msra.mxu0 %v114
  %136 = vmatprep.subr.bf16.mxu0 0
  %137 = vmatpush1.bf16.msra.mxu0 0
  %138 = vmatprep.subr.bf16.mxu0 0
  %139 = vmatpush1.bf16.msra.mxu0 0
  %140 = vmatprep.subr.bf16.mxu0 0
  %141 = vmatpush1.bf16.msra.mxu0 0
  %142 = vmatprep.subr.bf16.mxu0 0
  %143 = vmatpush1.bf16.msra.mxu0 0
  %144 = vmatprep.subr.bf16.mxu0 0
  %145 = vmatpush1.bf16.msra.mxu0 0
  %146 = vmatprep.subr.bf16.mxu0 0
  %147 = vmatpush1.bf16.msra.mxu0 0
  %148 = vmatprep.subr.bf16.mxu0 0
  %149 = vmatpush1.bf16.msra.mxu0 0
  %150 = vmatprep.subr.bf16.mxu0 0
  %151 = vmatpush1.bf16.msra.mxu0 0
  %152 = vmatprep.subr.bf16.mxu0 0
  %153 = vmatpush1.bf16.msra.mxu0 0
  %154 = vmatprep.subr.bf16.mxu0 0
  %155 = vmatpush1.bf16.msra.mxu0 0
  %156 = vmatprep.subr.bf16.mxu0 0
  %157 = vmatpush1.bf16.msra.mxu0 0
  %158 = vmatprep.subr.bf16.mxu0 0
  %159 = vmatpush1.bf16.msra.mxu0 0
  %160 = vmatprep.mubr.bf16.mxu0 0
  %161 = vmatmul.mubr.bf16.gmra.mrb[0].mxu0 %v126
  %v162 = vpop.f32.mrb[0].mxu0
  %v163 = vadd.f32 0.0, %v162
  %v164 = vpop.f32.mrb[0].mxu0
  %v165 = vadd.f32 0.0, %v164
  %v166 = vpop.f32.mrb[0].mxu0
  %v167 = vadd.f32 0.0, %v166
  %v168 = vpop.f32.mrb[0].mxu0
  %v169 = vadd.f32 0.0, %v168
  %170 = vdwg.mxu0
  %p171 = scmp.eq.s32.totalorder 0, 0
  // Predicated region
  $region30: #{decoder_forward.26} parent=0 // pred_check
    %p172 = pneg %p171
  $region31: #{decoder_forward.26} parent=0 // pred_check_branch
    %174 = sbr.rel (%p172) target = $region33
  $region32: #{decoder_forward.26} parent=0 // pred_region
    %175 = vst [vmem:[#allocation2] sm:$0xff] %v163
    %176 = vst [vmem:[#allocation2 + $0x8] sm:$0xff] %v165
    %177 = vst [vmem:[#allocation2 + $0x10] sm:$0xff] %v167
    %178 = vst [vmem:[#allocation2 + $0x18] sm:$0xff] %v169
  $region33: #{decoder_forward.26} parent=0 // pred_fallthru
    _
  %p179 = scmp.gt.s32.totalorder 0, 0
  // Predicated region
  $region34: #{decoder_forward.26} parent=0 // pred_check
    %p180 = pneg %p179
  $region35: #{decoder_forward.26} parent=0 // pred_check_branch
    %182 = sbr.rel (%p180) target = $region37
  $region36: #{decoder_forward.26} parent=0 // pred_region
    %v183 = vld [vmem:[#allocation2] sm:$0xff]
    %v184 = vld [vmem:[#allocation2 + $0x8] sm:$0xff]
    %v185 = vld [vmem:[#allocation2 + $0x10] sm:$0xff]
    %v186 = vld [vmem:[#allocation2 + $0x18] sm:$0xff]
    %v187 = vadd.f32 %v183, %v163
    %v188 = vadd.f32 %v184, %v165
    %v189 = vadd.f32 %v185, %v167
    %v190 = vadd.f32 %v186, %v169
    %191 = vst [vmem:[#allocation2] sm:$0xff] %v187
    %192 = vst [vmem:[#allocation2 + $0x8] sm:$0xff] %v188
    %193 = vst [vmem:[#allocation2 + $0x10] sm:$0xff] %v189
    %194 = vst [vmem:[#allocation2 + $0x18] sm:$0xff] %v190
  $region37: #{decoder_forward.26} parent=0 // pred_fallthru
    _
  // Predicated region
  $region38: #{decoder_forward.26} parent=0 // pred_check
    %p195 = pneg %p171
  $region39: #{decoder_forward.26} parent=0 // pred_check_branch
    %197 = sbr.rel (%p195) target = $region41
  $region40: #{decoder_forward.26} parent=0 // pred_region
    %v198 = vld [vmem:[#allocation2] sm:$0xff]
    %v199 = vld [vmem:[#allocation2 + $0x8] sm:$0xff]
    %v200 = vld [vmem:[#allocation2 + $0x10] sm:$0xff]
    %v201 = vld [vmem:[#allocation2 + $0x18] sm:$0xff]
    %v202 = vld [vmem:[%s6] sm:$0x3]
    %v204 = vlaneseq
    %v205 = vshrl.u32 %v204, 7
    %v206 = vsub.s32 0, %v205
    %v207 = vrot.slane %v202, %v206
    %v208 = vlaneseq
    %v209 = vshrl.u32 %v208, 7
    %v210 = vsub.s32 1, %v209
    %v211 = vrot.slane %v202, %v210
    %v214 = vadd.f32 %v198, %v207
    %v215 = vadd.f32 %v199, %v211
    %v216 = vadd.f32 %v200, %v207
    %v217 = vadd.f32 %v201, %v211
    %v218 = vmax.f32 %v214, 0.0
    %v219 = vmax.f32 %v215, 0.0
    %v220 = vmax.f32 %v216, 0.0
    %v221 = vmax.f32 %v217, 0.0
    %v222 = vpack.c.bf16 %v220, %v218
    %v223 = vpack.c.bf16 %v221, %v219
    %v226 = vunpack.c.l.b16 %v222
    %v227 = vunpack.c.l.b16 %v223
    %v228 = vunpack.c.h.b16 %v222
    %v229 = vunpack.c.h.b16 %v223
    %v230 = vpack.c.b16 %v227, %v226
    %v231 = vpack.c.b16 %v229, %v228
    %234 = vst [vmem:[%s7] sm:$0xff] %v230
    %235 = vst [vmem:[%s7 + $0x8] sm:$0xff] %v231
  $region41: #{decoder_forward.26} parent=0 // pred_fallthru
    _
  // Predicated region
  $region42: #{decoder_forward.26} parent=0 // pred_check
    _
  $region43: #{decoder_forward.26} parent=0 // pred_check_branch
    %237 = sbr.rel (0) target = $region45
  $region44: #{decoder_forward.26} parent=0 // pred_region
    _
  $region45: #{decoder_forward.26} parent=0 // pred_fallthru
    _
  // Predicated region
  $region46: #{decoder_forward.26} parent=0 // pred_check
    _
  $region47: #{decoder_forward.26} parent=0 // pred_check_branch
    %239 = sbr.rel (0) target = $region49
  $region48: #{decoder_forward.26} parent=0 // pred_region
    _
  $region49: #{decoder_forward.26} parent=0 // pred_fallthru
    _

// kernel: decoder_forward.37
$region0: #{decoder_forward.37}
  #allocation0 [shape = 'u32[]', space=smem, size = 0x4, offset = 0x4, fixed_abs, tag = 'smem constant byte address 0x4 - core index']
  #allocation1 [shape = 'u32[144,128]{1,0:T(1,128)}', space=vmem, size = 0x12000, scoped, tag = 'internal scratch']
  %s0 = inlined_call_operand.vmem [shape: f32[16,64], index: 0, kind: input, shape index: {}]
  %s1 = inlined_call_operand.vmem [shape: f32[1,64], index: 1, kind: input, shape index: {}]
  %s2 = inlined_call_operand.vmem [shape: f32[1,64], index: 2, kind: input, shape index: {}]
  %s3 = inlined_call_operand.hbm [shape: f32[16,64], index: 3, kind: output, shape index: {}]
  %s4 = sld [smem:[#allocation0]]
  $region22: #{decoder_forward.37} parent=0
    _
  %s6 = ssub.s32 1, %s4
  %s7 = scalar_select 0, %s6, %s4
  $region1: #{decoder_forward.37} parent=0
    #allocation2 [shape = 'u8[8192]{0}', space=vmem, size = 0x2000, scoped, tag = 'output window, operand 0, single buffered']
    #allocation3 [shape = 's32[1]{0}', space=sflag, size = 0x4, scoped, tag = 'scoped memory for decoder_forward.37']
    %8 = vsyncpa [#allocation3], 0
    // Predicated region
    $region2: #{decoder_forward.37} parent=1 // pred_check
      _
    $region3: #{decoder_forward.37} parent=1 // pred_check_branch
      %10 = sbr.rel (0) target = $region5
    $region4: #{decoder_forward.37} parent=1 // pred_region
      _
    $region5: #{decoder_forward.37} parent=1 // pred_fallthru
      _
    // Predicated region
    $region6: #{decoder_forward.37} parent=1 // pred_check
      _
    $region7: #{decoder_forward.37} parent=1 // pred_check_branch
      %12 = sbr.rel (0) target = $region9
    $region8: #{decoder_forward.37} parent=1 // pred_region
      _
    $region9: #{decoder_forward.37} parent=1 // pred_fallthru
      _
    // Predicated region
    $region10: #{decoder_forward.37} parent=1 // pred_check
      _
    $region11: #{decoder_forward.37} parent=1 // pred_check_branch
      %14 = sbr.rel (0) target = $region13
    $region12: #{decoder_forward.37} parent=1 // pred_region
      _
    $region13: #{decoder_forward.37} parent=1 // pred_fallthru
      _
    %v15 = vld [vmem:[%s0] sm:$0xff]
    %v16 = vld [vmem:[%s0 + $0x8] sm:$0xff]
    %vm17 = vcmask 523264
    %v18 = vsel %vm17, %v15, 0.0
    %19 = vadd.xlane.f32.xlu0 %v18
    %v20 = vpop.xlane.xlu0 %19
    %v21 = vsel %vm17, %v16, 0.0
    %22 = vadd.xlane.f32.xlu0 %v21
    %v23 = vpop.xlane.xlu0 %22
    %v24 = vrcp.pop 64.0
    %v25 = vmul.f32 %v20, %v24
    %v26 = vmul.f32 %v23, %v24
    %v27 = vsub.f32 %v15, %v25
    %v28 = vsub.f32 %v16, %v26
    %v29 = vmul.f32 %v27, %v27
    %v30 = vmul.f32 %v28, %v28
    %v31 = vsel %vm17, %v29, 0.0
    %32 = vadd.xlane.f32.xlu0 %v31
    %v33 = vpop.xlane.xlu0 %32
    %v34 = vsel %vm17, %v30, 0.0
    %35 = vadd.xlane.f32.xlu0 %v34
    %v36 = vpop.xlane.xlu0 %35
    %v37 = vmul.f32 %v33, %v24
    %v38 = vmul.f32 %v36, %v24
    %v39 = vadd.f32 %v37, 1e-05
    %v40 = vadd.f32 %v38, 1e-05
    %v41 = vrsqrt.pop %v39
    %v42 = vrsqrt.pop %v40
    %v43 = vmul.f32 %v27, %v41
    %v44 = vmul.f32 %v28, %v42
    %v45 = vld [vmem:[%s1] sm:$0x1]
    %v47 = vlaneseq
    %v48 = vshrl.u32 %v47, 7
    %v49 = vsub.s32 0, %v48
    %v50 = vrot.slane %v45, %v49
    %v52 = vmul.f32 %v43, %v50
    %v53 = vmul.f32 %v44, %v50
    %v54 = vld [vmem:[%s2] sm:$0x1]
    %v56 = vlaneseq
    %v57 = vshrl.u32 %v56, 7
    %v58 = vsub.s32 0, %v57
    %v59 = vrot.slane %v54, %v58
    %v61 = vadd.f32 %v52, %v59
    %v62 = vadd.f32 %v53, %v59
    %63 = vst.msk [vmem:[#allocation2] sm:$0xff] %vm17, %v61
    %64 = vst.msk [vmem:[#allocation2 + $0x8] sm:$0xff] %vm17, %v62
    // Predicated region
    $region14: #{decoder_forward.37} parent=1 // pred_check
      _
    $region15: #{decoder_forward.37} parent=1 // pred_check_branch
      %66 = sbr.rel (0) target = $region17
    $region16: #{decoder_forward.37} parent=1 // pred_region
      %s68 = ssub.s32 256, 256
      %69 = vsyncadd [#allocation3], %s68
      %s70 = sshll.u32 [#allocation2], 4
      %s71 = int_to_ptr.vmem [resolvable:$true] %s70
      %76 = dma.vmem_to_hbm [thread:$0]  %s71, 256, %s3, [#allocation3], 128, 128, 8
    $region17: #{decoder_forward.37} parent=1 // pred_fallthru
      _
    // Predicated region
    $region18: #{decoder_forward.37} parent=1 // pred_check
      _
    $region19: #{decoder_forward.37} parent=1 // pred_check_branch
      %78 = sbr.rel (0) target = $region21
    $region20: #{decoder_forward.37} parent=1 // pred_region
      %79 = dma.done [#allocation3], 256
    $region21: #{decoder_forward.37} parent=1 // pred_fallthru
      _
    %80 = vsyncpa [#allocation3], 1

// kernel: decoder_forward.27
$region0: #{decoder_forward.27}
  #allocation0 [shape = 'u32[]', space=smem, size = 0x4, offset = 0x4, fixed_abs, tag = 'smem constant byte address 0x4 - core index']
  #allocation1 [shape = 'u32[144,128]{1,0:T(1,128)}', space=vmem, size = 0x12000, scoped, tag = 'internal scratch']
  %s0 = inlined_call_operand.vmem [shape: bf16[16,256], index: 0, kind: input, shape index: {}]
  %s1 = inlined_call_operand.vmem [shape: bf16[256,64], index: 1, kind: input, shape index: {}]
  %s2 = inlined_call_operand.vmem [shape: f32[1,64], index: 2, kind: input, shape index: {}]
  %s3 = inlined_call_operand.vmem [shape: f32[16,64], index: 3, kind: input, shape index: {}]
  %s4 = inlined_call_operand.vmem [shape: f32[16,64], index: 4, kind: output, shape index: {}]
  %s5 = sld [smem:[#allocation0]]
  $region38: #{decoder_forward.27} parent=0
    _
  %s7 = ssub.s32 1, %s5
  %s8 = scalar_select 0, %s7, %s5
  // Predicated region
  $region2: #{decoder_forward.27} parent=0 // pred_check
    _
  $region3: #{decoder_forward.27} parent=0 // pred_check_branch
    %10 = sbr.rel (0) target = $region5
  $region4: #{decoder_forward.27} parent=0 // pred_region
    _
  $region5: #{decoder_forward.27} parent=0 // pred_fallthru
    _
  // Predicated region
  $region6: #{decoder_forward.27} parent=0 // pred_check
    _
  $region7: #{decoder_forward.27} parent=0 // pred_check_branch
    %12 = sbr.rel (0) target = $region9
  $region8: #{decoder_forward.27} parent=0 // pred_region
    _
  $region9: #{decoder_forward.27} parent=0 // pred_fallthru
    _
  // Predicated region
  $region10: #{decoder_forward.27} parent=0 // pred_check
    _
  $region11: #{decoder_forward.27} parent=0 // pred_check_branch
    %14 = sbr.rel (0) target = $region13
  $region12: #{decoder_forward.27} parent=0 // pred_region
    _
  $region13: #{decoder_forward.27} parent=0 // pred_fallthru
    _
  // Predicated region
  $region14: #{decoder_forward.27} parent=0 // pred_check
    _
  $region15: #{decoder_forward.27} parent=0 // pred_check_branch
    %16 = sbr.rel (0) target = $region17
  $region16: #{decoder_forward.27} parent=0 // pred_region
    _
  $region17: #{decoder_forward.27} parent=0 // pred_fallthru
    _
  %v18 = vld [vmem:[%s0] sm:$0xff]
  %v19 = vld [vmem:[%s0 + $0x8] sm:$0xff]
  %v20 = vld [vmem:[%s1] sm:$0xf]
  %v21 = vld [vmem:[%s1 + $0x4] sm:$0xf]
  %v22 = vld [vmem:[%s1 + $0x8] sm:$0xf]
  %v23 = vld [vmem:[%s1 + $0xc] sm:$0xf]
  %v24 = vld [vmem:[%s1 + $0x10] sm:$0xf]
  %v25 = vld [vmem:[%s1 + $0x14] sm:$0xf]
  %v26 = vld [vmem:[%s1 + $0x18] sm:$0xf]
  %v27 = vld [vmem:[%s1 + $0x1c] sm:$0xf]
  %v28 = vld [vmem:[%s1 + $0x20] sm:$0xf]
  %v29 = vld [vmem:[%s1 + $0x24] sm:$0xf]
  %v30 = vld [vmem:[%s1 + $0x28] sm:$0xf]
  %v31 = vld [vmem:[%s1 + $0x2c] sm:$0xf]
  %v32 = vld [vmem:[%s1 + $0x30] sm:$0xf]
  %v33 = vld [vmem:[%s1 + $0x34] sm:$0xf]
  %v34 = vld [vmem:[%s1 + $0x38] sm:$0xf]
  %v35 = vld [vmem:[%s1 + $0x3c] sm:$0xf]
  %v36 = vld [vmem:[%s1 + $0x40] sm:$0xf]
  %v37 = vld [vmem:[%s1 + $0x44] sm:$0xf]
  %v38 = vld [vmem:[%s1 + $0x48] sm:$0xf]
  %v39 = vld [vmem:[%s1 + $0x4c] sm:$0xf]
  %v40 = vld [vmem:[%s1 + $0x50] sm:$0xf]
  %v41 = vld [vmem:[%s1 + $0x54] sm:$0xf]
  %v42 = vld [vmem:[%s1 + $0x58] sm:$0xf]
  %v43 = vld [vmem:[%s1 + $0x5c] sm:$0xf]
  %v44 = vld [vmem:[%s1 + $0x60] sm:$0xf]
  %v45 = vld [vmem:[%s1 + $0x64] sm:$0xf]
  %v46 = vld [vmem:[%s1 + $0x68] sm:$0xf]
  %v47 = vld [vmem:[%s1 + $0x6c] sm:$0xf]
  %v48 = vld [vmem:[%s1 + $0x70] sm:$0xf]
  %v49 = vld [vmem:[%s1 + $0x74] sm:$0xf]
  %v50 = vld [vmem:[%s1 + $0x78] sm:$0xf]
  %v51 = vld [vmem:[%s1 + $0x7c] sm:$0xf]
  %v54 = vunpack.c.l.b16 %v18
  %v55 = vunpack.c.h.b16 %v18
  %v56 = vunpack.c.l.b16 %v19
  %v57 = vunpack.c.h.b16 %v19
  %v58 = vpack.c.b16 %v56, %v54
  %v59 = vpack.c.b16 %v57, %v55
  %v94 = vunpack.c.l.b16 %v20
  %v95 = vunpack.c.l.b16 %v21
  %v96 = vunpack.c.l.b16 %v22
  %v97 = vunpack.c.l.b16 %v23
  %v98 = vunpack.c.l.b16 %v24
  %v99 = vunpack.c.l.b16 %v25
  %v100 = vunpack.c.l.b16 %v26
  %v101 = vunpack.c.l.b16 %v27
  %v102 = vunpack.c.l.b16 %v28
  %v103 = vunpack.c.l.b16 %v29
  %v104 = vunpack.c.l.b16 %v30
  %v105 = vunpack.c.l.b16 %v31
  %v106 = vunpack.c.l.b16 %v32
  %v107 = vunpack.c.l.b16 %v33
  %v108 = vunpack.c.l.b16 %v34
  %v109 = vunpack.c.l.b16 %v35
  %v110 = vunpack.c.l.b16 %v36
  %v111 = vunpack.c.l.b16 %v37
  %v112 = vunpack.c.l.b16 %v38
  %v113 = vunpack.c.l.b16 %v39
  %v114 = vunpack.c.l.b16 %v40
  %v115 = vunpack.c.l.b16 %v41
  %v116 = vunpack.c.l.b16 %v42
  %v117 = vunpack.c.l.b16 %v43
  %v118 = vunpack.c.l.b16 %v44
  %v119 = vunpack.c.l.b16 %v45
  %v120 = vunpack.c.l.b16 %v46
  %v121 = vunpack.c.l.b16 %v47
  %v122 = vunpack.c.l.b16 %v48
  %v123 = vunpack.c.l.b16 %v49
  %v124 = vunpack.c.l.b16 %v50
  %v125 = vunpack.c.l.b16 %v51
  %v126 = vpack.c.b16 %v95, %v94
  %v127 = vpack.c.b16 %v97, %v96
  %v128 = vpack.c.b16 %v99, %v98
  %v129 = vpack.c.b16 %v101, %v100
  %v130 = vpack.c.b16 %v103, %v102
  %v131 = vpack.c.b16 %v105, %v104
  %v132 = vpack.c.b16 %v107, %v106
  %v133 = vpack.c.b16 %v109, %v108
  %v134 = vpack.c.b16 %v111, %v110
  %v135 = vpack.c.b16 %v113, %v112
  %v136 = vpack.c.b16 %v115, %v114
  %v137 = vpack.c.b16 %v117, %v116
  %v138 = vpack.c.b16 %v119, %v118
  %v139 = vpack.c.b16 %v121, %v120
  %v140 = vpack.c.b16 %v123, %v122
  %v141 = vpack.c.b16 %v125, %v124
  %158 = vmatprep.subr.bf16.mxu0 0
  %159 = vmatpush1.bf16.msra.mxu0 %v126
  %160 = vmatprep.subr.bf16.mxu0 0
  %161 = vmatpush1.bf16.msra.mxu0 %v127
  %162 = vmatprep.subr.bf16.mxu0 0
  %163 = vmatpush1.bf16.msra.mxu0 %v128
  %164 = vmatprep.subr.bf16.mxu0 0
  %165 = vmatpush1.bf16.msra.mxu0 %v129
  %166 = vmatprep.subr.bf16.mxu0 0
  %167 = vmatpush1.bf16.msra.mxu0 %v130
  %168 = vmatprep.subr.bf16.mxu0 0
  %169 = vmatpush1.bf16.msra.mxu0 %v131
  %170 = vmatprep.subr.bf16.mxu0 0
  %171 = vmatpush1.bf16.msra.mxu0 %v132
  %172 = vmatprep.subr.bf16.mxu0 0
  %173 = vmatpush1.bf16.msra.mxu0 %v133
  %174 = vmatprep.subr.bf16.mxu0 0
  %175 = vmatpush1.bf16.msra.mxu0 %v134
  %176 = vmatprep.subr.bf16.mxu0 0
  %177 = vmatpush1.bf16.msra.mxu0 %v135
  %178 = vmatprep.subr.bf16.mxu0 0
  %179 = vmatpush1.bf16.msra.mxu0 %v136
  %180 = vmatprep.subr.bf16.mxu0 0
  %181 = vmatpush1.bf16.msra.mxu0 %v137
  %182 = vmatprep.subr.bf16.mxu0 0
  %183 = vmatpush1.bf16.msra.mxu0 %v138
  %184 = vmatprep.subr.bf16.mxu0 0
  %185 = vmatpush1.bf16.msra.mxu0 %v139
  %186 = vmatprep.subr.bf16.mxu0 0
  %187 = vmatpush1.bf16.msra.mxu0 %v140
  %188 = vmatprep.subr.bf16.mxu0 0
  %189 = vmatpush1.bf16.msra.mxu0 %v141
  %190 = vmatprep.mubr.bf16.mxu0 %v59
  %191 = vmatmul.mubr.bf16.gmra.mrb[0].mxu0 %v58
  %v192 = vpop.f32.mrb[0].mxu0
  %v193 = vadd.f32 0.0, %v192
  %v194 = vpop.f32.mrb[0].mxu0
  %v195 = vpop.f32.mrb[0].mxu0
  %v196 = vadd.f32 0.0, %v195
  %v197 = vpop.f32.mrb[0].mxu0
  %198 = vdwg.mxu0
  %p199 = scmp.eq.s32.totalorder 0, 0
  // Predicated region
  $region18: #{decoder_forward.27} parent=0 // pred_check
    %p200 = pneg %p199
  $region19: #{decoder_forward.27} parent=0 // pred_check_branch
    %202 = sbr.rel (%p200) target = $region21
  $region20: #{decoder_forward.27} parent=0 // pred_region
    %vm203 = vcmask 523264
    %204 = vst.msk [vmem:[%s4] sm:$0xff] %vm203, %v193
    %205 = vst.msk [vmem:[%s4 + $0x8] sm:$0xff] %vm203, %v196
  $region21: #{decoder_forward.27} parent=0 // pred_fallthru
    _
  %p206 = scmp.gt.s32.totalorder 0, 0
  // Predicated region
  $region22: #{decoder_forward.27} parent=0 // pred_check
    %p207 = pneg %p206
  $region23: #{decoder_forward.27} parent=0 // pred_check_branch
    %209 = sbr.rel (%p207) target = $region25
  $region24: #{decoder_forward.27} parent=0 // pred_region
    %v210 = vld [vmem:[%s4] sm:$0xff]
    %v211 = vld [vmem:[%s4 + $0x8] sm:$0xff]
    %v212 = vadd.f32 %v210, %v193
    %v213 = vadd.f32 %v211, %v196
    %vm214 = vcmask 523264
    %215 = vst.msk [vmem:[%s4] sm:$0xff] %vm214, %v212
    %216 = vst.msk [vmem:[%s4 + $0x8] sm:$0xff] %vm214, %v213
  $region25: #{decoder_forward.27} parent=0 // pred_fallthru
    _
  // Predicated region
  $region26: #{decoder_forward.27} parent=0 // pred_check
    %p217 = pneg %p199
  $region27: #{decoder_forward.27} parent=0 // pred_check_branch
    %219 = sbr.rel (%p217) target = $region29
  $region28: #{decoder_forward.27} parent=0 // pred_region
    %v220 = vld [vmem:[%s4] sm:$0xff]
    %v221 = vld [vmem:[%s4 + $0x8] sm:$0xff]
    %v222 = vld [vmem:[%s2] sm:$0x1]
    %v224 = vlaneseq
    %v225 = vshrl.u32 %v224, 7
    %v226 = vsub.s32 0, %v225
    %v227 = vrot.slane %v222, %v226
    %v229 = vadd.f32 %v220, %v227
    %v230 = vadd.f32 %v221, %v227
    %v231 = vld [vmem:[%s3] sm:$0xff]
    %v232 = vld [vmem:[%s3 + $0x8] sm:$0xff]
    %v233 = vadd.f32 %v229, %v231
    %v234 = vadd.f32 %v230, %v232
    %vm235 = vcmask 523264
    %236 = vst.msk [vmem:[%s4] sm:$0xff] %vm235, %v233
    %237 = vst.msk [vmem:[%s4 + $0x8] sm:$0xff] %vm235, %v234
  $region29: #{decoder_forward.27} parent=0 // pred_fallthru
    _
  // Predicated region
  $region30: #{decoder_forward.27} parent=0 // pred_check
    _
  $region31: #{decoder_forward.27} parent=0 // pred_check_branch
    %239 = sbr.rel (0) target = $region33
  $region32: #{decoder_forward.27} parent=0 // pred_region
    _
  $region33: #{decoder_forward.27} parent=0 // pred_fallthru
    _
  // Predicated region
  $region34: #{decoder_forward.27} parent=0 // pred_check
    _
  $region35: #{decoder_forward.27} parent=0 // pred_check_branch
    %241 = sbr.rel (0) target = $region37
  $region36: #{decoder_forward.27} parent=0 // pred_region
    _
  $region37: #{decoder_forward.27} parent=0 // pred_fallthru
    _

</llo_original>
